<compile_context>
chip_gen: v5e
topology: v5e:2x2
jax: 0.10.0
libtpu: 0.0.40
codegen_flags: <defaults>
</compile_context>

<pallas_src>
import functools

import jax
import jax.numpy as jnp
from jax.experimental import pallas as pl
from jax.experimental.pallas import tpu as pltpu


def _layer_norm(v, gamma, beta, eps=1e-5):
    # PyTorch nn.LayerNorm: biased variance over the last dim, eps=1e-5.
    mean = jnp.mean(v, axis=-1, keepdims=True)
    var = jnp.mean((v - mean) ** 2, axis=-1, keepdims=True)
    return (v - mean) * jax.lax.rsqrt(var + eps) * gamma + beta


def encoder_layer_kernel(
    x_ref,
    wqkv_ref, bqkv_ref,
    g1_ref, be1_ref,
    w1_ref, b1_ref, w2_ref, b2_ref,
    g2_ref, be2_ref,
    o_ref,
    *, num_heads,
):
    bb, S, D = x_ref.shape
    H = num_heads
    hd = D // H
    N = bb * S

    x2 = x_ref[...].reshape(N, D)            # f32 residual stream, (block_b*S, D)
    xb = x2.astype(jnp.bfloat16)             # bf16 MXU operand

    # --- fused Q/K/V projection: one full-width (N, 3*D) matmul ---------------
    # 1/sqrt(d_model) (the module scales by d_model, NOT head_dim) is already
    # folded into the q columns of wqkv / bqkv by the wrapper.
    qkv = jnp.dot(xb, wqkv_ref[...],
                  preferred_element_type=jnp.float32) + bqkv_ref[...]

    def split_heads(m):                      # (N, D) f32 -> (bb*H, S, hd) bf16
        m = m.reshape(bb, S, H, hd).transpose(0, 2, 1, 3)
        return m.reshape(bb * H, S, hd).astype(jnp.bfloat16)

    q = split_heads(qkv[:, :D])
    k = split_heads(qkv[:, D:2 * D])
    v = split_heads(qkv[:, 2 * D:])

    # --- attention batched over (batch, head): one softmax region --------------
    scores = jnp.einsum("bqd,bkd->bqk", q, k,
                        preferred_element_type=jnp.float32)
    scores = scores - jnp.max(scores, axis=-1, keepdims=True)
    e = jnp.exp(scores)
    denom = jnp.sum(e, axis=-1, keepdims=True)
    attn = e * pl.reciprocal(denom, approx=True)
    # TODO(synk): nn.Dropout(0.1) on attention weights is identity in eval mode;
    #             training-mode dropout is not implemented here.
    ctx = jnp.einsum("bqk,bkd->bqd", attn.astype(jnp.bfloat16), v,
                     preferred_element_type=jnp.float32)
    # Merge heads back onto the feature dim == transpose(1,2).view(B, S, D).
    ctx = ctx.reshape(bb, H, S, hd).transpose(0, 2, 1, 3).reshape(N, D)

    # --- residual + LayerNorm 1 -------------------------------------------------
    a = _layer_norm(x2 + ctx, g1_ref[...], be1_ref[...])

    # --- feed-forward: Linear(D, 4D) -> ReLU -> Linear(4D, D) -------------------
    # TODO(synk): on v7x (64 MiB VMEM) stream the 4*D hidden dim for large D
    #             instead of holding w1/w2 and the (N, 4D) hidden resident.
    h1 = jnp.dot(a.astype(jnp.bfloat16), w1_ref[...],
                 preferred_element_type=jnp.float32) + b1_ref[...]
    h1 = jnp.maximum(h1, 0.0)
    ff = jnp.dot(h1.astype(jnp.bfloat16), w2_ref[...],
                 preferred_element_type=jnp.float32) + b2_ref[...]

    # --- residual + LayerNorm 2 -------------------------------------------------
    out = _layer_norm(a + ff, g2_ref[...], be2_ref[...])
    o_ref[...] = out.reshape(bb, S, D).astype(o_ref.dtype)


def _vmem_capacity_bytes():
    """Generation-aware VMEM capacity (128 MiB on v5e/v6e, 64 MiB on v7x)."""
    try:
        return int(pltpu.get_tpu_info().vmem_capacity_bytes)
    except Exception:
        return 128 * 1024 * 1024


def _estimate_vmem_bytes(block_b, S, D, H, weights_nbytes, x_itemsize):
    """Crude upper-bound estimate of VMEM usage for one grid step."""
    rows = block_b * S
    hd = D // H
    wbuf = 2 * weights_nbytes                       # conservative (double buffer)
    io = 2 * 2 * rows * D * x_itemsize              # x + out blocks, double-buffered
    qkv = rows * 3 * D * 4                          # fused projection (f32)
    heads = 3 * block_b * H * S * hd * 2            # bf16 head-major q/k/v
    att = 2 * block_b * H * S * S * 4               # scores + attention weights
    ctx = rows * D * 4
    ffn = rows * 4 * D * 4                          # f32 FFN hidden
    return wbuf + io + qkv + heads + att + ctx + ffn + (4 << 20)


def _choose_block_b(B, S, D, H, weights_nbytes, x_itemsize, vmem_cap,
                    target_rows=512):
    """Pick a batch-block size: big enough that block_b*S fills the MXU M dim
    and amortizes the ~0.35us/grid-step overhead, small enough to fit the VMEM
    cap, and capped at B//2 so v7x's two TensorCores both get work."""
    max_block = max(B // 2, 1)
    divisors = [d for d in range(1, max_block + 1) if B % d == 0]
    block_b = next((d for d in divisors if d * S >= target_rows), divisors[-1])
    while (block_b > 1 and
           _estimate_vmem_bytes(block_b, S, D, H, weights_nbytes,
                                x_itemsize) > vmem_cap):
        block_b = max(d for d in divisors if d < block_b)
    return block_b


def encoder_layer(x, params, *, num_heads, block_b=None):
    B, S, D = x.shape
    H = num_heads
    assert D % H == 0, "d_model must be divisible by num_heads"

    bf16, f32 = jnp.bfloat16, jnp.float32
    scale = 1.0 / (D ** 0.5)   # the module scales scores by 1/sqrt(d_model)

    # Fuse Q/K/V into one (D, 3*D) matrix; fold the score scale into the q
    # columns and the q bias.  One-time host-side transform.
    wqkv = jnp.concatenate(
        [params["wq"].astype(f32) * scale,
         params["wk"].astype(f32),
         params["wv"].astype(f32)], axis=1).astype(bf16)
    bqkv = jnp.concatenate(
        [params["bq"].astype(f32) * scale,
         params["bk"].astype(f32),
         params["bv"].astype(f32)], axis=1)

    w1, b1 = params["w1"].astype(bf16), params["b1"].astype(f32)
    w2, b2 = params["w2"].astype(bf16), params["b2"].astype(f32)
    g1, be1 = params["g1"].astype(f32), params["be1"].astype(f32)
    g2, be2 = params["g2"].astype(f32), params["be2"].astype(f32)

    weights = [wqkv, bqkv, g1, be1, w1, b1, w2, b2, g2, be2]
    weights_nbytes = sum(a.size * a.dtype.itemsize for a in weights)

    vmem_cap = int(0.85 * _vmem_capacity_bytes())
    if block_b is None:
        block_b = _choose_block_b(B, S, D, H, weights_nbytes,
                                  x.dtype.itemsize, vmem_cap)
    assert B % block_b == 0
    grid_b = B // block_b

    est = _estimate_vmem_bytes(block_b, S, D, H, weights_nbytes,
                               x.dtype.itemsize)
    vmem_limit = int(min(max(est, 32 * 1024 * 1024), vmem_cap))

    kernel = functools.partial(encoder_layer_kernel, num_heads=H)

    def weight_spec(a, single_buffer):
        kwargs = {}
        if single_buffer:
            # Grid-invariant weights: double-buffering buys nothing; halve VMEM.
            kwargs["pipeline_mode"] = pl.Buffered(1)
        return pl.BlockSpec(a.shape, lambda b, _n=a.ndim: (0,) * _n, **kwargs)

    def run(single_buffer_weights):
        return pl.pallas_call(
            kernel,
            out_shape=jax.ShapeDtypeStruct((B, S, D), x.dtype),
            grid_spec=pltpu.PrefetchScalarGridSpec(
                num_scalar_prefetch=0,
                grid=(grid_b,),
                in_specs=[pl.BlockSpec((block_b, S, D), lambda b: (b, 0, 0))]
                         + [weight_spec(a, single_buffer_weights)
                            for a in weights],
                out_specs=pl.BlockSpec((block_b, S, D), lambda b: (b, 0, 0)),
            ),
            compiler_params=pltpu.CompilerParams(
                dimension_semantics=("parallel",),
                vmem_limit_bytes=vmem_limit,
            ),
        )(x, *weights)

    try:
        return run(single_buffer_weights=True)
    except Exception:
        # TODO(synk): pl.Buffered(1) single-buffering rejected on this jax/libtpu
        #             combo; fall back to default double-buffered weight blocks.
        return run(single_buffer_weights=False)


def encoder_layer_ref(x, params, *, num_heads):
    """Pure-JAX f32 reference mirroring the PyTorch forward (sanity check)."""
    B, S, D = x.shape
    hd = D // num_heads
    f32 = jnp.float32
    wq, wk, wv = (params[n].astype(f32) for n in ("wq", "wk", "wv"))
    w1, w2 = params["w1"].astype(f32), params["w2"].astype(f32)

    q = x @ wq + params["bq"]
    k = x @ wk + params["bk"]
    v = x @ wv + params["bv"]
    q = q.reshape(B, S, num_heads, hd).transpose(0, 2, 1, 3)
    k = k.reshape(B, S, num_heads, hd).transpose(0, 2, 1, 3)
    v = v.reshape(B, S, num_heads, hd).transpose(0, 2, 1, 3)
    scores = jnp.einsum("bhqd,bhkd->bhqk", q, k) / (D ** 0.5)
    attn = jax.nn.softmax(scores, axis=-1)
    ctx = jnp.einsum("bhqk,bhkd->bhqd", attn, v)
    ctx = ctx.transpose(0, 2, 1, 3).reshape(B, S, D)
    a = _layer_norm(x + ctx, params["g1"], params["be1"])
    h1 = jnp.maximum(a @ w1 + params["b1"], 0.0)
    ff = h1 @ w2 + params["b2"]
    return _layer_norm(a + ff, params["g2"], params["be2"])


def init_params(key, d_model):
    ks = jax.random.split(key, 8)
    std = 0.02
    f32, bf16 = jnp.float32, jnp.bfloat16
    # Weight matrices stored as (in, out) == PyTorch weight.T, in bf16 (HBM).
    return {
        "wq": (jax.random.normal(ks[0], (d_model, d_model), f32) * std).astype(bf16),
        "bq": jnp.zeros((1, d_model), f32),
        "wk": (jax.random.normal(ks[1], (d_model, d_model), f32) * std).astype(bf16),
        "bk": jnp.zeros((1, d_model), f32),
        "wv": (jax.random.normal(ks[2], (d_model, d_model), f32) * std).astype(bf16),
        "bv": jnp.zeros((1, d_model), f32),
        "g1": jnp.ones((1, d_model), f32),
        "be1": jnp.zeros((1, d_model), f32),
        "w1": (jax.random.normal(ks[3], (d_model, 4 * d_model), f32) * std).astype(bf16),
        "b1": jnp.zeros((1, 4 * d_model), f32),
        "w2": (jax.random.normal(ks[4], (4 * d_model, d_model), f32) * std).astype(bf16),
        "b2": jnp.zeros((1, d_model), f32),
        "g2": jnp.ones((1, d_model), f32),
        "be2": jnp.zeros((1, d_model), f32),
    }


if __name__ == "__main__":
    # Small shapes consistent with the module: d_model divisible by num_heads.
    B, S, D, H = 2, 8, 128, 4

    key = jax.random.PRNGKey(0)
    kx, kp = jax.random.split(key)
    x = jax.random.normal(kx, (B, S, D), jnp.float32)
    params = init_params(kp, D)

    out = jax.block_until_ready(encoder_layer(x, params, num_heads=H))

    ref = encoder_layer_ref(x, params, num_heads=H)
    assert out.shape == (B, S, D)
    # bf16 matmul operands + approx reciprocal -> slightly looser tolerance.
    assert jnp.allclose(out, ref, atol=5e-2, rtol=5e-2), "mismatch vs JAX reference"

    print("KERNEL_OK")
</pallas_src>

<mosaic_0001>
module attributes {stable_mosaic.version = 11 : i64} {
  func.func @encoder_layer_kernel(%arg0: i32, %arg1: memref<1x8x128xf32, #tpu.memory_space<vmem>>, %arg2: memref<128x384xbf16, #tpu.memory_space<vmem>>, %arg3: memref<1x384xf32, #tpu.memory_space<vmem>>, %arg4: memref<1x128xf32, #tpu.memory_space<vmem>>, %arg5: memref<1x128xf32, #tpu.memory_space<vmem>>, %arg6: memref<128x512xbf16, #tpu.memory_space<vmem>>, %arg7: memref<1x512xf32, #tpu.memory_space<vmem>>, %arg8: memref<512x128xbf16, #tpu.memory_space<vmem>>, %arg9: memref<1x128xf32, #tpu.memory_space<vmem>>, %arg10: memref<1x128xf32, #tpu.memory_space<vmem>>, %arg11: memref<1x128xf32, #tpu.memory_space<vmem>>, %arg12: memref<1x8x128xf32, #tpu.memory_space<vmem>>) attributes {dimension_semantics = [#tpu.dimension_semantics<parallel>], iteration_bounds = array<i64: 2>, scalar_prefetch = 0 : i64, scratch_operands = 0 : i64, tpu.core_type = #tpu.core_type<tc>, window_params = [{transform_indices = @transform_0, window_bounds = array<i64: 1, 8, 128>}, {pipeline_mode = #tpu.pipeline_mode<synchronous>, transform_indices = @transform_1, window_bounds = array<i64: 128, 384>}, {pipeline_mode = #tpu.pipeline_mode<synchronous>, transform_indices = @transform_2, window_bounds = array<i64: 1, 384>}, {pipeline_mode = #tpu.pipeline_mode<synchronous>, transform_indices = @transform_3, window_bounds = array<i64: 1, 128>}, {pipeline_mode = #tpu.pipeline_mode<synchronous>, transform_indices = @transform_4, window_bounds = array<i64: 1, 128>}, {pipeline_mode = #tpu.pipeline_mode<synchronous>, transform_indices = @transform_5, window_bounds = array<i64: 128, 512>}, {pipeline_mode = #tpu.pipeline_mode<synchronous>, transform_indices = @transform_6, window_bounds = array<i64: 1, 512>}, {pipeline_mode = #tpu.pipeline_mode<synchronous>, transform_indices = @transform_7, window_bounds = array<i64: 512, 128>}, {pipeline_mode = #tpu.pipeline_mode<synchronous>, transform_indices = @transform_8, window_bounds = array<i64: 1, 128>}, {pipeline_mode = #tpu.pipeline_mode<synchronous>, transform_indices = @transform_9, window_bounds = array<i64: 1, 128>}, {pipeline_mode = #tpu.pipeline_mode<synchronous>, transform_indices = @transform_10, window_bounds = array<i64: 1, 128>}, {transform_indices = @transform_11, window_bounds = array<i64: 1, 8, 128>}]} {
    %c0 = arith.constant 0 : index
    %c0_0 = arith.constant 0 : index
    %c0_1 = arith.constant 0 : index
    %0 = vector.load %arg1[%c0, %c0_0, %c0_1] : memref<1x8x128xf32, #tpu.memory_space<vmem>>, vector<1x8x128xf32>
    %1 = vector.shape_cast %0 : vector<1x8x128xf32> to vector<8x128xf32>
    %2 = arith.truncf %1 : vector<8x128xf32> to vector<8x128xbf16>
    %c0_2 = arith.constant 0 : index
    %c0_3 = arith.constant 0 : index
    %3 = vector.load %arg2[%c0_2, %c0_3] : memref<128x384xbf16, #tpu.memory_space<vmem>>, vector<128x384xbf16>
    %cst = arith.constant dense<0.000000e+00> : vector<8x384xf32>
    %4 = tpu.matmul %2, %3, %cst {dimension_numbers = #tpu.dot_dimension_numbers<[1], [0], [0], [1], [0, 0, 1, 1], [], []>} : vector<8x128xbf16>, vector<128x384xbf16>, vector<8x384xf32> -> vector<8x384xf32>
    %c0_4 = arith.constant 0 : index
    %c0_5 = arith.constant 0 : index
    %5 = vector.load %arg3[%c0_4, %c0_5] : memref<1x384xf32, #tpu.memory_space<vmem>>, vector<1x384xf32>
    %6 = vector.broadcast %5 : vector<1x384xf32> to vector<8x384xf32>
    %7 = arith.addf %4, %6 : vector<8x384xf32>
    %8 = vector.extract_strided_slice %7 {offsets = [0, 0], sizes = [8, 128], strides = [1, 1]} : vector<8x384xf32> to vector<8x128xf32>
    %9 = vector.shape_cast %8 : vector<8x128xf32> to vector<1x8x4x32xf32>
    %10 = tpu.transpose %9, [0, 2, 1, 3] : vector<1x8x4x32xf32> -> vector<1x4x8x32xf32>
    %11 = vector.shape_cast %10 : vector<1x4x8x32xf32> to vector<4x8x32xf32>
    %12 = arith.truncf %11 : vector<4x8x32xf32> to vector<4x8x32xbf16>
    %13 = vector.extract_strided_slice %7 {offsets = [0, 128], sizes = [8, 128], strides = [1, 1]} : vector<8x384xf32> to vector<8x128xf32>
    %14 = vector.shape_cast %13 : vector<8x128xf32> to vector<1x8x4x32xf32>
    %15 = tpu.transpose %14, [0, 2, 1, 3] : vector<1x8x4x32xf32> -> vector<1x4x8x32xf32>
    %16 = vector.shape_cast %15 : vector<1x4x8x32xf32> to vector<4x8x32xf32>
    %17 = arith.truncf %16 : vector<4x8x32xf32> to vector<4x8x32xbf16>
    %18 = vector.extract_strided_slice %7 {offsets = [0, 256], sizes = [8, 128], strides = [1, 1]} : vector<8x384xf32> to vector<8x128xf32>
    %19 = vector.shape_cast %18 : vector<8x128xf32> to vector<1x8x4x32xf32>
    %20 = tpu.transpose %19, [0, 2, 1, 3] : vector<1x8x4x32xf32> -> vector<1x4x8x32xf32>
    %21 = vector.shape_cast %20 : vector<1x4x8x32xf32> to vector<4x8x32xf32>
    %22 = arith.truncf %21 : vector<4x8x32xf32> to vector<4x8x32xbf16>
    "tpu.trace_start"() <{level = 10 : i32, message = "bqd,bkd->bqk"}> : () -> ()
    %cst_6 = arith.constant dense<0.000000e+00> : vector<4x8x8xf32>
    %23 = tpu.matmul %12, %17, %cst_6 {dimension_numbers = #tpu.dot_dimension_numbers<[2], [2], [1], [1], [0, 0, 0, 1, 1, 1], [0], [0]>} : vector<4x8x32xbf16>, vector<4x8x32xbf16>, vector<4x8x8xf32> -> vector<4x8x8xf32>
    "tpu.trace_stop"() : () -> ()
    %cst_7 = arith.constant dense<0xFF800000> : vector<4x8xf32>
    %24 = vector.multi_reduction <maximumf>, %23, %cst_7 [2] : vector<4x8x8xf32> to vector<4x8xf32>
    %25 = vector.shape_cast %24 : vector<4x8xf32> to vector<4x8x1xf32>
    %26 = vector.broadcast %25 : vector<4x8x1xf32> to vector<4x8x8xf32>
    %27 = arith.subf %23, %26 : vector<4x8x8xf32>
    %28 = math.exp %27 : vector<4x8x8xf32>
    %cst_8 = arith.constant dense<0.000000e+00> : vector<4x8xf32>
    %29 = vector.multi_reduction <add>, %28, %cst_8 [2] : vector<4x8x8xf32> to vector<4x8xf32>
    %30 = vector.shape_cast %29 : vector<4x8xf32> to vector<4x8x1xf32>
    %31 = tpu.reciprocal %30 {approx = true} : vector<4x8x1xf32> -> vector<4x8x1xf32>
    %32 = vector.broadcast %31 : vector<4x8x1xf32> to vector<4x8x8xf32>
    %33 = arith.mulf %28, %32 : vector<4x8x8xf32>
    %34 = arith.truncf %33 : vector<4x8x8xf32> to vector<4x8x8xbf16>
    "tpu.trace_start"() <{level = 10 : i32, message = "bqk,bkd->bqd"}> : () -> ()
    %cst_9 = arith.constant dense<0.000000e+00> : vector<4x8x32xf32>
    %35 = tpu.matmul %34, %22, %cst_9 {dimension_numbers = #tpu.dot_dimension_numbers<[2], [1], [1], [2], [0, 0, 0, 1, 1, 2], [0], [0]>} : vector<4x8x8xbf16>, vector<4x8x32xbf16>, vector<4x8x32xf32> -> vector<4x8x32xf32>
    "tpu.trace_stop"() : () -> ()
    %36 = vector.shape_cast %35 : vector<4x8x32xf32> to vector<1x4x8x32xf32>
    %37 = tpu.transpose %36, [0, 2, 1, 3] : vector<1x4x8x32xf32> -> vector<1x8x4x32xf32>
    %38 = vector.shape_cast %37 : vector<1x8x4x32xf32> to vector<8x128xf32>
    %39 = arith.addf %1, %38 : vector<8x128xf32>
    %c0_10 = arith.constant 0 : index
    %c0_11 = arith.constant 0 : index
    %40 = vector.load %arg4[%c0_10, %c0_11] : memref<1x128xf32, #tpu.memory_space<vmem>>, vector<1x128xf32>
    %c0_12 = arith.constant 0 : index
    %c0_13 = arith.constant 0 : index
    %41 = vector.load %arg5[%c0_12, %c0_13] : memref<1x128xf32, #tpu.memory_space<vmem>>, vector<1x128xf32>
    %cst_14 = arith.constant dense<0.000000e+00> : vector<8xf32>
    %42 = vector.multi_reduction <add>, %39, %cst_14 [1] : vector<8x128xf32> to vector<8xf32>
    %43 = vector.shape_cast %42 : vector<8xf32> to vector<8x1xf32>
    %cst_15 = arith.constant 1.280000e+02 : f32
    %44 = vector.broadcast %cst_15 : f32 to vector<8x1xf32>
    %45 = arith.divf %43, %44 : vector<8x1xf32>
    %46 = vector.broadcast %45 : vector<8x1xf32> to vector<8x128xf32>
    %47 = arith.subf %39, %46 : vector<8x128xf32>
    %48 = arith.mulf %47, %47 : vector<8x128xf32>
    %cst_16 = arith.constant dense<0.000000e+00> : vector<8xf32>
    %49 = vector.multi_reduction <add>, %48, %cst_16 [1] : vector<8x128xf32> to vector<8xf32>
    %50 = vector.shape_cast %49 : vector<8xf32> to vector<8x1xf32>
    %cst_17 = arith.constant 1.280000e+02 : f32
    %51 = vector.broadcast %cst_17 : f32 to vector<8x1xf32>
    %52 = arith.divf %50, %51 : vector<8x1xf32>
    %53 = vector.broadcast %45 : vector<8x1xf32> to vector<8x128xf32>
    %54 = arith.subf %39, %53 : vector<8x128xf32>
    %cst_18 = arith.constant 9.99999974E-6 : f32
    %55 = vector.broadcast %cst_18 : f32 to vector<8x1xf32>
    %56 = arith.addf %52, %55 : vector<8x1xf32>
    %57 = math.rsqrt %56 : vector<8x1xf32>
    %58 = vector.broadcast %57 : vector<8x1xf32> to vector<8x128xf32>
    %59 = arith.mulf %54, %58 : vector<8x128xf32>
    %60 = vector.broadcast %40 : vector<1x128xf32> to vector<8x128xf32>
    %61 = arith.mulf %59, %60 : vector<8x128xf32>
    %62 = vector.broadcast %41 : vector<1x128xf32> to vector<8x128xf32>
    %63 = arith.addf %61, %62 : vector<8x128xf32>
    %64 = arith.truncf %63 : vector<8x128xf32> to vector<8x128xbf16>
    %c0_19 = arith.constant 0 : index
    %c0_20 = arith.constant 0 : index
    %65 = vector.load %arg6[%c0_19, %c0_20] : memref<128x512xbf16, #tpu.memory_space<vmem>>, vector<128x512xbf16>
    %cst_21 = arith.constant dense<0.000000e+00> : vector<8x512xf32>
    %66 = tpu.matmul %64, %65, %cst_21 {dimension_numbers = #tpu.dot_dimension_numbers<[1], [0], [0], [1], [0, 0, 1, 1], [], []>} : vector<8x128xbf16>, vector<128x512xbf16>, vector<8x512xf32> -> vector<8x512xf32>
    %c0_22 = arith.constant 0 : index
    %c0_23 = arith.constant 0 : index
    %67 = vector.load %arg7[%c0_22, %c0_23] : memref<1x512xf32, #tpu.memory_space<vmem>>, vector<1x512xf32>
    %68 = vector.broadcast %67 : vector<1x512xf32> to vector<8x512xf32>
    %69 = arith.addf %66, %68 : vector<8x512xf32>
    %cst_24 = arith.constant 0.000000e+00 : f32
    %70 = vector.broadcast %cst_24 : f32 to vector<8x512xf32>
    %71 = arith.maximumf %69, %70 : vector<8x512xf32>
    %72 = arith.truncf %71 : vector<8x512xf32> to vector<8x512xbf16>
    %c0_25 = arith.constant 0 : index
    %c0_26 = arith.constant 0 : index
    %73 = vector.load %arg8[%c0_25, %c0_26] : memref<512x128xbf16, #tpu.memory_space<vmem>>, vector<512x128xbf16>
    %cst_27 = arith.constant dense<0.000000e+00> : vector<8x128xf32>
    %74 = tpu.matmul %72, %73, %cst_27 {dimension_numbers = #tpu.dot_dimension_numbers<[1], [0], [0], [1], [0, 0, 1, 1], [], []>} : vector<8x512xbf16>, vector<512x128xbf16>, vector<8x128xf32> -> vector<8x128xf32>
    %c0_28 = arith.constant 0 : index
    %c0_29 = arith.constant 0 : index
    %75 = vector.load %arg9[%c0_28, %c0_29] : memref<1x128xf32, #tpu.memory_space<vmem>>, vector<1x128xf32>
    %76 = vector.broadcast %75 : vector<1x128xf32> to vector<8x128xf32>
    %77 = arith.addf %74, %76 : vector<8x128xf32>
    %78 = arith.addf %63, %77 : vector<8x128xf32>
    %c0_30 = arith.constant 0 : index
    %c0_31 = arith.constant 0 : index
    %79 = vector.load %arg10[%c0_30, %c0_31] : memref<1x128xf32, #tpu.memory_space<vmem>>, vector<1x128xf32>
    %c0_32 = arith.constant 0 : index
    %c0_33 = arith.constant 0 : index
    %80 = vector.load %arg11[%c0_32, %c0_33] : memref<1x128xf32, #tpu.memory_space<vmem>>, vector<1x128xf32>
    %cst_34 = arith.constant dense<0.000000e+00> : vector<8xf32>
    %81 = vector.multi_reduction <add>, %78, %cst_34 [1] : vector<8x128xf32> to vector<8xf32>
    %82 = vector.shape_cast %81 : vector<8xf32> to vector<8x1xf32>
    %cst_35 = arith.constant 1.280000e+02 : f32
    %83 = vector.broadcast %cst_35 : f32 to vector<8x1xf32>
    %84 = arith.divf %82, %83 : vector<8x1xf32>
    %85 = vector.broadcast %84 : vector<8x1xf32> to vector<8x128xf32>
    %86 = arith.subf %78, %85 : vector<8x128xf32>
    %87 = arith.mulf %86, %86 : vector<8x128xf32>
    %cst_36 = arith.constant dense<0.000000e+00> : vector<8xf32>
    %88 = vector.multi_reduction <add>, %87, %cst_36 [1] : vector<8x128xf32> to vector<8xf32>
    %89 = vector.shape_cast %88 : vector<8xf32> to vector<8x1xf32>
    %cst_37 = arith.constant 1.280000e+02 : f32
    %90 = vector.broadcast %cst_37 : f32 to vector<8x1xf32>
    %91 = arith.divf %89, %90 : vector<8x1xf32>
    %92 = vector.broadcast %84 : vector<8x1xf32> to vector<8x128xf32>
    %93 = arith.subf %78, %92 : vector<8x128xf32>
    %cst_38 = arith.constant 9.99999974E-6 : f32
    %94 = vector.broadcast %cst_38 : f32 to vector<8x1xf32>
    %95 = arith.addf %91, %94 : vector<8x1xf32>
    %96 = math.rsqrt %95 : vector<8x1xf32>
    %97 = vector.broadcast %96 : vector<8x1xf32> to vector<8x128xf32>
    %98 = arith.mulf %93, %97 : vector<8x128xf32>
    %99 = vector.broadcast %79 : vector<1x128xf32> to vector<8x128xf32>
    %100 = arith.mulf %98, %99 : vector<8x128xf32>
    %101 = vector.broadcast %80 : vector<1x128xf32> to vector<8x128xf32>
    %102 = arith.addf %100, %101 : vector<8x128xf32>
    %103 = vector.shape_cast %102 : vector<8x128xf32> to vector<1x8x128xf32>
    %c0_39 = arith.constant 0 : index
    %c0_40 = arith.constant 0 : index
    %c0_41 = arith.constant 0 : index
    %104 = vector.load %arg12[%c0_39, %c0_40, %c0_41] : memref<1x8x128xf32, #tpu.memory_space<vmem>>, vector<1x8x128xf32>
    tpu.vector_store %arg12[%c0_39, %c0_40, %c0_41], %103 {strides = array<i32>} : memref<1x8x128xf32, #tpu.memory_space<vmem>>, vector<1x8x128xf32>,
    return
  }
  func.func @transform_0(%arg0: i32) -> (i32, i32, i32) {
    %c0_i32 = arith.constant 0 : i32
    %c0_i32_0 = arith.constant 0 : i32
    %c0_i32_1 = arith.constant 0 : i32
    return %arg0, %c0_i32, %c0_i32_0 : i32, i32, i32
  }
  func.func @transform_1(%arg0: i32) -> (i32, i32) {
    %c0_i32 = arith.constant 0 : i32
    %c0_i32_0 = arith.constant 0 : i32
    %c0_i32_1 = arith.constant 0 : i32
    return %c0_i32, %c0_i32_0 : i32, i32
  }
  func.func @transform_2(%arg0: i32) -> (i32, i32) {
    %c0_i32 = arith.constant 0 : i32
    %c0_i32_0 = arith.constant 0 : i32
    %c0_i32_1 = arith.constant 0 : i32
    return %c0_i32, %c0_i32_0 : i32, i32
  }
  func.func @transform_3(%arg0: i32) -> (i32, i32) {
    %c0_i32 = arith.constant 0 : i32
    %c0_i32_0 = arith.constant 0 : i32
    %c0_i32_1 = arith.constant 0 : i32
    return %c0_i32, %c0_i32_0 : i32, i32
  }
  func.func @transform_4(%arg0: i32) -> (i32, i32) {
    %c0_i32 = arith.constant 0 : i32
    %c0_i32_0 = arith.constant 0 : i32
    %c0_i32_1 = arith.constant 0 : i32
    return %c0_i32, %c0_i32_0 : i32, i32
  }
  func.func @transform_5(%arg0: i32) -> (i32, i32) {
    %c0_i32 = arith.constant 0 : i32
    %c0_i32_0 = arith.constant 0 : i32
    %c0_i32_1 = arith.constant 0 : i32
    return %c0_i32, %c0_i32_0 : i32, i32
  }
  func.func @transform_6(%arg0: i32) -> (i32, i32) {
    %c0_i32 = arith.constant 0 : i32
    %c0_i32_0 = arith.constant 0 : i32
    %c0_i32_1 = arith.constant 0 : i32
    return %c0_i32, %c0_i32_0 : i32, i32
  }
  func.func @transform_7(%arg0: i32) -> (i32, i32) {
    %c0_i32 = arith.constant 0 : i32
    %c0_i32_0 = arith.constant 0 : i32
    %c0_i32_1 = arith.constant 0 : i32
    return %c0_i32, %c0_i32_0 : i32, i32
  }
  func.func @transform_8(%arg0: i32) -> (i32, i32) {
    %c0_i32 = arith.constant 0 : i32
    %c0_i32_0 = arith.constant 0 : i32
    %c0_i32_1 = arith.constant 0 : i32
    return %c0_i32, %c0_i32_0 : i32, i32
  }
  func.func @transform_9(%arg0: i32) -> (i32, i32) {
    %c0_i32 = arith.constant 0 : i32
    %c0_i32_0 = arith.constant 0 : i32
    %c0_i32_1 = arith.constant 0 : i32
    return %c0_i32, %c0_i32_0 : i32, i32
  }
  func.func @transform_10(%arg0: i32) -> (i32, i32) {
    %c0_i32 = arith.constant 0 : i32
    %c0_i32_0 = arith.constant 0 : i32
    %c0_i32_1 = arith.constant 0 : i32
    return %c0_i32, %c0_i32_0 : i32, i32
  }
  func.func @transform_11(%arg0: i32) -> (i32, i32, i32) {
    %c0_i32 = arith.constant 0 : i32
    %c0_i32_0 = arith.constant 0 : i32
    %c0_i32_1 = arith.constant 0 : i32
    return %arg0, %c0_i32, %c0_i32_0 : i32, i32, i32
  }
}

module attributes {stable_mosaic.version = 11 : i64} {
  func.func @encoder_layer_kernel(%arg0: i32, %arg1: memref<1x8x128xf32, #tpu.memory_space<vmem>>, %arg2: memref<128x384xbf16, #tpu.memory_space<vmem>>, %arg3: memref<1x384xf32, #tpu.memory_space<vmem>>, %arg4: memref<1x128xf32, #tpu.memory_space<vmem>>, %arg5: memref<1x128xf32, #tpu.memory_space<vmem>>, %arg6: memref<128x512xbf16, #tpu.memory_space<vmem>>, %arg7: memref<1x512xf32, #tpu.memory_space<vmem>>, %arg8: memref<512x128xbf16, #tpu.memory_space<vmem>>, %arg9: memref<1x128xf32, #tpu.memory_space<vmem>>, %arg10: memref<1x128xf32, #tpu.memory_space<vmem>>, %arg11: memref<1x128xf32, #tpu.memory_space<vmem>>, %arg12: memref<1x8x128xf32, #tpu.memory_space<vmem>>) attributes {dimension_semantics = [#tpu.dimension_semantics<parallel>], iteration_bounds = array<i64: 2>, scalar_prefetch = 0 : i64, scratch_operands = 0 : i64, tpu.core_type = #tpu.core_type<tc>, window_params = [{transform_indices = @transform_0, window_bounds = array<i64: 1, 8, 128>}, {pipeline_mode = #tpu.pipeline_mode<synchronous>, transform_indices = @transform_1, window_bounds = array<i64: 128, 384>}, {pipeline_mode = #tpu.pipeline_mode<synchronous>, transform_indices = @transform_2, window_bounds = array<i64: 1, 384>}, {pipeline_mode = #tpu.pipeline_mode<synchronous>, transform_indices = @transform_3, window_bounds = array<i64: 1, 128>}, {pipeline_mode = #tpu.pipeline_mode<synchronous>, transform_indices = @transform_4, window_bounds = array<i64: 1, 128>}, {pipeline_mode = #tpu.pipeline_mode<synchronous>, transform_indices = @transform_5, window_bounds = array<i64: 128, 512>}, {pipeline_mode = #tpu.pipeline_mode<synchronous>, transform_indices = @transform_6, window_bounds = array<i64: 1, 512>}, {pipeline_mode = #tpu.pipeline_mode<synchronous>, transform_indices = @transform_7, window_bounds = array<i64: 512, 128>}, {pipeline_mode = #tpu.pipeline_mode<synchronous>, transform_indices = @transform_8, window_bounds = array<i64: 1, 128>}, {pipeline_mode = #tpu.pipeline_mode<synchronous>, transform_indices = @transform_9, window_bounds = array<i64: 1, 128>}, {pipeline_mode = #tpu.pipeline_mode<synchronous>, transform_indices = @transform_10, window_bounds = array<i64: 1, 128>}, {transform_indices = @transform_11, window_bounds = array<i64: 1, 8, 128>}]} {
    %c0 = arith.constant 0 : index
    %c0_0 = arith.constant 0 : index
    %c0_1 = arith.constant 0 : index
    %0 = vector.load %arg1[%c0, %c0_0, %c0_1] : memref<1x8x128xf32, #tpu.memory_space<vmem>>, vector<1x8x128xf32>
    %1 = vector.shape_cast %0 : vector<1x8x128xf32> to vector<8x128xf32>
    %2 = arith.truncf %1 : vector<8x128xf32> to vector<8x128xbf16>
    %c0_2 = arith.constant 0 : index
    %c0_3 = arith.constant 0 : index
    %3 = vector.load %arg2[%c0_2, %c0_3] : memref<128x384xbf16, #tpu.memory_space<vmem>>, vector<128x384xbf16>
    %cst = arith.constant dense<0.000000e+00> : vector<8x384xf32>
    %4 = tpu.matmul %2, %3, %cst {dimension_numbers = #tpu.dot_dimension_numbers<[1], [0], [0], [1], [0, 0, 1, 1], [], []>} : vector<8x128xbf16>, vector<128x384xbf16>, vector<8x384xf32> -> vector<8x384xf32>
    %c0_4 = arith.constant 0 : index
    %c0_5 = arith.constant 0 : index
    %5 = vector.load %arg3[%c0_4, %c0_5] : memref<1x384xf32, #tpu.memory_space<vmem>>, vector<1x384xf32>
    %6 = vector.broadcast %5 : vector<1x384xf32> to vector<8x384xf32>
    %7 = arith.addf %4, %6 : vector<8x384xf32>
    %8 = vector.extract_strided_slice %7 {offsets = [0, 0], sizes = [8, 128], strides = [1, 1]} : vector<8x384xf32> to vector<8x128xf32>
    %9 = vector.shape_cast %8 : vector<8x128xf32> to vector<1x8x4x32xf32>
    %10 = tpu.transpose %9, [0, 2, 1, 3] : vector<1x8x4x32xf32> -> vector<1x4x8x32xf32>
    %11 = vector.shape_cast %10 : vector<1x4x8x32xf32> to vector<4x8x32xf32>
    %12 = arith.truncf %11 : vector<4x8x32xf32> to vector<4x8x32xbf16>
    %13 = vector.extract_strided_slice %7 {offsets = [0, 128], sizes = [8, 128], strides = [1, 1]} : vector<8x384xf32> to vector<8x128xf32>
    %14 = vector.shape_cast %13 : vector<8x128xf32> to vector<1x8x4x32xf32>
    %15 = tpu.transpose %14, [0, 2, 1, 3] : vector<1x8x4x32xf32> -> vector<1x4x8x32xf32>
    %16 = vector.shape_cast %15 : vector<1x4x8x32xf32> to vector<4x8x32xf32>
    %17 = arith.truncf %16 : vector<4x8x32xf32> to vector<4x8x32xbf16>
    %18 = vector.extract_strided_slice %7 {offsets = [0, 256], sizes = [8, 128], strides = [1, 1]} : vector<8x384xf32> to vector<8x128xf32>
    %19 = vector.shape_cast %18 : vector<8x128xf32> to vector<1x8x4x32xf32>
    %20 = tpu.transpose %19, [0, 2, 1, 3] : vector<1x8x4x32xf32> -> vector<1x4x8x32xf32>
    %21 = vector.shape_cast %20 : vector<1x4x8x32xf32> to vector<4x8x32xf32>
    %22 = arith.truncf %21 : vector<4x8x32xf32> to vector<4x8x32xbf16>
    "tpu.trace_start"() <{level = 10 : i32, message = "bqd,bkd->bqk"}> : () -> ()
    %cst_6 = arith.constant dense<0.000000e+00> : vector<4x8x8xf32>
    %23 = tpu.matmul %12, %17, %cst_6 {dimension_numbers = #tpu.dot_dimension_numbers<[2], [2], [1], [1], [0, 0, 0, 1, 1, 1], [0], [0]>} : vector<4x8x32xbf16>, vector<4x8x32xbf16>, vector<4x8x8xf32> -> vector<4x8x8xf32>
    "tpu.trace_stop"() : () -> ()
    %cst_7 = arith.constant dense<0xFF800000> : vector<4x8xf32>
    %24 = vector.multi_reduction <maximumf>, %23, %cst_7 [2] : vector<4x8x8xf32> to vector<4x8xf32>
    %25 = vector.shape_cast %24 : vector<4x8xf32> to vector<4x8x1xf32>
    %26 = vector.broadcast %25 : vector<4x8x1xf32> to vector<4x8x8xf32>
    %27 = arith.subf %23, %26 : vector<4x8x8xf32>
    %28 = math.exp %27 : vector<4x8x8xf32>
    %cst_8 = arith.constant dense<0.000000e+00> : vector<4x8xf32>
    %29 = vector.multi_reduction <add>, %28, %cst_8 [2] : vector<4x8x8xf32> to vector<4x8xf32>
    %30 = vector.shape_cast %29 : vector<4x8xf32> to vector<4x8x1xf32>
    %31 = tpu.reciprocal %30 {approx = true} : vector<4x8x1xf32> -> vector<4x8x1xf32>
    %32 = vector.broadcast %31 : vector<4x8x1xf32> to vector<4x8x8xf32>
    %33 = arith.mulf %28, %32 : vector<4x8x8xf32>
    %34 = arith.truncf %33 : vector<4x8x8xf32> to vector<4x8x8xbf16>
    "tpu.trace_start"() <{level = 10 : i32, message = "bqk,bkd->bqd"}> : () -> ()
    %cst_9 = arith.constant dense<0.000000e+00> : vector<4x8x32xf32>
    %35 = tpu.matmul %34, %22, %cst_9 {dimension_numbers = #tpu.dot_dimension_numbers<[2], [1], [1], [2], [0, 0, 0, 1, 1, 2], [0], [0]>} : vector<4x8x8xbf16>, vector<4x8x32xbf16>, vector<4x8x32xf32> -> vector<4x8x32xf32>
    "tpu.trace_stop"() : () -> ()
    %36 = vector.shape_cast %35 : vector<4x8x32xf32> to vector<1x4x8x32xf32>
    %37 = tpu.transpose %36, [0, 2, 1, 3] : vector<1x4x8x32xf32> -> vector<1x8x4x32xf32>
    %38 = vector.shape_cast %37 : vector<1x8x4x32xf32> to vector<8x128xf32>
    %39 = arith.addf %1, %38 : vector<8x128xf32>
    %c0_10 = arith.constant 0 : index
    %c0_11 = arith.constant 0 : index
    %40 = vector.load %arg4[%c0_10, %c0_11] : memref<1x128xf32, #tpu.memory_space<vmem>>, vector<1x128xf32>
    %c0_12 = arith.constant 0 : index
    %c0_13 = arith.constant 0 : index
    %41 = vector.load %arg5[%c0_12, %c0_13] : memref<1x128xf32, #tpu.memory_space<vmem>>, vector<1x128xf32>
    %cst_14 = arith.constant dense<0.000000e+00> : vector<8xf32>
    %42 = vector.multi_reduction <add>, %39, %cst_14 [1] : vector<8x128xf32> to vector<8xf32>
    %43 = vector.shape_cast %42 : vector<8xf32> to vector<8x1xf32>
    %cst_15 = arith.constant 1.280000e+02 : f32
    %44 = vector.broadcast %cst_15 : f32 to vector<8x1xf32>
    %45 = arith.divf %43, %44 : vector<8x1xf32>
    %46 = vector.broadcast %45 : vector<8x1xf32> to vector<8x128xf32>
    %47 = arith.subf %39, %46 : vector<8x128xf32>
    %48 = arith.mulf %47, %47 : vector<8x128xf32>
    %cst_16 = arith.constant dense<0.000000e+00> : vector<8xf32>
    %49 = vector.multi_reduction <add>, %48, %cst_16 [1] : vector<8x128xf32> to vector<8xf32>
    %50 = vector.shape_cast %49 : vector<8xf32> to vector<8x1xf32>
    %cst_17 = arith.constant 1.280000e+02 : f32
    %51 = vector.broadcast %cst_17 : f32 to vector<8x1xf32>
    %52 = arith.divf %50, %51 : vector<8x1xf32>
    %53 = vector.broadcast %45 : vector<8x1xf32> to vector<8x128xf32>
    %54 = arith.subf %39, %53 : vector<8x128xf32>
    %cst_18 = arith.constant 9.99999974E-6 : f32
    %55 = vector.broadcast %cst_18 : f32 to vector<8x1xf32>
    %56 = arith.addf %52, %55 : vector<8x1xf32>
    %57 = math.rsqrt %56 : vector<8x1xf32>
    %58 = vector.broadcast %57 : vector<8x1xf32> to vector<8x128xf32>
    %59 = arith.mulf %54, %58 : vector<8x128xf32>
    %60 = vector.broadcast %40 : vector<1x128xf32> to vector<8x128xf32>
    %61 = arith.mulf %59, %60 : vector<8x128xf32>
    %62 = vector.broadcast %41 : vector<1x128xf32> to vector<8x128xf32>
    %63 = arith.addf %61, %62 : vector<8x128xf32>
    %64 = arith.truncf %63 : vector<8x128xf32> to vector<8x128xbf16>
    %c0_19 = arith.constant 0 : index
    %c0_20 = arith.constant 0 : index
    %65 = vector.load %arg6[%c0_19, %c0_20] : memref<128x512xbf16, #tpu.memory_space<vmem>>, vector<128x512xbf16>
    %cst_21 = arith.constant dense<0.000000e+00> : vector<8x512xf32>
    %66 = tpu.matmul %64, %65, %cst_21 {dimension_numbers = #tpu.dot_dimension_numbers<[1], [0], [0], [1], [0, 0, 1, 1], [], []>} : vector<8x128xbf16>, vector<128x512xbf16>, vector<8x512xf32> -> vector<8x512xf32>
    %c0_22 = arith.constant 0 : index
    %c0_23 = arith.constant 0 : index
    %67 = vector.load %arg7[%c0_22, %c0_23] : memref<1x512xf32, #tpu.memory_space<vmem>>, vector<1x512xf32>
    %68 = vector.broadcast %67 : vector<1x512xf32> to vector<8x512xf32>
    %69 = arith.addf %66, %68 : vector<8x512xf32>
    %cst_24 = arith.constant 0.000000e+00 : f32
    %70 = vector.broadcast %cst_24 : f32 to vector<8x512xf32>
    %71 = arith.maximumf %69, %70 : vector<8x512xf32>
    %72 = arith.truncf %71 : vector<8x512xf32> to vector<8x512xbf16>
    %c0_25 = arith.constant 0 : index
    %c0_26 = arith.constant 0 : index
    %73 = vector.load %arg8[%c0_25, %c0_26] : memref<512x128xbf16, #tpu.memory_space<vmem>>, vector<512x128xbf16>
    %cst_27 = arith.constant dense<0.000000e+00> : vector<8x128xf32>
    %74 = tpu.matmul %72, %73, %cst_27 {dimension_numbers = #tpu.dot_dimension_numbers<[1], [0], [0], [1], [0, 0, 1, 1], [], []>} : vector<8x512xbf16>, vector<512x128xbf16>, vector<8x128xf32> -> vector<8x128xf32>
    %c0_28 = arith.constant 0 : index
    %c0_29 = arith.constant 0 : index
    %75 = vector.load %arg9[%c0_28, %c0_29] : memref<1x128xf32, #tpu.memory_space<vmem>>, vector<1x128xf32>
    %76 = vector.broadcast %75 : vector<1x128xf32> to vector<8x128xf32>
    %77 = arith.addf %74, %76 : vector<8x128xf32>
    %78 = arith.addf %63, %77 : vector<8x128xf32>
    %c0_30 = arith.constant 0 : index
    %c0_31 = arith.constant 0 : index
    %79 = vector.load %arg10[%c0_30, %c0_31] : memref<1x128xf32, #tpu.memory_space<vmem>>, vector<1x128xf32>
    %c0_32 = arith.constant 0 : index
    %c0_33 = arith.constant 0 : index
    %80 = vector.load %arg11[%c0_32, %c0_33] : memref<1x128xf32, #tpu.memory_space<vmem>>, vector<1x128xf32>
    %cst_34 = arith.constant dense<0.000000e+00> : vector<8xf32>
    %81 = vector.multi_reduction <add>, %78, %cst_34 [1] : vector<8x128xf32> to vector<8xf32>
    %82 = vector.shape_cast %81 : vector<8xf32> to vector<8x1xf32>
    %cst_35 = arith.constant 1.280000e+02 : f32
    %83 = vector.broadcast %cst_35 : f32 to vector<8x1xf32>
    %84 = arith.divf %82, %83 : vector<8x1xf32>
    %85 = vector.broadcast %84 : vector<8x1xf32> to vector<8x128xf32>
    %86 = arith.subf %78, %85 : vector<8x128xf32>
    %87 = arith.mulf %86, %86 : vector<8x128xf32>
    %cst_36 = arith.constant dense<0.000000e+00> : vector<8xf32>
    %88 = vector.multi_reduction <add>, %87, %cst_36 [1] : vector<8x128xf32> to vector<8xf32>
    %89 = vector.shape_cast %88 : vector<8xf32> to vector<8x1xf32>
    %cst_37 = arith.constant 1.280000e+02 : f32
    %90 = vector.broadcast %cst_37 : f32 to vector<8x1xf32>
    %91 = arith.divf %89, %90 : vector<8x1xf32>
    %92 = vector.broadcast %84 : vector<8x1xf32> to vector<8x128xf32>
    %93 = arith.subf %78, %92 : vector<8x128xf32>
    %cst_38 = arith.constant 9.99999974E-6 : f32
    %94 = vector.broadcast %cst_38 : f32 to vector<8x1xf32>
    %95 = arith.addf %91, %94 : vector<8x1xf32>
    %96 = math.rsqrt %95 : vector<8x1xf32>
    %97 = vector.broadcast %96 : vector<8x1xf32> to vector<8x128xf32>
    %98 = arith.mulf %93, %97 : vector<8x128xf32>
    %99 = vector.broadcast %79 : vector<1x128xf32> to vector<8x128xf32>
    %100 = arith.mulf %98, %99 : vector<8x128xf32>
    %101 = vector.broadcast %80 : vector<1x128xf32> to vector<8x128xf32>
    %102 = arith.addf %100, %101 : vector<8x128xf32>
    %103 = vector.shape_cast %102 : vector<8x128xf32> to vector<1x8x128xf32>
    %c0_39 = arith.constant 0 : index
    %c0_40 = arith.constant 0 : index
    %c0_41 = arith.constant 0 : index
    %104 = vector.load %arg12[%c0_39, %c0_40, %c0_41] : memref<1x8x128xf32, #tpu.memory_space<vmem>>, vector<1x8x128xf32>
    tpu.vector_store %arg12[%c0_39, %c0_40, %c0_41], %103 {strides = array<i32>} : memref<1x8x128xf32, #tpu.memory_space<vmem>>, vector<1x8x128xf32>,
    return
  }
  func.func @transform_0(%arg0: i32) -> (i32, i32, i32) {
    %c0_i32 = arith.constant 0 : i32
    %c0_i32_0 = arith.constant 0 : i32
    %c0_i32_1 = arith.constant 0 : i32
    return %arg0, %c0_i32, %c0_i32_0 : i32, i32, i32
  }
  func.func @transform_1(%arg0: i32) -> (i32, i32) {
    %c0_i32 = arith.constant 0 : i32
    %c0_i32_0 = arith.constant 0 : i32
    %c0_i32_1 = arith.constant 0 : i32
    return %c0_i32, %c0_i32_0 : i32, i32
  }
  func.func @transform_2(%arg0: i32) -> (i32, i32) {
    %c0_i32 = arith.constant 0 : i32
    %c0_i32_0 = arith.constant 0 : i32
    %c0_i32_1 = arith.constant 0 : i32
    return %c0_i32, %c0_i32_0 : i32, i32
  }
  func.func @transform_3(%arg0: i32) -> (i32, i32) {
    %c0_i32 = arith.constant 0 : i32
    %c0_i32_0 = arith.constant 0 : i32
    %c0_i32_1 = arith.constant 0 : i32
    return %c0_i32, %c0_i32_0 : i32, i32
  }
  func.func @transform_4(%arg0: i32) -> (i32, i32) {
    %c0_i32 = arith.constant 0 : i32
    %c0_i32_0 = arith.constant 0 : i32
    %c0_i32_1 = arith.constant 0 : i32
    return %c0_i32, %c0_i32_0 : i32, i32
  }
  func.func @transform_5(%arg0: i32) -> (i32, i32) {
    %c0_i32 = arith.constant 0 : i32
    %c0_i32_0 = arith.constant 0 : i32
    %c0_i32_1 = arith.constant 0 : i32
    return %c0_i32, %c0_i32_0 : i32, i32
  }
  func.func @transform_6(%arg0: i32) -> (i32, i32) {
    %c0_i32 = arith.constant 0 : i32
    %c0_i32_0 = arith.constant 0 : i32
    %c0_i32_1 = arith.constant 0 : i32
    return %c0_i32, %c0_i32_0 : i32, i32
  }
  func.func @transform_7(%arg0: i32) -> (i32, i32) {
    %c0_i32 = arith.constant 0 : i32
    %c0_i32_0 = arith.constant 0 : i32
    %c0_i32_1 = arith.constant 0 : i32
    return %c0_i32, %c0_i32_0 : i32, i32
  }
  func.func @transform_8(%arg0: i32) -> (i32, i32) {
    %c0_i32 = arith.constant 0 : i32
    %c0_i32_0 = arith.constant 0 : i32
    %c0_i32_1 = arith.constant 0 : i32
    return %c0_i32, %c0_i32_0 : i32, i32
  }
  func.func @transform_9(%arg0: i32) -> (i32, i32) {
    %c0_i32 = arith.constant 0 : i32
    %c0_i32_0 = arith.constant 0 : i32
    %c0_i32_1 = arith.constant 0 : i32
    return %c0_i32, %c0_i32_0 : i32, i32
  }
  func.func @transform_10(%arg0: i32) -> (i32, i32) {
    %c0_i32 = arith.constant 0 : i32
    %c0_i32_0 = arith.constant 0 : i32
    %c0_i32_1 = arith.constant 0 : i32
    return %c0_i32, %c0_i32_0 : i32, i32
  }
  func.func @transform_11(%arg0: i32) -> (i32, i32, i32) {
    %c0_i32 = arith.constant 0 : i32
    %c0_i32_0 = arith.constant 0 : i32
    %c0_i32_1 = arith.constant 0 : i32
    return %arg0, %c0_i32, %c0_i32_0 : i32, i32, i32
  }
}

</mosaic_0001>

<llo_original>
// kernel: tpu_custom_call.1
$region0: #{tpu_custom_call.1}
  #allocation0 [shape = 'u32[]', space=smem, size = 0x4, offset = 0x4, fixed_abs, tag = 'smem constant byte address 0x4 - core index']
  #allocation1 [shape = 'u32[72,128]{1,0:T(1,128)}', space=vmem, size = 0x9000, scoped, tag = 'internal scratch']
  %s0 = inlined_call_operand.hbm [shape: f32[2,8,128], index: 0, kind: input, shape index: {}]
  %s1 = inlined_call_operand.hbm [shape: bf16[128,384], index: 1, kind: input, shape index: {}]
  %s2 = inlined_call_operand.hbm [shape: f32[1,384], index: 2, kind: input, shape index: {}]
  %s3 = inlined_call_operand.vmem [shape: f32[1,128], index: 3, kind: input, shape index: {}]
  %s4 = inlined_call_operand.hbm [shape: f32[1,128], index: 4, kind: input, shape index: {}]
  %s5 = inlined_call_operand.hbm [shape: bf16[128,512], index: 5, kind: input, shape index: {}]
  %s6 = inlined_call_operand.vmem [shape: f32[1,512], index: 6, kind: input, shape index: {}]
  %s7 = inlined_call_operand.hbm [shape: bf16[512,128], index: 7, kind: input, shape index: {}]
  %s8 = inlined_call_operand.vmem [shape: f32[1,128], index: 8, kind: input, shape index: {}]
  %s9 = inlined_call_operand.vmem [shape: f32[1,128], index: 9, kind: input, shape index: {}]
  %s10 = inlined_call_operand.vmem [shape: f32[1,128], index: 10, kind: input, shape index: {}]
  %s11 = inlined_call_operand.hbm [shape: f32[2,8,128], index: 11, kind: output, shape index: {}]
  %s12 = sld [smem:[#allocation0]]
  $region101: #{tpu_custom_call.1} parent=0
    _
  %s14 = ssub.s32 1, %s12
  %s15 = scalar_select 0, %s14, %s12
  $region1: #{tpu_custom_call.1} parent=0
    #allocation2 [shape = 'u8[8192]{0}', space=vmem, size = 0x2000, scoped, tag = 'input window, operand 0']
    #allocation3 [shape = 's32[2]{0}', space=sflag, size = 0x8, scoped, tag = 'scoped memory for tpu_custom_call.1']
    #allocation4 [shape = 's32[2]{0}', space=sflag, size = 0x8, scoped, tag = 'scoped memory for tpu_custom_call.1']
    #allocation5 [shape = 'u8[98304]{0}', space=vmem, size = 0x18000, scoped, tag = 'input window, operand 1, single buffered']
    #allocation6 [shape = 's32[1]{0}', space=sflag, size = 0x4, scoped, tag = 'scoped memory for tpu_custom_call.1']
    #allocation7 [shape = 'u8[1536]{0}', space=vmem, size = 0x800, scoped, tag = 'input window, operand 2, single buffered']
    #allocation8 [shape = 'u8[512]{0}', space=vmem, size = 0x400, scoped, tag = 'input window, operand 4, single buffered']
    #allocation9 [shape = 's32[1]{0}', space=sflag, size = 0x4, scoped, tag = 'scoped memory for tpu_custom_call.1']
    #allocation10 [shape = 'u8[131072]{0}', space=vmem, size = 0x20000, scoped, tag = 'input window, operand 5, single buffered']
    #allocation11 [shape = 'u8[131072]{0}', space=vmem, size = 0x20000, scoped, tag = 'input window, operand 7, single buffered']
    #allocation12 [shape = 's32[1]{0}', space=sflag, size = 0x4, scoped, tag = 'scoped memory for tpu_custom_call.1']
    #allocation13 [shape = 'u8[8192]{0}', space=vmem, size = 0x2000, scoped, tag = 'output window, operand 0']
    %16 = vsyncpa [#allocation3], 0
    %s17 = scalar_lea.sflag [#allocation3], 1
    %18 = vsyncpa %s17, 0
    %19 = vsyncpa [#allocation6], 0
    %20 = vsyncpa [#allocation9], 0
    %21 = vsyncpa [#allocation12], 0
    %22 = vsyncpa [#allocation4], 0
    %s23 = scalar_lea.sflag [#allocation4], 1
    %24 = vsyncpa %s23, 0
    loop: start=0, step=1, limit=4
    $region2: #{tpu_custom_call.1} parent=1 // loop_pre_header
      _
    $region3: #{tpu_custom_call.1} parent=1 // loop_header
      %s26 = sphi 0, %s30
      %p27 = scmp.ge.s32.totalorder %s26, 4
      %s36 = sphi 0, %s38
      %s39 = sphi 0, %s36
      %s40 = sphi 0, %s39
      %s56 = sphi 0, %s40
      %s60 = sphi 0, %s60
      %s62 = sphi 0, %s60
      %s63 = sphi 0, %s62
      %s77 = sphi 0, %s63
      %s81 = sphi 0, %s81
      %s83 = sphi 0, %s81
      %s84 = sphi 0, %s83
      %s98 = sphi 0, %s84
      %s102 = sphi 0, %s102
      %s104 = sphi 0, %s102
      %s105 = sphi 0, %s104
      %s119 = sphi 0, %s105
      %s123 = sphi 0, %s123
      %s125 = sphi 0, %s123
      %s126 = sphi 0, %s125
      %s140 = sphi 0, %s126
      %s144 = sphi 0, %s144
      %s146 = sphi 0, %s144
      %s147 = sphi 0, %s146
      %s161 = sphi 0, %s147
      %s165 = sphi 0, %s165
      %s167 = sphi 0, %s165
      %s168 = sphi 0, %s167
      %s182 = sphi 0, %s168
      %s186 = sphi 0, %s186
      %s188 = sphi 0, %s186
      %s189 = sphi 0, %s188
      %s203 = sphi 0, %s189
      %s207 = sphi 0, %s207
      %s209 = sphi 0, %s207
      %s210 = sphi 0, %s209
      %s224 = sphi 0, %s210
      %s228 = sphi 0, %s228
      %s230 = sphi 0, %s228
      %s231 = sphi 0, %s230
      %s245 = sphi 0, %s231
      %s249 = sphi 0, %s249
      %s251 = sphi 0, %s249
      %s252 = sphi 0, %s251
      %s266 = sphi 0, %s252
      %s272 = sphi 0, %s274
      %s275 = sphi 0, %s272
      %s276 = sphi 0, %s275
      %s292 = sphi 0, %s276
    $region4: #{tpu_custom_call.1} parent=1 // loop_header_branch
      %29 = sbr.rel (%p27) target = $region8
    $region5: #{tpu_custom_call.1} parent=1 // loop_body
      %s31 = ssub.s32 %s26, 1
      %s32 = ssub.s32 %s26, 2
      %s33 = sadd.s32 %s26, 1
      %s34 = ssub.s32 %s26, %s33
      %p35 = scmp.eq.s32.totalorder %s34, 0
      %s37 = sadd.s32 %s36, 1
      %s38 = scalar_select %p35, %s36, %s37
      %p41 = pneg %p35
      %p42 = scmp.eq.s32.totalorder %s26, 1
      %p43 = por %p41, %p42
      %p44 = scmp.ne.s32.totalorder %s36, %s39
      %p45 = scmp.eq.s32.totalorder %s26, 0
      %p46 = por %p44, %p45
      %p47 = scmp.ne.s32.totalorder %s36, %s39
      %p48 = scmp.eq.s32.totalorder %s31, 1
      %p49 = por %p47, %p48
      %p50 = scmp.ne.s32.totalorder %s39, %s40
      %p51 = scmp.eq.s32.totalorder %s31, 0
      %p52 = por %p50, %p51
      %p53 = scmp.ne.s32.totalorder %s39, %s40
      %p54 = scmp.eq.s32.totalorder %s32, 1
      %p55 = por %p53, %p54
      %p57 = scmp.ne.s32.totalorder %s40, %s56
      %p58 = scmp.eq.s32.totalorder %s32, 0
      %p59 = por %p57, %p58
      %s61 = sadd.s32 %s60, 1
      %p64 = scmp.eq.s32.totalorder %s26, 1
      %p65 = scmp.ne.s32.totalorder %s60, %s62
      %p66 = scmp.eq.s32.totalorder %s26, 0
      %p67 = por %p65, %p66
      %p68 = scmp.ne.s32.totalorder %s60, %s62
      %p69 = scmp.eq.s32.totalorder %s31, 1
      %p70 = por %p68, %p69
      %p71 = scmp.ne.s32.totalorder %s62, %s63
      %p72 = scmp.eq.s32.totalorder %s31, 0
      %p73 = por %p71, %p72
      %p74 = scmp.ne.s32.totalorder %s62, %s63
      %p75 = scmp.eq.s32.totalorder %s32, 1
      %p76 = por %p74, %p75
      %p78 = scmp.ne.s32.totalorder %s63, %s77
      %p79 = scmp.eq.s32.totalorder %s32, 0
      %p80 = por %p78, %p79
      %s82 = sadd.s32 %s81, 1
      %p85 = scmp.eq.s32.totalorder %s26, 1
      %p86 = scmp.ne.s32.totalorder %s81, %s83
      %p87 = scmp.eq.s32.totalorder %s26, 0
      %p88 = por %p86, %p87
      %p89 = scmp.ne.s32.totalorder %s81, %s83
      %p90 = scmp.eq.s32.totalorder %s31, 1
      %p91 = por %p89, %p90
      %p92 = scmp.ne.s32.totalorder %s83, %s84
      %p93 = scmp.eq.s32.totalorder %s31, 0
      %p94 = por %p92, %p93
      %p95 = scmp.ne.s32.totalorder %s83, %s84
      %p96 = scmp.eq.s32.totalorder %s32, 1
      %p97 = por %p95, %p96
      %p99 = scmp.ne.s32.totalorder %s84, %s98
      %p100 = scmp.eq.s32.totalorder %s32, 0
      %p101 = por %p99, %p100
      %s103 = sadd.s32 %s102, 1
      %p106 = scmp.eq.s32.totalorder %s26, 1
      %p107 = scmp.ne.s32.totalorder %s102, %s104
      %p108 = scmp.eq.s32.totalorder %s26, 0
      %p109 = por %p107, %p108
      %p110 = scmp.ne.s32.totalorder %s102, %s104
      %p111 = scmp.eq.s32.totalorder %s31, 1
      %p112 = por %p110, %p111
      %p113 = scmp.ne.s32.totalorder %s104, %s105
      %p114 = scmp.eq.s32.totalorder %s31, 0
      %p115 = por %p113, %p114
      %p116 = scmp.ne.s32.totalorder %s104, %s105
      %p117 = scmp.eq.s32.totalorder %s32, 1
      %p118 = por %p116, %p117
      %p120 = scmp.ne.s32.totalorder %s105, %s119
      %p121 = scmp.eq.s32.totalorder %s32, 0
      %p122 = por %p120, %p121
      %s124 = sadd.s32 %s123, 1
      %p127 = scmp.eq.s32.totalorder %s26, 1
      %p128 = scmp.ne.s32.totalorder %s123, %s125
      %p129 = scmp.eq.s32.totalorder %s26, 0
      %p130 = por %p128, %p129
      %p131 = scmp.ne.s32.totalorder %s123, %s125
      %p132 = scmp.eq.s32.totalorder %s31, 1
      %p133 = por %p131, %p132
      %p134 = scmp.ne.s32.totalorder %s125, %s126
      %p135 = scmp.eq.s32.totalorder %s31, 0
      %p136 = por %p134, %p135
      %p137 = scmp.ne.s32.totalorder %s125, %s126
      %p138 = scmp.eq.s32.totalorder %s32, 1
      %p139 = por %p137, %p138
      %p141 = scmp.ne.s32.totalorder %s126, %s140
      %p142 = scmp.eq.s32.totalorder %s32, 0
      %p143 = por %p141, %p142
      %s145 = sadd.s32 %s144, 1
      %p148 = scmp.eq.s32.totalorder %s26, 1
      %p149 = scmp.ne.s32.totalorder %s144, %s146
      %p150 = scmp.eq.s32.totalorder %s26, 0
      %p151 = por %p149, %p150
      %p152 = scmp.ne.s32.totalorder %s144, %s146
      %p153 = scmp.eq.s32.totalorder %s31, 1
      %p154 = por %p152, %p153
      %p155 = scmp.ne.s32.totalorder %s146, %s147
      %p156 = scmp.eq.s32.totalorder %s31, 0
      %p157 = por %p155, %p156
      %p158 = scmp.ne.s32.totalorder %s146, %s147
      %p159 = scmp.eq.s32.totalorder %s32, 1
      %p160 = por %p158, %p159
      %p162 = scmp.ne.s32.totalorder %s147, %s161
      %p163 = scmp.eq.s32.totalorder %s32, 0
      %p164 = por %p162, %p163
      %s166 = sadd.s32 %s165, 1
      %p169 = scmp.eq.s32.totalorder %s26, 1
      %p170 = scmp.ne.s32.totalorder %s165, %s167
      %p171 = scmp.eq.s32.totalorder %s26, 0
      %p172 = por %p170, %p171
      %p173 = scmp.ne.s32.totalorder %s165, %s167
      %p174 = scmp.eq.s32.totalorder %s31, 1
      %p175 = por %p173, %p174
      %p176 = scmp.ne.s32.totalorder %s167, %s168
      %p177 = scmp.eq.s32.totalorder %s31, 0
      %p178 = por %p176, %p177
      %p179 = scmp.ne.s32.totalorder %s167, %s168
      %p180 = scmp.eq.s32.totalorder %s32, 1
      %p181 = por %p179, %p180
      %p183 = scmp.ne.s32.totalorder %s168, %s182
      %p184 = scmp.eq.s32.totalorder %s32, 0
      %p185 = por %p183, %p184
      %s187 = sadd.s32 %s186, 1
      %p190 = scmp.eq.s32.totalorder %s26, 1
      %p191 = scmp.ne.s32.totalorder %s186, %s188
      %p192 = scmp.eq.s32.totalorder %s26, 0
      %p193 = por %p191, %p192
      %p194 = scmp.ne.s32.totalorder %s186, %s188
      %p195 = scmp.eq.s32.totalorder %s31, 1
      %p196 = por %p194, %p195
      %p197 = scmp.ne.s32.totalorder %s188, %s189
      %p198 = scmp.eq.s32.totalorder %s31, 0
      %p199 = por %p197, %p198
      %p200 = scmp.ne.s32.totalorder %s188, %s189
      %p201 = scmp.eq.s32.totalorder %s32, 1
      %p202 = por %p200, %p201
      %p204 = scmp.ne.s32.totalorder %s189, %s203
      %p205 = scmp.eq.s32.totalorder %s32, 0
      %p206 = por %p204, %p205
      %s208 = sadd.s32 %s207, 1
      %p211 = scmp.eq.s32.totalorder %s26, 1
      %p212 = scmp.ne.s32.totalorder %s207, %s209
      %p213 = scmp.eq.s32.totalorder %s26, 0
      %p214 = por %p212, %p213
      %p215 = scmp.ne.s32.totalorder %s207, %s209
      %p216 = scmp.eq.s32.totalorder %s31, 1
      %p217 = por %p215, %p216
      %p218 = scmp.ne.s32.totalorder %s209, %s210
      %p219 = scmp.eq.s32.totalorder %s31, 0
      %p220 = por %p218, %p219
      %p221 = scmp.ne.s32.totalorder %s209, %s210
      %p222 = scmp.eq.s32.totalorder %s32, 1
      %p223 = por %p221, %p222
      %p225 = scmp.ne.s32.totalorder %s210, %s224
      %p226 = scmp.eq.s32.totalorder %s32, 0
      %p227 = por %p225, %p226
      %s229 = sadd.s32 %s228, 1
      %p232 = scmp.eq.s32.totalorder %s26, 1
      %p233 = scmp.ne.s32.totalorder %s228, %s230
      %p234 = scmp.eq.s32.totalorder %s26, 0
      %p235 = por %p233, %p234
      %p236 = scmp.ne.s32.totalorder %s228, %s230
      %p237 = scmp.eq.s32.totalorder %s31, 1
      %p238 = por %p236, %p237
      %p239 = scmp.ne.s32.totalorder %s230, %s231
      %p240 = scmp.eq.s32.totalorder %s31, 0
      %p241 = por %p239, %p240
      %p242 = scmp.ne.s32.totalorder %s230, %s231
      %p243 = scmp.eq.s32.totalorder %s32, 1
      %p244 = por %p242, %p243
      %p246 = scmp.ne.s32.totalorder %s231, %s245
      %p247 = scmp.eq.s32.totalorder %s32, 0
      %p248 = por %p246, %p247
      %s250 = sadd.s32 %s249, 1
      %p253 = scmp.eq.s32.totalorder %s26, 1
      %p254 = scmp.ne.s32.totalorder %s249, %s251
      %p255 = scmp.eq.s32.totalorder %s26, 0
      %p256 = por %p254, %p255
      %p257 = scmp.ne.s32.totalorder %s249, %s251
      %p258 = scmp.eq.s32.totalorder %s31, 1
      %p259 = por %p257, %p258
      %p260 = scmp.ne.s32.totalorder %s251, %s252
      %p261 = scmp.eq.s32.totalorder %s31, 0
      %p262 = por %p260, %p261
      %p263 = scmp.ne.s32.totalorder %s251, %s252
      %p264 = scmp.eq.s32.totalorder %s32, 1
      %p265 = por %p263, %p264
      %p267 = scmp.ne.s32.totalorder %s252, %s266
      %p268 = scmp.eq.s32.totalorder %s32, 0
      %p269 = por %p267, %p268
      %s270 = ssub.s32 %s26, %s33
      %p271 = scmp.eq.s32.totalorder %s270, 0
      %s273 = sadd.s32 %s272, 1
      %s274 = scalar_select %p271, %s272, %s273
      %p277 = pneg %p271
      %p278 = scmp.eq.s32.totalorder %s26, 1
      %p279 = por %p277, %p278
      %p280 = scmp.ne.s32.totalorder %s272, %s275
      %p281 = scmp.eq.s32.totalorder %s26, 0
      %p282 = por %p280, %p281
      %p283 = scmp.ne.s32.totalorder %s272, %s275
      %p284 = scmp.eq.s32.totalorder %s31, 1
      %p285 = por %p283, %p284
      %p286 = scmp.ne.s32.totalorder %s275, %s276
      %p287 = scmp.eq.s32.totalorder %s31, 0
      %p288 = por %p286, %p287
      %p289 = scmp.ne.s32.totalorder %s275, %s276
      %p290 = scmp.eq.s32.totalorder %s32, 1
      %p291 = por %p289, %p290
      %p293 = scmp.ne.s32.totalorder %s276, %s292
      %p294 = scmp.eq.s32.totalorder %s32, 0
      %p295 = por %p293, %p294
      %p296 = scmp.le.s32.totalorder 1, %s26
      %p297 = scmp.lt.s32.totalorder %s26, 3
      %p298 = pnand %p296, %p297
      %p299 = pneg %p298
      // Predicated region
      $region9: #{tpu_custom_call.1} parent=5 // pred_check
        _
      $region10: #{tpu_custom_call.1} parent=5 // pred_check_branch
        %301 = sbr.rel (%p298) target = $region12
      $region11: #{tpu_custom_call.1} parent=5 // pred_region
        %s302 = ssub.s32 %s26, 1
        // Predicated region
        $region13: #{tpu_custom_call.1} parent=11 // pred_check
          %p303 = pneg %p73
        $region14: #{tpu_custom_call.1} parent=11 // pred_check_branch
          %305 = sbr.rel (%p303) target = $region16
        $region15: #{tpu_custom_call.1} parent=11 // pred_region
          %307 = vsyncadd [#allocation6], 0
          %s308 = sshll.u32 %s1, 4
          %s309 = int_to_ptr.hbm [resolvable:$true] %s308
          %s310 = sshll.u32 [#allocation5], 4
          %s311 = int_to_ptr.vmem [resolvable:$true] %s310
          %316 = dma.hbm_to_vmem [thread:$0]  %s309, 3072, %s311, [#allocation6], 192, 192, 12
        $region16: #{tpu_custom_call.1} parent=11 // pred_fallthru
          _
        // Predicated region
        $region17: #{tpu_custom_call.1} parent=11 // pred_check
          %p317 = pneg %p94
        $region18: #{tpu_custom_call.1} parent=11 // pred_check_branch
          %319 = sbr.rel (%p317) target = $region20
        $region19: #{tpu_custom_call.1} parent=11 // pred_region
          %321 = vsyncadd [#allocation6], 0
          %s323 = sshll.u32 %s2, 4
          %s324 = int_to_ptr.hbm [resolvable:$true] %s323
          %s325 = sshll.u32 [#allocation7], 4
          %s326 = int_to_ptr.vmem [resolvable:$true] %s325
          %328 = dma.hbm_to_vmem [thread:$0]  %s324, 48, %s326, [#allocation6]
        $region20: #{tpu_custom_call.1} parent=11 // pred_fallthru
          _
        // Predicated region
        $region21: #{tpu_custom_call.1} parent=11 // pred_check
          %p329 = pneg %p115
        $region22: #{tpu_custom_call.1} parent=11 // pred_check_branch
          %331 = sbr.rel (%p329) target = $region24
        $region23: #{tpu_custom_call.1} parent=11 // pred_region
          _
        $region24: #{tpu_custom_call.1} parent=11 // pred_fallthru
          _
        // Predicated region
        $region25: #{tpu_custom_call.1} parent=11 // pred_check
          %p332 = pneg %p136
        $region26: #{tpu_custom_call.1} parent=11 // pred_check_branch
          %334 = sbr.rel (%p332) target = $region28
        $region27: #{tpu_custom_call.1} parent=11 // pred_region
          %336 = vsyncadd [#allocation9], 0
          %s338 = sshll.u32 %s4, 4
          %s339 = int_to_ptr.hbm [resolvable:$true] %s338
          %s340 = sshll.u32 [#allocation8], 4
          %s341 = int_to_ptr.vmem [resolvable:$true] %s340
          %343 = dma.hbm_to_vmem [thread:$0]  %s339, 16, %s341, [#allocation9]
        $region28: #{tpu_custom_call.1} parent=11 // pred_fallthru
          _
        // Predicated region
        $region29: #{tpu_custom_call.1} parent=11 // pred_check
          %p344 = pneg %p157
        $region30: #{tpu_custom_call.1} parent=11 // pred_check_branch
          %346 = sbr.rel (%p344) target = $region32
        $region31: #{tpu_custom_call.1} parent=11 // pred_region
          %348 = vsyncadd [#allocation9], 0
          %s349 = sshll.u32 %s5, 4
          %s350 = int_to_ptr.hbm [resolvable:$true] %s349
          %s351 = sshll.u32 [#allocation10], 4
          %s352 = int_to_ptr.vmem [resolvable:$true] %s351
          %357 = dma.hbm_to_vmem [thread:$0]  %s350, 4096, %s352, [#allocation9], 256, 256, 16
        $region32: #{tpu_custom_call.1} parent=11 // pred_fallthru
          _
        // Predicated region
        $region33: #{tpu_custom_call.1} parent=11 // pred_check
          %p358 = pneg %p178
        $region34: #{tpu_custom_call.1} parent=11 // pred_check_branch
          %360 = sbr.rel (%p358) target = $region36
        $region35: #{tpu_custom_call.1} parent=11 // pred_region
          _
        $region36: #{tpu_custom_call.1} parent=11 // pred_fallthru
          _
        // Predicated region
        $region37: #{tpu_custom_call.1} parent=11 // pred_check
          %p361 = pneg %p199
        $region38: #{tpu_custom_call.1} parent=11 // pred_check_branch
          %363 = sbr.rel (%p361) target = $region40
        $region39: #{tpu_custom_call.1} parent=11 // pred_region
          %365 = vsyncadd [#allocation12], 0
          %s366 = sshll.u32 %s7, 4
          %s367 = int_to_ptr.hbm [resolvable:$true] %s366
          %s368 = sshll.u32 [#allocation11], 4
          %s369 = int_to_ptr.vmem [resolvable:$true] %s368
          %374 = dma.hbm_to_vmem [thread:$0]  %s367, 4096, %s369, [#allocation12], 64, 64, 4
        $region40: #{tpu_custom_call.1} parent=11 // pred_fallthru
          _
        // Predicated region
        $region41: #{tpu_custom_call.1} parent=11 // pred_check
          %p375 = pneg %p220
        $region42: #{tpu_custom_call.1} parent=11 // pred_check_branch
          %377 = sbr.rel (%p375) target = $region44
        $region43: #{tpu_custom_call.1} parent=11 // pred_region
          _
        $region44: #{tpu_custom_call.1} parent=11 // pred_fallthru
          _
        // Predicated region
        $region45: #{tpu_custom_call.1} parent=11 // pred_check
          %p378 = pneg %p241
        $region46: #{tpu_custom_call.1} parent=11 // pred_check_branch
          %380 = sbr.rel (%p378) target = $region48
        $region47: #{tpu_custom_call.1} parent=11 // pred_region
          _
        $region48: #{tpu_custom_call.1} parent=11 // pred_fallthru
          _
        // Predicated region
        $region49: #{tpu_custom_call.1} parent=11 // pred_check
          %p381 = pneg %p262
        $region50: #{tpu_custom_call.1} parent=11 // pred_check_branch
          %383 = sbr.rel (%p381) target = $region52
        $region51: #{tpu_custom_call.1} parent=11 // pred_region
          _
        $region52: #{tpu_custom_call.1} parent=11 // pred_fallthru
          _
      $region12: #{tpu_custom_call.1} parent=5 // pred_fallthru
        _
      %p384 = scmp.lt.s32.totalorder %s26, 2
      // Predicated region
      $region53: #{tpu_custom_call.1} parent=5 // pred_check
        %p385 = pneg %p384
      $region54: #{tpu_custom_call.1} parent=5 // pred_check_branch
        %387 = sbr.rel (%p385) target = $region56
      $region55: #{tpu_custom_call.1} parent=5 // pred_region
        // Predicated region
        $region57: #{tpu_custom_call.1} parent=55 // pred_check
          %p388 = pneg %p46
        $region58: #{tpu_custom_call.1} parent=55 // pred_check_branch
          %390 = sbr.rel (%p388) target = $region60
        $region59: #{tpu_custom_call.1} parent=55 // pred_region
          %s391 = sand.u32 %s36, 1
          %s392 = scalar_lea.sflag [#allocation3], %s391
          %s393 = sand.u32 %s36, 1
          %s394 = smul.addr %s393, 8
          %s395 = scalar_lea.vmem [#allocation2], %s394
          %397 = vsyncadd %s392, 0
          %s398 = smul.addr %s26, 8
          %s399 = scalar_lea.hbm %s0, %s398
          %s401 = sshll.u32 %s399, 4
          %s402 = int_to_ptr.hbm [resolvable:$true] %s401
          %s403 = sshll.u32 %s395, 4
          %s404 = int_to_ptr.vmem [resolvable:$true] %s403
          %406 = dma.hbm_to_vmem [thread:$0]  %s402, 128, %s404, %s392
        $region60: #{tpu_custom_call.1} parent=55 // pred_fallthru
          _
      $region56: #{tpu_custom_call.1} parent=5 // pred_fallthru
        _
      %p407 = scmp.le.s32.totalorder 1, %s26
      %p408 = scmp.lt.s32.totalorder %s26, 3
      %p409 = pnand %p407, %p408
      %p410 = pneg %p409
      // Predicated region
      $region61: #{tpu_custom_call.1} parent=5 // pred_check
        _
      $region62: #{tpu_custom_call.1} parent=5 // pred_check_branch
        %412 = sbr.rel (%p409) target = $region64
      $region63: #{tpu_custom_call.1} parent=5 // pred_region
        %s413 = ssub.s32 %s26, 1
        %s414 = sand.u32 %s39, 1
        %s415 = scalar_lea.sflag [#allocation3], %s414
        %s416 = sand.u32 %s39, 1
        %s417 = smul.addr %s416, 8
        %s418 = scalar_lea.vmem [#allocation2], %s417
        // Predicated region
        $region65: #{tpu_custom_call.1} parent=63 // pred_check
          %p419 = pneg %p52
        $region66: #{tpu_custom_call.1} parent=63 // pred_check_branch
          %421 = sbr.rel (%p419) target = $region68
        $region67: #{tpu_custom_call.1} parent=63 // pred_region
          %423 = dma.done %s415, 128
        $region68: #{tpu_custom_call.1} parent=63 // pred_fallthru
          _
        // Predicated region
        $region69: #{tpu_custom_call.1} parent=63 // pred_check
          %p424 = pneg %p73
        $region70: #{tpu_custom_call.1} parent=63 // pred_check_branch
          %426 = sbr.rel (%p424) target = $region72
        $region71: #{tpu_custom_call.1} parent=63 // pred_region
          %428 = dma.done [#allocation6], 3072
        $region72: #{tpu_custom_call.1} parent=63 // pred_fallthru
          _
        // Predicated region
        $region73: #{tpu_custom_call.1} parent=63 // pred_check
          %p429 = pneg %p94
        $region74: #{tpu_custom_call.1} parent=63 // pred_check_branch
          %431 = sbr.rel (%p429) target = $region76
        $region75: #{tpu_custom_call.1} parent=63 // pred_region
          %433 = dma.done [#allocation6], 48
        $region76: #{tpu_custom_call.1} parent=63 // pred_fallthru
          _
        // Predicated region
        $region77: #{tpu_custom_call.1} parent=63 // pred_check
          %p434 = pneg %p136
        $region78: #{tpu_custom_call.1} parent=63 // pred_check_branch
          %436 = sbr.rel (%p434) target = $region80
        $region79: #{tpu_custom_call.1} parent=63 // pred_region
          %438 = dma.done [#allocation9], 16
        $region80: #{tpu_custom_call.1} parent=63 // pred_fallthru
          _
        // Predicated region
        $region81: #{tpu_custom_call.1} parent=63 // pred_check
          %p439 = pneg %p157
        $region82: #{tpu_custom_call.1} parent=63 // pred_check_branch
          %441 = sbr.rel (%p439) target = $region84
        $region83: #{tpu_custom_call.1} parent=63 // pred_region
          %443 = dma.done [#allocation9], 4096
        $region84: #{tpu_custom_call.1} parent=63 // pred_fallthru
          _
        // Predicated region
        $region85: #{tpu_custom_call.1} parent=63 // pred_check
          %p444 = pneg %p199
        $region86: #{tpu_custom_call.1} parent=63 // pred_check_branch
          %446 = sbr.rel (%p444) target = $region88
        $region87: #{tpu_custom_call.1} parent=63 // pred_region
          %448 = dma.done [#allocation12], 4096
        $region88: #{tpu_custom_call.1} parent=63 // pred_fallthru
          _
        %s449 = sand.u32 %s39, 1
        %s450 = scalar_lea.sflag [#allocation3], %s449
        %s451 = sand.u32 %s39, 1
        %s452 = smul.addr %s451, 8
        %s453 = scalar_lea.vmem [#allocation2], %s452
        %p454 = pneg %p52
        %p455 = pneg %p49
        %p456 = pneg %p73
        %p457 = pneg %p70
        %p458 = pneg %p94
        %p459 = pneg %p91
        %p460 = pneg %p115
        %p461 = pneg %p112
        %p462 = pneg %p136
        %p463 = pneg %p133
        %p464 = pneg %p157
        %p465 = pneg %p154
        %p466 = pneg %p178
        %p467 = pneg %p175
        %p468 = pneg %p199
        %p469 = pneg %p196
        %p470 = pneg %p220
        %p471 = pneg %p217
        %p472 = pneg %p241
        %p473 = pneg %p238
        %p474 = pneg %p262
        %p475 = pneg %p259
        %p476 = pneg %p288
        %p477 = pneg %p285
        %s478 = sand.u32 %s275, 1
        %s479 = scalar_lea.sflag [#allocation4], %s478
        %s480 = sand.u32 %s275, 1
        %s481 = smul.addr %s480, 8
        %s482 = scalar_lea.vmem [#allocation13], %s481
        %v484 = vld [vmem:[%s418] sm:$0xff]
        %v485 = vpack.c.bf16 %v484, %v484
        %v486 = vld [vmem:[#allocation5] sm:$0xff]
        %v487 = vld [vmem:[#allocation5 + $0x8] sm:$0xf]
        %v488 = vld [vmem:[#allocation5 + $0xc] sm:$0xff]
        %v489 = vld [vmem:[#allocation5 + $0x14] sm:$0xf]
        %v490 = vld [vmem:[#allocation5 + $0x18] sm:$0xff]
        %v491 = vld [vmem:[#allocation5 + $0x20] sm:$0xf]
        %v492 = vld [vmem:[#allocation5 + $0x24] sm:$0xff]
        %v493 = vld [vmem:[#allocation5 + $0x2c] sm:$0xf]
        %v494 = vld [vmem:[#allocation5 + $0x30] sm:$0xff]
        %v495 = vld [vmem:[#allocation5 + $0x38] sm:$0xf]
        %v496 = vld [vmem:[#allocation5 + $0x3c] sm:$0xff]
        %v497 = vld [vmem:[#allocation5 + $0x44] sm:$0xf]
        %v498 = vld [vmem:[#allocation5 + $0x48] sm:$0xff]
        %v499 = vld [vmem:[#allocation5 + $0x50] sm:$0xf]
        %v500 = vld [vmem:[#allocation5 + $0x54] sm:$0xff]
        %v501 = vld [vmem:[#allocation5 + $0x5c] sm:$0xf]
        %v502 = vld [vmem:[#allocation5 + $0x60] sm:$0xff]
        %v503 = vld [vmem:[#allocation5 + $0x68] sm:$0xf]
        %v504 = vld [vmem:[#allocation5 + $0x6c] sm:$0xff]
        %v505 = vld [vmem:[#allocation5 + $0x74] sm:$0xf]
        %v506 = vld [vmem:[#allocation5 + $0x78] sm:$0xff]
        %v507 = vld [vmem:[#allocation5 + $0x80] sm:$0xf]
        %v508 = vld [vmem:[#allocation5 + $0x84] sm:$0xff]
        %v509 = vld [vmem:[#allocation5 + $0x8c] sm:$0xf]
        %v510 = vld [vmem:[#allocation5 + $0x90] sm:$0xff]
        %v511 = vld [vmem:[#allocation5 + $0x98] sm:$0xf]
        %v512 = vld [vmem:[#allocation5 + $0x9c] sm:$0xff]
        %v513 = vld [vmem:[#allocation5 + $0xa4] sm:$0xf]
        %v514 = vld [vmem:[#allocation5 + $0xa8] sm:$0xff]
        %v515 = vld [vmem:[#allocation5 + $0xb0] sm:$0xf]
        %v516 = vld [vmem:[#allocation5 + $0xb4] sm:$0xff]
        %v517 = vld [vmem:[#allocation5 + $0xbc] sm:$0xf]
        %v518 = vld [vmem:[#allocation7] sm:$0x7]
        %v520 = vperm.slane %v518, 0
        %v521 = vperm.slane %v518, 1
        %v522 = vperm.slane %v518, 2
        %v558 = vunpack.c.l.b16 %v486
        %v559 = vunpack.c.h.b16 %v486
        %v560 = vunpack.c.l.b16 %v487
        %v561 = vunpack.c.l.b16 %v488
        %v562 = vunpack.c.h.b16 %v488
        %v563 = vunpack.c.l.b16 %v489
        %v564 = vunpack.c.l.b16 %v490
        %v565 = vunpack.c.h.b16 %v490
        %v566 = vunpack.c.l.b16 %v491
        %v567 = vunpack.c.l.b16 %v492
        %v568 = vunpack.c.h.b16 %v492
        %v569 = vunpack.c.l.b16 %v493
        %v570 = vunpack.c.l.b16 %v494
        %v571 = vunpack.c.h.b16 %v494
        %v572 = vunpack.c.l.b16 %v495
        %v573 = vunpack.c.l.b16 %v496
        %v574 = vunpack.c.h.b16 %v496
        %v575 = vunpack.c.l.b16 %v497
        %v576 = vunpack.c.l.b16 %v498
        %v577 = vunpack.c.h.b16 %v498
        %v578 = vunpack.c.l.b16 %v499
        %v579 = vunpack.c.l.b16 %v500
        %v580 = vunpack.c.h.b16 %v500
        %v581 = vunpack.c.l.b16 %v501
        %v582 = vunpack.c.l.b16 %v502
        %v583 = vunpack.c.h.b16 %v502
        %v584 = vunpack.c.l.b16 %v503
        %v585 = vunpack.c.l.b16 %v504
        %v586 = vunpack.c.h.b16 %v504
        %v587 = vunpack.c.l.b16 %v505
        %v588 = vunpack.c.l.b16 %v506
        %v589 = vunpack.c.h.b16 %v506
        %v590 = vunpack.c.l.b16 %v507
        %v591 = vunpack.c.l.b16 %v508
        %v592 = vunpack.c.h.b16 %v508
        %v593 = vunpack.c.l.b16 %v509
        %v594 = vunpack.c.l.b16 %v510
        %v595 = vunpack.c.h.b16 %v510
        %v596 = vunpack.c.l.b16 %v511
        %v597 = vunpack.c.l.b16 %v512
        %v598 = vunpack.c.h.b16 %v512
        %v599 = vunpack.c.l.b16 %v513
        %v600 = vunpack.c.l.b16 %v514
        %v601 = vunpack.c.h.b16 %v514
        %v602 = vunpack.c.l.b16 %v515
        %v603 = vunpack.c.l.b16 %v516
        %v604 = vunpack.c.h.b16 %v516
        %v605 = vunpack.c.l.b16 %v517
        %v606 = vpack.c.b16 %v561, %v558
        %v607 = vpack.c.b16 %v562, %v559
        %v608 = vpack.c.b16 %v563, %v560
        %v609 = vpack.c.b16 %v567, %v564
        %v610 = vpack.c.b16 %v568, %v565
        %v611 = vpack.c.b16 %v569, %v566
        %v612 = vpack.c.b16 %v573, %v570
        %v613 = vpack.c.b16 %v574, %v571
        %v614 = vpack.c.b16 %v575, %v572
        %v615 = vpack.c.b16 %v579, %v576
        %v616 = vpack.c.b16 %v580, %v577
        %v617 = vpack.c.b16 %v581, %v578
        %v618 = vpack.c.b16 %v585, %v582
        %v619 = vpack.c.b16 %v586, %v583
        %v620 = vpack.c.b16 %v587, %v584
        %v621 = vpack.c.b16 %v591, %v588
        %v622 = vpack.c.b16 %v592, %v589
        %v623 = vpack.c.b16 %v593, %v590
        %v624 = vpack.c.b16 %v597, %v594
        %v625 = vpack.c.b16 %v598, %v595
        %v626 = vpack.c.b16 %v599, %v596
        %v627 = vpack.c.b16 %v603, %v600
        %v628 = vpack.c.b16 %v604, %v601
        %v629 = vpack.c.b16 %v605, %v602
        %654 = vmatpush.bf16.msra.mxu0 %v627
        %655 = vmatpush.bf16.msra.mxu0 %v624
        %656 = vmatpush.bf16.msra.mxu0 %v621
        %657 = vmatpush.bf16.msra.mxu0 %v618
        %658 = vmatpush.bf16.msra.mxu0 %v615
        %659 = vmatpush.bf16.msra.mxu0 %v612
        %660 = vmatpush.bf16.msra.mxu0 %v609
        %661 = vmatpush.bf16.msra.mxu0 %v606
        %662 = vmatmul.bf16.gmra.mxu0 %v485
        %v663 = vpop.f32.mrf.mxu0
        %v664 = vadd.f32 %v520, %v663
        %v665 = vpop.f32.mrf.mxu0
        %666 = vdwg.mxu0
        %667 = vmatpush.bf16.msra.mxu0 %v628
        %668 = vmatpush.bf16.msra.mxu0 %v625
        %669 = vmatpush.bf16.msra.mxu0 %v622
        %670 = vmatpush.bf16.msra.mxu0 %v619
        %671 = vmatpush.bf16.msra.mxu0 %v616
        %672 = vmatpush.bf16.msra.mxu0 %v613
        %673 = vmatpush.bf16.msra.mxu0 %v610
        %674 = vmatpush.bf16.msra.mxu0 %v607
        %675 = vmatmul.bf16.gmra.mxu0 %v485
        %v676 = vpop.f32.mrf.mxu0
        %v677 = vadd.f32 %v521, %v676
        %v678 = vpop.f32.mrf.mxu0
        %679 = vdwg.mxu0
        %680 = vmatpush.bf16.msra.mxu0 %v629
        %681 = vmatpush.bf16.msra.mxu0 %v626
        %682 = vmatpush.bf16.msra.mxu0 %v623
        %683 = vmatpush.bf16.msra.mxu0 %v620
        %684 = vmatpush.bf16.msra.mxu0 %v617
        %685 = vmatpush.bf16.msra.mxu0 %v614
        %686 = vmatpush.bf16.msra.mxu0 %v611
        %687 = vmatpush.bf16.msra.mxu0 %v608
        %688 = vmatmul.bf16.gmra.mxu0 %v485
        %v689 = vpop.f32.mrf.mxu0
        %v690 = vadd.f32 %v522, %v689
        %v691 = vpop.f32.mrf.mxu0
        %692 = vdwg.mxu0
        %694 = vrot.lane.b32.xlu0 %v664, 96
        %v695 = vpop.permute.xlu0 %694
        %697 = vrot.lane.b32.xlu0 %v664, 64
        %v698 = vpop.permute.xlu0 %697
        %700 = vrot.lane.b32.xlu0 %v664, 32
        %v701 = vpop.permute.xlu0 %700
        %v703 = vrot.slane %v698, 4
        %vm704 = vcmask 1047556
        %v705 = vsel %vm704, %v703, %v664
        %v706 = vrot.slane %v664, 4
        %v707 = vsel %vm704, %v698, %v706
        %v709 = vunpack.c.l.s4 1983009808
        %v710 = vunpack.c.0.s8 %v709
        %v711 = vperm.slane %v705, %v710
        %v713 = vunpack.c.l.s4 1983009808
        %v714 = vunpack.c.0.s8 %v713
        %v715 = vperm.slane %v707, %v714
        %v716 = vrot.slane %v701, 4
        %v717 = vsel %vm704, %v716, %v695
        %v718 = vrot.slane %v695, 4
        %v719 = vsel %vm704, %v701, %v718
        %v721 = vunpack.c.l.s4 1983009808
        %v722 = vunpack.c.0.s8 %v721
        %v723 = vperm.slane %v717, %v722
        %v725 = vunpack.c.l.s4 1983009808
        %v726 = vunpack.c.0.s8 %v725
        %v727 = vperm.slane %v719, %v726
        %v728 = vrot.slane %v723, 4
        %v729 = vsel %vm704, %v728, %v711
        %v730 = vrot.slane %v711, 4
        %v731 = vsel %vm704, %v723, %v730
        %v733 = vunpack.c.l.s4 1934713408
        %v734 = vunpack.c.0.s8 %v733
        %v735 = vperm.slane %v729, %v734
        %v737 = vunpack.c.l.s4 1934713408
        %v738 = vunpack.c.0.s8 %v737
        %v739 = vperm.slane %v731, %v738
        %v740 = vrot.slane %v727, 4
        %v741 = vsel %vm704, %v740, %v715
        %v742 = vrot.slane %v715, 4
        %v743 = vsel %vm704, %v727, %v742
        %v745 = vunpack.c.l.s4 1934713408
        %v746 = vunpack.c.0.s8 %v745
        %v747 = vperm.slane %v741, %v746
        %v749 = vunpack.c.l.s4 1934713408
        %v750 = vunpack.c.0.s8 %v749
        %v751 = vperm.slane %v743, %v750
        %v752 = vrot.slane %v735, 4
        %v753 = vsel %vm704, 0.0, %v752
        %v754 = vrot.slane %v739, 4
        %v755 = vsel %vm704, 0.0, %v754
        %v756 = vrot.slane %v747, 4
        %v757 = vsel %vm704, 0.0, %v756
        %v758 = vrot.slane %v751, 4
        %v759 = vsel %vm704, 0.0, %v758
        %v760 = vsel %vm704, %v754, %v735
        %v762 = vunpack.c.l.s4 1983009808
        %v763 = vunpack.c.0.s8 %v762
        %v764 = vperm.slane %v760, %v763
        %v765 = vrot.slane %v755, 4
        %v766 = vsel %vm704, %v765, %v753
        %v768 = vunpack.c.l.s4 1983009808
        %v769 = vunpack.c.0.s8 %v768
        %v770 = vperm.slane %v766, %v769
        %v771 = vsel %vm704, %v758, %v747
        %v773 = vunpack.c.l.s4 1983009808
        %v774 = vunpack.c.0.s8 %v773
        %v775 = vperm.slane %v771, %v774
        %v776 = vrot.slane %v759, 4
        %v777 = vsel %vm704, %v776, %v757
        %v779 = vunpack.c.l.s4 1983009808
        %v780 = vunpack.c.0.s8 %v779
        %v781 = vperm.slane %v777, %v780
        %v782 = vrot.slane %v770, 4
        %v783 = vsel %vm704, %v782, %v764
        %v784 = vrot.slane %v764, 4
        %v785 = vsel %vm704, %v770, %v784
        %v787 = vunpack.c.l.s4 1934713408
        %v788 = vunpack.c.0.s8 %v787
        %v789 = vperm.slane %v783, %v788
        %v791 = vunpack.c.l.s4 1934713408
        %v792 = vunpack.c.0.s8 %v791
        %v793 = vperm.slane %v785, %v792
        %v794 = vrot.slane %v781, 4
        %v795 = vsel %vm704, %v794, %v775
        %v796 = vrot.slane %v775, 4
        %v797 = vsel %vm704, %v781, %v796
        %v799 = vunpack.c.l.s4 1934713408
        %v800 = vunpack.c.0.s8 %v799
        %v801 = vperm.slane %v795, %v800
        %v803 = vunpack.c.l.s4 1934713408
        %v804 = vunpack.c.0.s8 %v803
        %v805 = vperm.slane %v797, %v804
        %v806 = vrot.slane %v801, 4
        %v807 = vsel %vm704, %v806, %v789
        %v808 = vrot.slane %v789, 4
        %v809 = vsel %vm704, %v801, %v808
        %v810 = vrot.slane %v805, 4
        %v811 = vsel %vm704, %v810, %v793
        %v812 = vrot.slane %v793, 4
        %v813 = vsel %vm704, %v805, %v812
        %v814 = vpack.c.bf16 %v807, %v807
        %v815 = vpack.c.bf16 %v809, %v809
        %v816 = vpack.c.bf16 %v811, %v811
        %v817 = vpack.c.bf16 %v813, %v813
        %819 = vrot.lane.b32.xlu0 %v677, 96
        %v820 = vpop.permute.xlu0 %819
        %822 = vrot.lane.b32.xlu0 %v677, 64
        %v823 = vpop.permute.xlu0 %822
        %825 = vrot.lane.b32.xlu0 %v677, 32
        %v826 = vpop.permute.xlu0 %825
        %v828 = vrot.slane %v823, 4
        %v829 = vsel %vm704, %v828, %v677
        %v830 = vrot.slane %v677, 4
        %v831 = vsel %vm704, %v823, %v830
        %v833 = vunpack.c.l.s4 1983009808
        %v834 = vunpack.c.0.s8 %v833
        %v835 = vperm.slane %v829, %v834
        %v837 = vunpack.c.l.s4 1983009808
        %v838 = vunpack.c.0.s8 %v837
        %v839 = vperm.slane %v831, %v838
        %v840 = vrot.slane %v826, 4
        %v841 = vsel %vm704, %v840, %v820
        %v842 = vrot.slane %v820, 4
        %v843 = vsel %vm704, %v826, %v842
        %v845 = vunpack.c.l.s4 1983009808
        %v846 = vunpack.c.0.s8 %v845
        %v847 = vperm.slane %v841, %v846
        %v849 = vunpack.c.l.s4 1983009808
        %v850 = vunpack.c.0.s8 %v849
        %v851 = vperm.slane %v843, %v850
        %v852 = vrot.slane %v847, 4
        %v853 = vsel %vm704, %v852, %v835
        %v854 = vrot.slane %v835, 4
        %v855 = vsel %vm704, %v847, %v854
        %v857 = vunpack.c.l.s4 1934713408
        %v858 = vunpack.c.0.s8 %v857
        %v859 = vperm.slane %v853, %v858
        %v861 = vunpack.c.l.s4 1934713408
        %v862 = vunpack.c.0.s8 %v861
        %v863 = vperm.slane %v855, %v862
        %v864 = vrot.slane %v851, 4
        %v865 = vsel %vm704, %v864, %v839
        %v866 = vrot.slane %v839, 4
        %v867 = vsel %vm704, %v851, %v866
        %v869 = vunpack.c.l.s4 1934713408
        %v870 = vunpack.c.0.s8 %v869
        %v871 = vperm.slane %v865, %v870
        %v873 = vunpack.c.l.s4 1934713408
        %v874 = vunpack.c.0.s8 %v873
        %v875 = vperm.slane %v867, %v874
        %v876 = vrot.slane %v859, 4
        %v877 = vsel %vm704, 0.0, %v876
        %v878 = vrot.slane %v863, 4
        %v879 = vsel %vm704, 0.0, %v878
        %v880 = vrot.slane %v871, 4
        %v881 = vsel %vm704, 0.0, %v880
        %v882 = vrot.slane %v875, 4
        %v883 = vsel %vm704, 0.0, %v882
        %v884 = vsel %vm704, %v878, %v859
        %v886 = vunpack.c.l.s4 1983009808
        %v887 = vunpack.c.0.s8 %v886
        %v888 = vperm.slane %v884, %v887
        %v889 = vrot.slane %v879, 4
        %v890 = vsel %vm704, %v889, %v877
        %v892 = vunpack.c.l.s4 1983009808
        %v893 = vunpack.c.0.s8 %v892
        %v894 = vperm.slane %v890, %v893
        %v895 = vsel %vm704, %v882, %v871
        %v897 = vunpack.c.l.s4 1983009808
        %v898 = vunpack.c.0.s8 %v897
        %v899 = vperm.slane %v895, %v898
        %v900 = vrot.slane %v883, 4
        %v901 = vsel %vm704, %v900, %v881
        %v903 = vunpack.c.l.s4 1983009808
        %v904 = vunpack.c.0.s8 %v903
        %v905 = vperm.slane %v901, %v904
        %v906 = vrot.slane %v894, 4
        %v907 = vsel %vm704, %v906, %v888
        %v908 = vrot.slane %v888, 4
        %v909 = vsel %vm704, %v894, %v908
        %v911 = vunpack.c.l.s4 1934713408
        %v912 = vunpack.c.0.s8 %v911
        %v913 = vperm.slane %v907, %v912
        %v915 = vunpack.c.l.s4 1934713408
        %v916 = vunpack.c.0.s8 %v915
        %v917 = vperm.slane %v909, %v916
        %v918 = vrot.slane %v905, 4
        %v919 = vsel %vm704, %v918, %v899
        %v920 = vrot.slane %v899, 4
        %v921 = vsel %vm704, %v905, %v920
        %v923 = vunpack.c.l.s4 1934713408
        %v924 = vunpack.c.0.s8 %v923
        %v925 = vperm.slane %v919, %v924
        %v927 = vunpack.c.l.s4 1934713408
        %v928 = vunpack.c.0.s8 %v927
        %v929 = vperm.slane %v921, %v928
        %v930 = vrot.slane %v925, 4
        %v931 = vsel %vm704, %v930, %v913
        %v932 = vrot.slane %v913, 4
        %v933 = vsel %vm704, %v925, %v932
        %v934 = vrot.slane %v929, 4
        %v935 = vsel %vm704, %v934, %v917
        %v936 = vrot.slane %v917, 4
        %v937 = vsel %vm704, %v929, %v936
        %v938 = vpack.c.bf16 %v931, %v931
        %v939 = vpack.c.bf16 %v933, %v933
        %v940 = vpack.c.bf16 %v935, %v935
        %v941 = vpack.c.bf16 %v937, %v937
        %943 = vrot.lane.b32.xlu0 %v690, 96
        %v944 = vpop.permute.xlu0 %943
        %946 = vrot.lane.b32.xlu0 %v690, 64
        %v947 = vpop.permute.xlu0 %946
        %949 = vrot.lane.b32.xlu0 %v690, 32
        %v950 = vpop.permute.xlu0 %949
        %v952 = vrot.slane %v947, 4
        %v953 = vsel %vm704, %v952, %v690
        %v954 = vrot.slane %v690, 4
        %v955 = vsel %vm704, %v947, %v954
        %v957 = vunpack.c.l.s4 1983009808
        %v958 = vunpack.c.0.s8 %v957
        %v959 = vperm.slane %v953, %v958
        %v961 = vunpack.c.l.s4 1983009808
        %v962 = vunpack.c.0.s8 %v961
        %v963 = vperm.slane %v955, %v962
        %v964 = vrot.slane %v950, 4
        %v965 = vsel %vm704, %v964, %v944
        %v966 = vrot.slane %v944, 4
        %v967 = vsel %vm704, %v950, %v966
        %v969 = vunpack.c.l.s4 1983009808
        %v970 = vunpack.c.0.s8 %v969
        %v971 = vperm.slane %v965, %v970
        %v973 = vunpack.c.l.s4 1983009808
        %v974 = vunpack.c.0.s8 %v973
        %v975 = vperm.slane %v967, %v974
        %v976 = vrot.slane %v971, 4
        %v977 = vsel %vm704, %v976, %v959
        %v978 = vrot.slane %v959, 4
        %v979 = vsel %vm704, %v971, %v978
        %v981 = vunpack.c.l.s4 1934713408
        %v982 = vunpack.c.0.s8 %v981
        %v983 = vperm.slane %v977, %v982
        %v985 = vunpack.c.l.s4 1934713408
        %v986 = vunpack.c.0.s8 %v985
        %v987 = vperm.slane %v979, %v986
        %v988 = vrot.slane %v975, 4
        %v989 = vsel %vm704, %v988, %v963
        %v990 = vrot.slane %v963, 4
        %v991 = vsel %vm704, %v975, %v990
        %v993 = vunpack.c.l.s4 1934713408
        %v994 = vunpack.c.0.s8 %v993
        %v995 = vperm.slane %v989, %v994
        %v997 = vunpack.c.l.s4 1934713408
        %v998 = vunpack.c.0.s8 %v997
        %v999 = vperm.slane %v991, %v998
        %v1000 = vrot.slane %v983, 4
        %v1001 = vsel %vm704, 0.0, %v1000
        %v1002 = vrot.slane %v987, 4
        %v1003 = vsel %vm704, 0.0, %v1002
        %v1004 = vrot.slane %v995, 4
        %v1005 = vsel %vm704, 0.0, %v1004
        %v1006 = vrot.slane %v999, 4
        %v1007 = vsel %vm704, 0.0, %v1006
        %v1008 = vsel %vm704, %v1002, %v983
        %v1010 = vunpack.c.l.s4 1983009808
        %v1011 = vunpack.c.0.s8 %v1010
        %v1012 = vperm.slane %v1008, %v1011
        %v1013 = vrot.slane %v1003, 4
        %v1014 = vsel %vm704, %v1013, %v1001
        %v1016 = vunpack.c.l.s4 1983009808
        %v1017 = vunpack.c.0.s8 %v1016
        %v1018 = vperm.slane %v1014, %v1017
        %v1019 = vsel %vm704, %v1006, %v995
        %v1021 = vunpack.c.l.s4 1983009808
        %v1022 = vunpack.c.0.s8 %v1021
        %v1023 = vperm.slane %v1019, %v1022
        %v1024 = vrot.slane %v1007, 4
        %v1025 = vsel %vm704, %v1024, %v1005
        %v1027 = vunpack.c.l.s4 1983009808
        %v1028 = vunpack.c.0.s8 %v1027
        %v1029 = vperm.slane %v1025, %v1028
        %v1030 = vrot.slane %v1018, 4
        %v1031 = vsel %vm704, %v1030, %v1012
        %v1032 = vrot.slane %v1012, 4
        %v1033 = vsel %vm704, %v1018, %v1032
        %v1035 = vunpack.c.l.s4 1934713408
        %v1036 = vunpack.c.0.s8 %v1035
        %v1037 = vperm.slane %v1031, %v1036
        %v1039 = vunpack.c.l.s4 1934713408
        %v1040 = vunpack.c.0.s8 %v1039
        %v1041 = vperm.slane %v1033, %v1040
        %v1042 = vrot.slane %v1029, 4
        %v1043 = vsel %vm704, %v1042, %v1023
        %v1044 = vrot.slane %v1023, 4
        %v1045 = vsel %vm704, %v1029, %v1044
        %v1047 = vunpack.c.l.s4 1934713408
        %v1048 = vunpack.c.0.s8 %v1047
        %v1049 = vperm.slane %v1043, %v1048
        %v1051 = vunpack.c.l.s4 1934713408
        %v1052 = vunpack.c.0.s8 %v1051
        %v1053 = vperm.slane %v1045, %v1052
        %v1054 = vrot.slane %v1049, 4
        %v1055 = vsel %vm704, %v1054, %v1037
        %v1056 = vrot.slane %v1037, 4
        %v1057 = vsel %vm704, %v1049, %v1056
        %v1058 = vrot.slane %v1053, 4
        %v1059 = vsel %vm704, %v1058, %v1041
        %v1060 = vrot.slane %v1041, 4
        %v1061 = vsel %vm704, %v1053, %v1060
        %v1062 = vpack.c.bf16 %v1055, %v1055
        %v1063 = vpack.c.bf16 %v1057, %v1057
        %v1064 = vpack.c.bf16 %v1059, %v1059
        %v1065 = vpack.c.bf16 %v1061, %v1061
        %vm1066 = vcmask 261120
        %v1068 = vsel %vm1066, %v814, 0
        %v1071 = vsel %vm1066, %v938, 0
        %1073 = vmatpush.bf16.xpose.msra.mxu0 0
        %1074 = vmatpush.bf16.xpose.msra.mxu0 0
        %1075 = vmatpush.bf16.xpose.msra.mxu0 0
        %1076 = vmatpush.bf16.xpose.msra.mxu0 0
        %1077 = vmatpush.bf16.xpose.msra.mxu0 0
        %1078 = vmatpush.bf16.xpose.msra.mxu0 0
        %1079 = vmatpush.bf16.xpose.msra.mxu0 0
        %1080 = vmatpush.bf16.xpose.msra.mxu0 %v1071
        %1081 = vmatmul.bf16.gmra.mxu0 %v1068
        %v1082 = vpop.f32.mrf.mxu0
        %v1083 = vadd.f32 0.0, %v1082
        %v1084 = vpop.f32.mrf.mxu0
        %1085 = vdwg.mxu0
        %v1087 = vsel %vm1066, %v815, 0
        %v1090 = vsel %vm1066, %v939, 0
        %1092 = vmatpush.bf16.xpose.msra.mxu0 0
        %1093 = vmatpush.bf16.xpose.msra.mxu0 0
        %1094 = vmatpush.bf16.xpose.msra.mxu0 0
        %1095 = vmatpush.bf16.xpose.msra.mxu0 0
        %1096 = vmatpush.bf16.xpose.msra.mxu0 0
        %1097 = vmatpush.bf16.xpose.msra.mxu0 0
        %1098 = vmatpush.bf16.xpose.msra.mxu0 0
        %1099 = vmatpush.bf16.xpose.msra.mxu0 %v1090
        %1100 = vmatmul.bf16.gmra.mxu0 %v1087
        %v1101 = vpop.f32.mrf.mxu0
        %v1102 = vadd.f32 0.0, %v1101
        %v1103 = vpop.f32.mrf.mxu0
        %1104 = vdwg.mxu0
        %v1106 = vsel %vm1066, %v816, 0
        %v1109 = vsel %vm1066, %v940, 0
        %1111 = vmatpush.bf16.xpose.msra.mxu0 0
        %1112 = vmatpush.bf16.xpose.msra.mxu0 0
        %1113 = vmatpush.bf16.xpose.msra.mxu0 0
        %1114 = vmatpush.bf16.xpose.msra.mxu0 0
        %1115 = vmatpush.bf16.xpose.msra.mxu0 0
        %1116 = vmatpush.bf16.xpose.msra.mxu0 0
        %1117 = vmatpush.bf16.xpose.msra.mxu0 0
        %1118 = vmatpush.bf16.xpose.msra.mxu0 %v1109
        %1119 = vmatmul.bf16.gmra.mxu0 %v1106
        %v1120 = vpop.f32.mrf.mxu0
        %v1121 = vadd.f32 0.0, %v1120
        %v1122 = vpop.f32.mrf.mxu0
        %1123 = vdwg.mxu0
        %v1125 = vsel %vm1066, %v817, 0
        %v1128 = vsel %vm1066, %v941, 0
        %1130 = vmatpush.bf16.xpose.msra.mxu0 0
        %1131 = vmatpush.bf16.xpose.msra.mxu0 0
        %1132 = vmatpush.bf16.xpose.msra.mxu0 0
        %1133 = vmatpush.bf16.xpose.msra.mxu0 0
        %1134 = vmatpush.bf16.xpose.msra.mxu0 0
        %1135 = vmatpush.bf16.xpose.msra.mxu0 0
        %1136 = vmatpush.bf16.xpose.msra.mxu0 0
        %1137 = vmatpush.bf16.xpose.msra.mxu0 %v1128
        %1138 = vmatmul.bf16.gmra.mxu0 %v1125
        %v1139 = vpop.f32.mrf.mxu0
        %v1140 = vadd.f32 0.0, %v1139
        %v1141 = vpop.f32.mrf.mxu0
        %1142 = vdwg.mxu0
        %vm1143 = vcmask 64512
        %v1144 = vsel %vm1143, %v1083, -inf
        %1145 = vmax.xlane.f32.xlu0 %v1144
        %v1146 = vpop.xlane.xlu0 %1145
        %v1147 = vsel %vm1143, %v1102, -inf
        %1148 = vmax.xlane.f32.xlu0 %v1147
        %v1149 = vpop.xlane.xlu0 %1148
        %v1150 = vsel %vm1143, %v1121, -inf
        %1151 = vmax.xlane.f32.xlu0 %v1150
        %v1152 = vpop.xlane.xlu0 %1151
        %v1153 = vsel %vm1143, %v1140, -inf
        %1154 = vmax.xlane.f32.xlu0 %v1153
        %v1155 = vpop.xlane.xlu0 %1154
        %v1156 = vsub.f32 %v1083, %v1146
        %v1157 = vsub.f32 %v1102, %v1149
        %v1158 = vsub.f32 %v1121, %v1152
        %v1159 = vsub.f32 %v1140, %v1155
        %v1160 = vmul.f32 %v1156, 1.442695
        %v1161 = vpow.pop %v1160
        %v1162 = vmul.f32 %v1157, 1.442695
        %v1163 = vpow.pop %v1162
        %v1164 = vmul.f32 %v1158, 1.442695
        %v1165 = vpow.pop %v1164
        %v1166 = vmul.f32 %v1159, 1.442695
        %v1167 = vpow.pop %v1166
        %v1168 = vsel %vm1143, %v1161, 0.0
        %1169 = vadd.xlane.f32.xlu0 %v1168
        %v1170 = vpop.xlane.xlu0 %1169
        %v1171 = vsel %vm1143, %v1163, 0.0
        %1172 = vadd.xlane.f32.xlu0 %v1171
        %v1173 = vpop.xlane.xlu0 %1172
        %v1174 = vsel %vm1143, %v1165, 0.0
        %1175 = vadd.xlane.f32.xlu0 %v1174
        %v1176 = vpop.xlane.xlu0 %1175
        %v1177 = vsel %vm1143, %v1167, 0.0
        %1178 = vadd.xlane.f32.xlu0 %v1177
        %v1179 = vpop.xlane.xlu0 %1178
        %v1180 = vrcp.pop %v1170
        %v1181 = vrcp.pop %v1173
        %v1182 = vrcp.pop %v1176
        %v1183 = vrcp.pop %v1179
        %v1184 = vmul.f32 %v1161, %v1180
        %v1185 = vmul.f32 %v1163, %v1181
        %v1186 = vmul.f32 %v1165, %v1182
        %v1187 = vmul.f32 %v1167, %v1183
        %v1188 = vpack.c.bf16 %v1184, %v1184
        %v1189 = vpack.c.bf16 %v1185, %v1185
        %v1190 = vpack.c.bf16 %v1186, %v1186
        %v1191 = vpack.c.bf16 %v1187, %v1187
        %v1193 = vsel %vm1143, %v1188, 0
        %vm1195 = vcmask 1043456
        %v1197 = vsel %vm1195, %v1062, 0
        %1199 = vmatpush.bf16.msra.mxu0 0
        %1200 = vmatpush.bf16.msra.mxu0 0
        %1201 = vmatpush.bf16.msra.mxu0 0
        %1202 = vmatpush.bf16.msra.mxu0 0
        %1203 = vmatpush.bf16.msra.mxu0 0
        %1204 = vmatpush.bf16.msra.mxu0 0
        %1205 = vmatpush.bf16.msra.mxu0 0
        %1206 = vmatpush.bf16.msra.mxu0 %v1197
        %1207 = vmatmul.bf16.gmra.mxu0 %v1193
        %v1208 = vpop.f32.mrf.mxu0
        %v1209 = vadd.f32 0.0, %v1208
        %v1210 = vpop.f32.mrf.mxu0
        %1211 = vdwg.mxu0
        %v1213 = vsel %vm1143, %v1189, 0
        %v1216 = vsel %vm1195, %v1063, 0
        %1218 = vmatpush.bf16.msra.mxu0 0
        %1219 = vmatpush.bf16.msra.mxu0 0
        %1220 = vmatpush.bf16.msra.mxu0 0
        %1221 = vmatpush.bf16.msra.mxu0 0
        %1222 = vmatpush.bf16.msra.mxu0 0
        %1223 = vmatpush.bf16.msra.mxu0 0
        %1224 = vmatpush.bf16.msra.mxu0 0
        %1225 = vmatpush.bf16.msra.mxu0 %v1216
        %1226 = vmatmul.bf16.gmra.mxu0 %v1213
        %v1227 = vpop.f32.mrf.mxu0
        %v1228 = vadd.f32 0.0, %v1227
        %v1229 = vpop.f32.mrf.mxu0
        %1230 = vdwg.mxu0
        %v1232 = vsel %vm1143, %v1190, 0
        %v1235 = vsel %vm1195, %v1064, 0
        %1237 = vmatpush.bf16.msra.mxu0 0
        %1238 = vmatpush.bf16.msra.mxu0 0
        %1239 = vmatpush.bf16.msra.mxu0 0
        %1240 = vmatpush.bf16.msra.mxu0 0
        %1241 = vmatpush.bf16.msra.mxu0 0
        %1242 = vmatpush.bf16.msra.mxu0 0
        %1243 = vmatpush.bf16.msra.mxu0 0
        %1244 = vmatpush.bf16.msra.mxu0 %v1235
        %1245 = vmatmul.bf16.gmra.mxu0 %v1232
        %v1246 = vpop.f32.mrf.mxu0
        %v1247 = vadd.f32 0.0, %v1246
        %v1248 = vpop.f32.mrf.mxu0
        %1249 = vdwg.mxu0
        %v1251 = vsel %vm1143, %v1191, 0
        %v1254 = vsel %vm1195, %v1065, 0
        %1256 = vmatpush.bf16.msra.mxu0 0
        %1257 = vmatpush.bf16.msra.mxu0 0
        %1258 = vmatpush.bf16.msra.mxu0 0
        %1259 = vmatpush.bf16.msra.mxu0 0
        %1260 = vmatpush.bf16.msra.mxu0 0
        %1261 = vmatpush.bf16.msra.mxu0 0
        %1262 = vmatpush.bf16.msra.mxu0 0
        %1263 = vmatpush.bf16.msra.mxu0 %v1254
        %1264 = vmatmul.bf16.gmra.mxu0 %v1251
        %v1265 = vpop.f32.mrf.mxu0
        %v1266 = vadd.f32 0.0, %v1265
        %v1267 = vpop.f32.mrf.mxu0
        %1268 = vdwg.mxu0
        %v1269 = vrot.slane %v1247, 4
        %v1270 = vsel %vm704, %v1269, %v1209
        %v1271 = vrot.slane %v1209, 4
        %v1272 = vsel %vm704, %v1247, %v1271
        %v1274 = vunpack.c.l.s4 1983009808
        %v1275 = vunpack.c.0.s8 %v1274
        %v1276 = vperm.slane %v1270, %v1275
        %v1278 = vunpack.c.l.s4 1983009808
        %v1279 = vunpack.c.0.s8 %v1278
        %v1280 = vperm.slane %v1272, %v1279
        %v1281 = vrot.slane %v1266, 4
        %v1282 = vsel %vm704, %v1281, %v1228
        %v1283 = vrot.slane %v1228, 4
        %v1284 = vsel %vm704, %v1266, %v1283
        %v1286 = vunpack.c.l.s4 1983009808
        %v1287 = vunpack.c.0.s8 %v1286
        %v1288 = vperm.slane %v1282, %v1287
        %v1290 = vunpack.c.l.s4 1983009808
        %v1291 = vunpack.c.0.s8 %v1290
        %v1292 = vperm.slane %v1284, %v1291
        %v1293 = vrot.slane %v1288, 4
        %v1294 = vsel %vm704, %v1293, %v1276
        %v1295 = vrot.slane %v1276, 4
        %v1296 = vsel %vm704, %v1288, %v1295
        %v1298 = vunpack.c.l.s4 1934713408
        %v1299 = vunpack.c.0.s8 %v1298
        %v1300 = vperm.slane %v1294, %v1299
        %v1302 = vunpack.c.l.s4 1934713408
        %v1303 = vunpack.c.0.s8 %v1302
        %v1304 = vperm.slane %v1296, %v1303
        %v1305 = vrot.slane %v1292, 4
        %v1306 = vsel %vm704, %v1305, %v1280
        %v1307 = vrot.slane %v1280, 4
        %v1308 = vsel %vm704, %v1292, %v1307
        %v1310 = vunpack.c.l.s4 1934713408
        %v1311 = vunpack.c.0.s8 %v1310
        %v1312 = vperm.slane %v1306, %v1311
        %v1314 = vunpack.c.l.s4 1934713408
        %v1315 = vunpack.c.0.s8 %v1314
        %v1316 = vperm.slane %v1308, %v1315
        %v1317 = vrot.slane %v1300, 4
        %v1318 = vsel %vm704, 0.0, %v1317
        %v1319 = vrot.slane %v1304, 4
        %v1320 = vsel %vm704, 0.0, %v1319
        %v1321 = vrot.slane %v1312, 4
        %v1322 = vsel %vm704, 0.0, %v1321
        %v1323 = vrot.slane %v1316, 4
        %v1324 = vsel %vm704, 0.0, %v1323
        %v1325 = vsel %vm704, %v1319, %v1300
        %v1327 = vunpack.c.l.s4 1983009808
        %v1328 = vunpack.c.0.s8 %v1327
        %v1329 = vperm.slane %v1325, %v1328
        %v1330 = vrot.slane %v1320, 4
        %v1331 = vsel %vm704, %v1330, %v1318
        %v1333 = vunpack.c.l.s4 1983009808
        %v1334 = vunpack.c.0.s8 %v1333
        %v1335 = vperm.slane %v1331, %v1334
        %v1336 = vsel %vm704, %v1323, %v1312
        %v1338 = vunpack.c.l.s4 1983009808
        %v1339 = vunpack.c.0.s8 %v1338
        %v1340 = vperm.slane %v1336, %v1339
        %v1341 = vrot.slane %v1324, 4
        %v1342 = vsel %vm704, %v1341, %v1322
        %v1344 = vunpack.c.l.s4 1983009808
        %v1345 = vunpack.c.0.s8 %v1344
        %v1346 = vperm.slane %v1342, %v1345
        %v1347 = vrot.slane %v1335, 4
        %v1348 = vsel %vm704, %v1347, %v1329
        %v1349 = vrot.slane %v1329, 4
        %v1350 = vsel %vm704, %v1335, %v1349
        %v1352 = vunpack.c.l.s4 1934713408
        %v1353 = vunpack.c.0.s8 %v1352
        %v1354 = vperm.slane %v1348, %v1353
        %v1356 = vunpack.c.l.s4 1934713408
        %v1357 = vunpack.c.0.s8 %v1356
        %v1358 = vperm.slane %v1350, %v1357
        %v1359 = vrot.slane %v1346, 4
        %v1360 = vsel %vm704, %v1359, %v1340
        %v1361 = vrot.slane %v1340, 4
        %v1362 = vsel %vm704, %v1346, %v1361
        %v1364 = vunpack.c.l.s4 1934713408
        %v1365 = vunpack.c.0.s8 %v1364
        %v1366 = vperm.slane %v1360, %v1365
        %v1368 = vunpack.c.l.s4 1934713408
        %v1369 = vunpack.c.0.s8 %v1368
        %v1370 = vperm.slane %v1362, %v1369
        %v1371 = vrot.slane %v1366, 4
        %v1372 = vsel %vm704, %v1371, %v1354
        %v1373 = vrot.slane %v1354, 4
        %v1374 = vsel %vm704, %v1366, %v1373
        %v1375 = vrot.slane %v1370, 4
        %v1376 = vsel %vm704, %v1375, %v1358
        %v1377 = vrot.slane %v1358, 4
        %v1378 = vsel %vm704, %v1370, %v1377
        %1380 = vrot.lane.b32.xlu0 %v1374, 32
        %v1381 = vpop.permute.xlu0 %1380
        %1384 = vrot.lane.b32.xlu0 %v1376, 64
        %v1385 = vpop.permute.xlu0 %1384
        %1388 = vrot.lane.b32.xlu0 %v1378, 96
        %v1389 = vpop.permute.xlu0 %1388
        %v1391 = vsel %vm1066, %v1372, %v1381
        %vm1392 = vcmask 523264
        %v1393 = vsel %vm1392, %v1391, %v1385
        %vm1394 = vcmask 785408
        %v1395 = vsel %vm1394, %v1393, %v1389
        %v1396 = vadd.f32 %v484, %v1395
        %v1397 = vld [vmem:[%s3] sm:$0x1]
        %v1398 = vld [vmem:[#allocation8] sm:$0x1]
        %1399 = vadd.xlane.f32.xlu0 %v1396
        %v1400 = vpop.xlane.xlu0 %1399
        %v1401 = vrcp.pop 128.0
        %v1402 = vmul.f32 128.0, %v1401
        %v1403 = vsub.f32 1.0, %v1402
        %v1404 = vmul.f32 %v1401, %v1403
        %v1405 = vadd.f32 %v1401, %v1404
        %vm1406 = vweird.f32 %v1401
        %v1407 = vsel %vm1406, %v1401, %v1405
        %v1408 = vmul.f32 %v1400, %v1407
        %v1409 = vsub.f32 %v1396, %v1408
        %v1410 = vmul.f32 %v1409, %v1409
        %1411 = vadd.xlane.f32.xlu0 %v1410
        %v1412 = vpop.xlane.xlu0 %1411
        %v1413 = vmul.f32 %v1412, %v1407
        %v1414 = vadd.f32 %v1413, 1e-05
        %v1415 = vrsqrt.pop %v1414
        %v1416 = vmul.f32 %v1415, %v1414
        %v1417 = vmul.f32 %v1416, %v1415
        %v1418 = vmul.f32 0.5, %v1417
        %v1419 = vsub.f32 1.5, %v1418
        %v1420 = vmul.f32 %v1415, %v1419
        %vm1421 = vweird.f32 %v1414
        %vm1422 = vweird.f32 %v1415
        %vm1423 = vmor %vm1421, %vm1422
        %v1424 = vsel %vm1423, %v1415, %v1420
        %v1425 = vmul.f32 %v1409, %v1424
        %v1427 = vperm.slane %v1397, 0
        %v1429 = vmul.f32 %v1425, %v1427
        %v1431 = vperm.slane %v1398, 0
        %v1433 = vadd.f32 %v1429, %v1431
        %v1434 = vpack.c.bf16 %v1433, %v1433
        %v1435 = vld [vmem:[#allocation10] sm:$0xff]
        %v1436 = vld [vmem:[#allocation10 + $0x8] sm:$0xff]
        %v1437 = vld [vmem:[#allocation10 + $0x10] sm:$0xff]
        %v1438 = vld [vmem:[#allocation10 + $0x18] sm:$0xff]
        %v1439 = vld [vmem:[#allocation10 + $0x20] sm:$0xff]
        %v1440 = vld [vmem:[#allocation10 + $0x28] sm:$0xff]
        %v1441 = vld [vmem:[#allocation10 + $0x30] sm:$0xff]
        %v1442 = vld [vmem:[#allocation10 + $0x38] sm:$0xff]
        %v1443 = vld [vmem:[#allocation10 + $0x40] sm:$0xff]
        %v1444 = vld [vmem:[#allocation10 + $0x48] sm:$0xff]
        %v1445 = vld [vmem:[#allocation10 + $0x50] sm:$0xff]
        %v1446 = vld [vmem:[#allocation10 + $0x58] sm:$0xff]
        %v1447 = vld [vmem:[#allocation10 + $0x60] sm:$0xff]
        %v1448 = vld [vmem:[#allocation10 + $0x68] sm:$0xff]
        %v1449 = vld [vmem:[#allocation10 + $0x70] sm:$0xff]
        %v1450 = vld [vmem:[#allocation10 + $0x78] sm:$0xff]
        %v1451 = vld [vmem:[#allocation10 + $0x80] sm:$0xff]
        %v1452 = vld [vmem:[#allocation10 + $0x88] sm:$0xff]
        %v1453 = vld [vmem:[#allocation10 + $0x90] sm:$0xff]
        %v1454 = vld [vmem:[#allocation10 + $0x98] sm:$0xff]
        %v1455 = vld [vmem:[#allocation10 + $0xa0] sm:$0xff]
        %v1456 = vld [vmem:[#allocation10 + $0xa8] sm:$0xff]
        %v1457 = vld [vmem:[#allocation10 + $0xb0] sm:$0xff]
        %v1458 = vld [vmem:[#allocation10 + $0xb8] sm:$0xff]
        %v1459 = vld [vmem:[#allocation10 + $0xc0] sm:$0xff]
        %v1460 = vld [vmem:[#allocation10 + $0xc8] sm:$0xff]
        %v1461 = vld [vmem:[#allocation10 + $0xd0] sm:$0xff]
        %v1462 = vld [vmem:[#allocation10 + $0xd8] sm:$0xff]
        %v1463 = vld [vmem:[#allocation10 + $0xe0] sm:$0xff]
        %v1464 = vld [vmem:[#allocation10 + $0xe8] sm:$0xff]
        %v1465 = vld [vmem:[#allocation10 + $0xf0] sm:$0xff]
        %v1466 = vld [vmem:[#allocation10 + $0xf8] sm:$0xff]
        %v1467 = vld [vmem:[%s6] sm:$0xf]
        %v1469 = vperm.slane %v1467, 0
        %v1470 = vperm.slane %v1467, 1
        %v1471 = vperm.slane %v1467, 2
        %v1472 = vperm.slane %v1467, 3
        %v1509 = vunpack.c.l.b16 %v1435
        %v1510 = vunpack.c.h.b16 %v1435
        %v1511 = vunpack.c.l.b16 %v1436
        %v1512 = vunpack.c.h.b16 %v1436
        %v1513 = vunpack.c.l.b16 %v1437
        %v1514 = vunpack.c.h.b16 %v1437
        %v1515 = vunpack.c.l.b16 %v1438
        %v1516 = vunpack.c.h.b16 %v1438
        %v1517 = vunpack.c.l.b16 %v1439
        %v1518 = vunpack.c.h.b16 %v1439
        %v1519 = vunpack.c.l.b16 %v1440
        %v1520 = vunpack.c.h.b16 %v1440
        %v1521 = vunpack.c.l.b16 %v1441
        %v1522 = vunpack.c.h.b16 %v1441
        %v1523 = vunpack.c.l.b16 %v1442
        %v1524 = vunpack.c.h.b16 %v1442
        %v1525 = vunpack.c.l.b16 %v1443
        %v1526 = vunpack.c.h.b16 %v1443
        %v1527 = vunpack.c.l.b16 %v1444
        %v1528 = vunpack.c.h.b16 %v1444
        %v1529 = vunpack.c.l.b16 %v1445
        %v1530 = vunpack.c.h.b16 %v1445
        %v1531 = vunpack.c.l.b16 %v1446
        %v1532 = vunpack.c.h.b16 %v1446
        %v1533 = vunpack.c.l.b16 %v1447
        %v1534 = vunpack.c.h.b16 %v1447
        %v1535 = vunpack.c.l.b16 %v1448
        %v1536 = vunpack.c.h.b16 %v1448
        %v1537 = vunpack.c.l.b16 %v1449
        %v1538 = vunpack.c.h.b16 %v1449
        %v1539 = vunpack.c.l.b16 %v1450
        %v1540 = vunpack.c.h.b16 %v1450
        %v1541 = vunpack.c.l.b16 %v1451
        %v1542 = vunpack.c.h.b16 %v1451
        %v1543 = vunpack.c.l.b16 %v1452
        %v1544 = vunpack.c.h.b16 %v1452
        %v1545 = vunpack.c.l.b16 %v1453
        %v1546 = vunpack.c.h.b16 %v1453
        %v1547 = vunpack.c.l.b16 %v1454
        %v1548 = vunpack.c.h.b16 %v1454
        %v1549 = vunpack.c.l.b16 %v1455
        %v1550 = vunpack.c.h.b16 %v1455
        %v1551 = vunpack.c.l.b16 %v1456
        %v1552 = vunpack.c.h.b16 %v1456
        %v1553 = vunpack.c.l.b16 %v1457
        %v1554 = vunpack.c.h.b16 %v1457
        %v1555 = vunpack.c.l.b16 %v1458
        %v1556 = vunpack.c.h.b16 %v1458
        %v1557 = vunpack.c.l.b16 %v1459
        %v1558 = vunpack.c.h.b16 %v1459
        %v1559 = vunpack.c.l.b16 %v1460
        %v1560 = vunpack.c.h.b16 %v1460
        %v1561 = vunpack.c.l.b16 %v1461
        %v1562 = vunpack.c.h.b16 %v1461
        %v1563 = vunpack.c.l.b16 %v1462
        %v1564 = vunpack.c.h.b16 %v1462
        %v1565 = vunpack.c.l.b16 %v1463
        %v1566 = vunpack.c.h.b16 %v1463
        %v1567 = vunpack.c.l.b16 %v1464
        %v1568 = vunpack.c.h.b16 %v1464
        %v1569 = vunpack.c.l.b16 %v1465
        %v1570 = vunpack.c.h.b16 %v1465
        %v1571 = vunpack.c.l.b16 %v1466
        %v1572 = vunpack.c.h.b16 %v1466
        %v1573 = vpack.c.b16 %v1513, %v1509
        %v1574 = vpack.c.b16 %v1514, %v1510
        %v1575 = vpack.c.b16 %v1515, %v1511
        %v1576 = vpack.c.b16 %v1516, %v1512
        %v1577 = vpack.c.b16 %v1521, %v1517
        %v1578 = vpack.c.b16 %v1522, %v1518
        %v1579 = vpack.c.b16 %v1523, %v1519
        %v1580 = vpack.c.b16 %v1524, %v1520
        %v1581 = vpack.c.b16 %v1529, %v1525
        %v1582 = vpack.c.b16 %v1530, %v1526
        %v1583 = vpack.c.b16 %v1531, %v1527
        %v1584 = vpack.c.b16 %v1532, %v1528
        %v1585 = vpack.c.b16 %v1537, %v1533
        %v1586 = vpack.c.b16 %v1538, %v1534
        %v1587 = vpack.c.b16 %v1539, %v1535
        %v1588 = vpack.c.b16 %v1540, %v1536
        %v1589 = vpack.c.b16 %v1545, %v1541
        %v1590 = vpack.c.b16 %v1546, %v1542
        %v1591 = vpack.c.b16 %v1547, %v1543
        %v1592 = vpack.c.b16 %v1548, %v1544
        %v1593 = vpack.c.b16 %v1553, %v1549
        %v1594 = vpack.c.b16 %v1554, %v1550
        %v1595 = vpack.c.b16 %v1555, %v1551
        %v1596 = vpack.c.b16 %v1556, %v1552
        %v1597 = vpack.c.b16 %v1561, %v1557
        %v1598 = vpack.c.b16 %v1562, %v1558
        %v1599 = vpack.c.b16 %v1563, %v1559
        %v1600 = vpack.c.b16 %v1564, %v1560
        %v1601 = vpack.c.b16 %v1569, %v1565
        %v1602 = vpack.c.b16 %v1570, %v1566
        %v1603 = vpack.c.b16 %v1571, %v1567
        %v1604 = vpack.c.b16 %v1572, %v1568
        %1637 = vmatpush.bf16.msra.mxu0 %v1601
        %1638 = vmatpush.bf16.msra.mxu0 %v1597
        %1639 = vmatpush.bf16.msra.mxu0 %v1593
        %1640 = vmatpush.bf16.msra.mxu0 %v1589
        %1641 = vmatpush.bf16.msra.mxu0 %v1585
        %1642 = vmatpush.bf16.msra.mxu0 %v1581
        %1643 = vmatpush.bf16.msra.mxu0 %v1577
        %1644 = vmatpush.bf16.msra.mxu0 %v1573
        %1645 = vmatmul.bf16.gmra.mxu0 %v1434
        %v1646 = vpop.f32.mrf.mxu0
        %v1647 = vadd.f32 %v1469, %v1646
        %v1648 = vpop.f32.mrf.mxu0
        %1649 = vdwg.mxu0
        %1650 = vmatpush.bf16.msra.mxu0 %v1602
        %1651 = vmatpush.bf16.msra.mxu0 %v1598
        %1652 = vmatpush.bf16.msra.mxu0 %v1594
        %1653 = vmatpush.bf16.msra.mxu0 %v1590
        %1654 = vmatpush.bf16.msra.mxu0 %v1586
        %1655 = vmatpush.bf16.msra.mxu0 %v1582
        %1656 = vmatpush.bf16.msra.mxu0 %v1578
        %1657 = vmatpush.bf16.msra.mxu0 %v1574
        %1658 = vmatmul.bf16.gmra.mxu0 %v1434
        %v1659 = vpop.f32.mrf.mxu0
        %v1660 = vadd.f32 %v1470, %v1659
        %v1661 = vpop.f32.mrf.mxu0
        %1662 = vdwg.mxu0
        %1663 = vmatpush.bf16.msra.mxu0 %v1603
        %1664 = vmatpush.bf16.msra.mxu0 %v1599
        %1665 = vmatpush.bf16.msra.mxu0 %v1595
        %1666 = vmatpush.bf16.msra.mxu0 %v1591
        %1667 = vmatpush.bf16.msra.mxu0 %v1587
        %1668 = vmatpush.bf16.msra.mxu0 %v1583
        %1669 = vmatpush.bf16.msra.mxu0 %v1579
        %1670 = vmatpush.bf16.msra.mxu0 %v1575
        %1671 = vmatmul.bf16.gmra.mxu0 %v1434
        %v1672 = vpop.f32.mrf.mxu0
        %v1673 = vadd.f32 %v1471, %v1672
        %v1674 = vpop.f32.mrf.mxu0
        %1675 = vdwg.mxu0
        %1676 = vmatpush.bf16.msra.mxu0 %v1604
        %1677 = vmatpush.bf16.msra.mxu0 %v1600
        %1678 = vmatpush.bf16.msra.mxu0 %v1596
        %1679 = vmatpush.bf16.msra.mxu0 %v1592
        %1680 = vmatpush.bf16.msra.mxu0 %v1588
        %1681 = vmatpush.bf16.msra.mxu0 %v1584
        %1682 = vmatpush.bf16.msra.mxu0 %v1580
        %1683 = vmatpush.bf16.msra.mxu0 %v1576
        %1684 = vmatmul.bf16.gmra.mxu0 %v1434
        %v1685 = vpop.f32.mrf.mxu0
        %v1686 = vadd.f32 %v1472, %v1685
        %v1687 = vpop.f32.mrf.mxu0
        %1688 = vdwg.mxu0
        %v1689 = vmax.f32 %v1647, 0.0
        %v1690 = vmax.f32 %v1660, 0.0
        %v1691 = vmax.f32 %v1673, 0.0
        %v1692 = vmax.f32 %v1686, 0.0
        %v1693 = vpack.c.bf16 %v1689, %v1689
        %v1694 = vpack.c.bf16 %v1690, %v1690
        %v1695 = vpack.c.bf16 %v1691, %v1691
        %v1696 = vpack.c.bf16 %v1692, %v1692
        %v1697 = vld [vmem:[#allocation11] sm:$0xf]
        %v1698 = vld [vmem:[#allocation11 + $0x4] sm:$0xf]
        %v1699 = vld [vmem:[#allocation11 + $0x8] sm:$0xf]
        %v1700 = vld [vmem:[#allocation11 + $0xc] sm:$0xf]
        %v1701 = vld [vmem:[#allocation11 + $0x10] sm:$0xf]
        %v1702 = vld [vmem:[#allocation11 + $0x14] sm:$0xf]
        %v1703 = vld [vmem:[#allocation11 + $0x18] sm:$0xf]
        %v1704 = vld [vmem:[#allocation11 + $0x1c] sm:$0xf]
        %v1705 = vld [vmem:[#allocation11 + $0x20] sm:$0xf]
        %v1706 = vld [vmem:[#allocation11 + $0x24] sm:$0xf]
        %v1707 = vld [vmem:[#allocation11 + $0x28] sm:$0xf]
        %v1708 = vld [vmem:[#allocation11 + $0x2c] sm:$0xf]
        %v1709 = vld [vmem:[#allocation11 + $0x30] sm:$0xf]
        %v1710 = vld [vmem:[#allocation11 + $0x34] sm:$0xf]
        %v1711 = vld [vmem:[#allocation11 + $0x38] sm:$0xf]
        %v1712 = vld [vmem:[#allocation11 + $0x3c] sm:$0xf]
        %v1713 = vld [vmem:[#allocation11 + $0x40] sm:$0xf]
        %v1714 = vld [vmem:[#allocation11 + $0x44] sm:$0xf]
        %v1715 = vld [vmem:[#allocation11 + $0x48] sm:$0xf]
        %v1716 = vld [vmem:[#allocation11 + $0x4c] sm:$0xf]
        %v1717 = vld [vmem:[#allocation11 + $0x50] sm:$0xf]
        %v1718 = vld [vmem:[#allocation11 + $0x54] sm:$0xf]
        %v1719 = vld [vmem:[#allocation11 + $0x58] sm:$0xf]
        %v1720 = vld [vmem:[#allocation11 + $0x5c] sm:$0xf]
        %v1721 = vld [vmem:[#allocation11 + $0x60] sm:$0xf]
        %v1722 = vld [vmem:[#allocation11 + $0x64] sm:$0xf]
        %v1723 = vld [vmem:[#allocation11 + $0x68] sm:$0xf]
        %v1724 = vld [vmem:[#allocation11 + $0x6c] sm:$0xf]
        %v1725 = vld [vmem:[#allocation11 + $0x70] sm:$0xf]
        %v1726 = vld [vmem:[#allocation11 + $0x74] sm:$0xf]
        %v1727 = vld [vmem:[#allocation11 + $0x78] sm:$0xf]
        %v1728 = vld [vmem:[#allocation11 + $0x7c] sm:$0xf]
        %v1729 = vld [vmem:[#allocation11 + $0x80] sm:$0xf]
        %v1730 = vld [vmem:[#allocation11 + $0x84] sm:$0xf]
        %v1731 = vld [vmem:[#allocation11 + $0x88] sm:$0xf]
        %v1732 = vld [vmem:[#allocation11 + $0x8c] sm:$0xf]
        %v1733 = vld [vmem:[#allocation11 + $0x90] sm:$0xf]
        %v1734 = vld [vmem:[#allocation11 + $0x94] sm:$0xf]
        %v1735 = vld [vmem:[#allocation11 + $0x98] sm:$0xf]
        %v1736 = vld [vmem:[#allocation11 + $0x9c] sm:$0xf]
        %v1737 = vld [vmem:[#allocation11 + $0xa0] sm:$0xf]
        %v1738 = vld [vmem:[#allocation11 + $0xa4] sm:$0xf]
        %v1739 = vld [vmem:[#allocation11 + $0xa8] sm:$0xf]
        %v1740 = vld [vmem:[#allocation11 + $0xac] sm:$0xf]
        %v1741 = vld [vmem:[#allocation11 + $0xb0] sm:$0xf]
        %v1742 = vld [vmem:[#allocation11 + $0xb4] sm:$0xf]
        %v1743 = vld [vmem:[#allocation11 + $0xb8] sm:$0xf]
        %v1744 = vld [vmem:[#allocation11 + $0xbc] sm:$0xf]
        %v1745 = vld [vmem:[#allocation11 + $0xc0] sm:$0xf]
        %v1746 = vld [vmem:[#allocation11 + $0xc4] sm:$0xf]
        %v1747 = vld [vmem:[#allocation11 + $0xc8] sm:$0xf]
        %v1748 = vld [vmem:[#allocation11 + $0xcc] sm:$0xf]
        %v1749 = vld [vmem:[#allocation11 + $0xd0] sm:$0xf]
        %v1750 = vld [vmem:[#allocation11 + $0xd4] sm:$0xf]
        %v1751 = vld [vmem:[#allocation11 + $0xd8] sm:$0xf]
        %v1752 = vld [vmem:[#allocation11 + $0xdc] sm:$0xf]
        %v1753 = vld [vmem:[#allocation11 + $0xe0] sm:$0xf]
        %v1754 = vld [vmem:[#allocation11 + $0xe4] sm:$0xf]
        %v1755 = vld [vmem:[#allocation11 + $0xe8] sm:$0xf]
        %v1756 = vld [vmem:[#allocation11 + $0xec] sm:$0xf]
        %v1757 = vld [vmem:[#allocation11 + $0xf0] sm:$0xf]
        %v1758 = vld [vmem:[#allocation11 + $0xf4] sm:$0xf]
        %v1759 = vld [vmem:[#allocation11 + $0xf8] sm:$0xf]
        %v1760 = vld [vmem:[#allocation11 + $0xfc] sm:$0xf]
        %v1761 = vld [vmem:[%s8] sm:$0x1]
        %v1763 = vperm.slane %v1761, 0
        %v1829 = vunpack.c.l.b16 %v1697
        %v1830 = vunpack.c.l.b16 %v1698
        %v1831 = vunpack.c.l.b16 %v1699
        %v1832 = vunpack.c.l.b16 %v1700
        %v1833 = vunpack.c.l.b16 %v1701
        %v1834 = vunpack.c.l.b16 %v1702
        %v1835 = vunpack.c.l.b16 %v1703
        %v1836 = vunpack.c.l.b16 %v1704
        %v1837 = vunpack.c.l.b16 %v1705
        %v1838 = vunpack.c.l.b16 %v1706
        %v1839 = vunpack.c.l.b16 %v1707
        %v1840 = vunpack.c.l.b16 %v1708
        %v1841 = vunpack.c.l.b16 %v1709
        %v1842 = vunpack.c.l.b16 %v1710
        %v1843 = vunpack.c.l.b16 %v1711
        %v1844 = vunpack.c.l.b16 %v1712
        %v1845 = vunpack.c.l.b16 %v1713
        %v1846 = vunpack.c.l.b16 %v1714
        %v1847 = vunpack.c.l.b16 %v1715
        %v1848 = vunpack.c.l.b16 %v1716
        %v1849 = vunpack.c.l.b16 %v1717
        %v1850 = vunpack.c.l.b16 %v1718
        %v1851 = vunpack.c.l.b16 %v1719
        %v1852 = vunpack.c.l.b16 %v1720
        %v1853 = vunpack.c.l.b16 %v1721
        %v1854 = vunpack.c.l.b16 %v1722
        %v1855 = vunpack.c.l.b16 %v1723
        %v1856 = vunpack.c.l.b16 %v1724
        %v1857 = vunpack.c.l.b16 %v1725
        %v1858 = vunpack.c.l.b16 %v1726
        %v1859 = vunpack.c.l.b16 %v1727
        %v1860 = vunpack.c.l.b16 %v1728
        %v1861 = vunpack.c.l.b16 %v1729
        %v1862 = vunpack.c.l.b16 %v1730
        %v1863 = vunpack.c.l.b16 %v1731
        %v1864 = vunpack.c.l.b16 %v1732
        %v1865 = vunpack.c.l.b16 %v1733
        %v1866 = vunpack.c.l.b16 %v1734
        %v1867 = vunpack.c.l.b16 %v1735
        %v1868 = vunpack.c.l.b16 %v1736
        %v1869 = vunpack.c.l.b16 %v1737
        %v1870 = vunpack.c.l.b16 %v1738
        %v1871 = vunpack.c.l.b16 %v1739
        %v1872 = vunpack.c.l.b16 %v1740
        %v1873 = vunpack.c.l.b16 %v1741
        %v1874 = vunpack.c.l.b16 %v1742
        %v1875 = vunpack.c.l.b16 %v1743
        %v1876 = vunpack.c.l.b16 %v1744
        %v1877 = vunpack.c.l.b16 %v1745
        %v1878 = vunpack.c.l.b16 %v1746
        %v1879 = vunpack.c.l.b16 %v1747
        %v1880 = vunpack.c.l.b16 %v1748
        %v1881 = vunpack.c.l.b16 %v1749
        %v1882 = vunpack.c.l.b16 %v1750
        %v1883 = vunpack.c.l.b16 %v1751
        %v1884 = vunpack.c.l.b16 %v1752
        %v1885 = vunpack.c.l.b16 %v1753
        %v1886 = vunpack.c.l.b16 %v1754
        %v1887 = vunpack.c.l.b16 %v1755
        %v1888 = vunpack.c.l.b16 %v1756
        %v1889 = vunpack.c.l.b16 %v1757
        %v1890 = vunpack.c.l.b16 %v1758
        %v1891 = vunpack.c.l.b16 %v1759
        %v1892 = vunpack.c.l.b16 %v1760
        %v1893 = vpack.c.b16 %v1830, %v1829
        %v1894 = vpack.c.b16 %v1832, %v1831
        %v1895 = vpack.c.b16 %v1834, %v1833
        %v1896 = vpack.c.b16 %v1836, %v1835
        %v1897 = vpack.c.b16 %v1838, %v1837
        %v1898 = vpack.c.b16 %v1840, %v1839
        %v1899 = vpack.c.b16 %v1842, %v1841
        %v1900 = vpack.c.b16 %v1844, %v1843
        %v1901 = vpack.c.b16 %v1846, %v1845
        %v1902 = vpack.c.b16 %v1848, %v1847
        %v1903 = vpack.c.b16 %v1850, %v1849
        %v1904 = vpack.c.b16 %v1852, %v1851
        %v1905 = vpack.c.b16 %v1854, %v1853
        %v1906 = vpack.c.b16 %v1856, %v1855
        %v1907 = vpack.c.b16 %v1858, %v1857
        %v1908 = vpack.c.b16 %v1860, %v1859
        %v1909 = vpack.c.b16 %v1862, %v1861
        %v1910 = vpack.c.b16 %v1864, %v1863
        %v1911 = vpack.c.b16 %v1866, %v1865
        %v1912 = vpack.c.b16 %v1868, %v1867
        %v1913 = vpack.c.b16 %v1870, %v1869
        %v1914 = vpack.c.b16 %v1872, %v1871
        %v1915 = vpack.c.b16 %v1874, %v1873
        %v1916 = vpack.c.b16 %v1876, %v1875
        %v1917 = vpack.c.b16 %v1878, %v1877
        %v1918 = vpack.c.b16 %v1880, %v1879
        %v1919 = vpack.c.b16 %v1882, %v1881
        %v1920 = vpack.c.b16 %v1884, %v1883
        %v1921 = vpack.c.b16 %v1886, %v1885
        %v1922 = vpack.c.b16 %v1888, %v1887
        %v1923 = vpack.c.b16 %v1890, %v1889
        %v1924 = vpack.c.b16 %v1892, %v1891
        %1957 = vmatpush.bf16.msra.mxu0 %v1900
        %1958 = vmatpush.bf16.msra.mxu0 %v1899
        %1959 = vmatpush.bf16.msra.mxu0 %v1898
        %1960 = vmatpush.bf16.msra.mxu0 %v1897
        %1961 = vmatpush.bf16.msra.mxu0 %v1896
        %1962 = vmatpush.bf16.msra.mxu0 %v1895
        %1963 = vmatpush.bf16.msra.mxu0 %v1894
        %1964 = vmatpush.bf16.msra.mxu0 %v1893
        %1965 = vmatmul.bf16.gmra.mxu0 %v1693
        %v1966 = vpop.f32.mrf.mxu0
        %v1967 = vadd.f32 %v1763, %v1966
        %v1968 = vpop.f32.mrf.mxu0
        %1969 = vdwg.mxu0
        %1970 = vmatpush.bf16.msra.mxu0 %v1908
        %1971 = vmatpush.bf16.msra.mxu0 %v1907
        %1972 = vmatpush.bf16.msra.mxu0 %v1906
        %1973 = vmatpush.bf16.msra.mxu0 %v1905
        %1974 = vmatpush.bf16.msra.mxu0 %v1904
        %1975 = vmatpush.bf16.msra.mxu0 %v1903
        %1976 = vmatpush.bf16.msra.mxu0 %v1902
        %1977 = vmatpush.bf16.msra.mxu0 %v1901
        %1978 = vmatmul.bf16.gmra.mxu0 %v1694
        %v1979 = vpop.f32.mrf.mxu0
        %v1980 = vadd.f32 %v1967, %v1979
        %v1981 = vpop.f32.mrf.mxu0
        %1982 = vdwg.mxu0
        %1983 = vmatpush.bf16.msra.mxu0 %v1916
        %1984 = vmatpush.bf16.msra.mxu0 %v1915
        %1985 = vmatpush.bf16.msra.mxu0 %v1914
        %1986 = vmatpush.bf16.msra.mxu0 %v1913
        %1987 = vmatpush.bf16.msra.mxu0 %v1912
        %1988 = vmatpush.bf16.msra.mxu0 %v1911
        %1989 = vmatpush.bf16.msra.mxu0 %v1910
        %1990 = vmatpush.bf16.msra.mxu0 %v1909
        %1991 = vmatmul.bf16.gmra.mxu0 %v1695
        %v1992 = vpop.f32.mrf.mxu0
        %v1993 = vadd.f32 %v1980, %v1992
        %v1994 = vpop.f32.mrf.mxu0
        %1995 = vdwg.mxu0
        %1996 = vmatpush.bf16.msra.mxu0 %v1924
        %1997 = vmatpush.bf16.msra.mxu0 %v1923
        %1998 = vmatpush.bf16.msra.mxu0 %v1922
        %1999 = vmatpush.bf16.msra.mxu0 %v1921
        %2000 = vmatpush.bf16.msra.mxu0 %v1920
        %2001 = vmatpush.bf16.msra.mxu0 %v1919
        %2002 = vmatpush.bf16.msra.mxu0 %v1918
        %2003 = vmatpush.bf16.msra.mxu0 %v1917
        %2004 = vmatmul.bf16.gmra.mxu0 %v1696
        %v2005 = vpop.f32.mrf.mxu0
        %v2006 = vadd.f32 %v1993, %v2005
        %v2007 = vpop.f32.mrf.mxu0
        %2008 = vdwg.mxu0
        %v2009 = vadd.f32 %v1433, %v2006
        %v2010 = vld [vmem:[%s9] sm:$0x1]
        %v2011 = vld [vmem:[%s10] sm:$0x1]
        %2012 = vadd.xlane.f32.xlu0 %v2009
        %v2013 = vpop.xlane.xlu0 %2012
        %v2014 = vmul.f32 %v2013, %v1407
        %v2015 = vsub.f32 %v2009, %v2014
        %v2016 = vmul.f32 %v2015, %v2015
        %2017 = vadd.xlane.f32.xlu0 %v2016
        %v2018 = vpop.xlane.xlu0 %2017
        %v2019 = vmul.f32 %v2018, %v1407
        %v2020 = vadd.f32 %v2019, 1e-05
        %v2021 = vrsqrt.pop %v2020
        %v2022 = vmul.f32 %v2021, %v2020
        %v2023 = vmul.f32 %v2022, %v2021
        %v2024 = vmul.f32 0.5, %v2023
        %v2025 = vsub.f32 1.5, %v2024
        %v2026 = vmul.f32 %v2021, %v2025
        %vm2027 = vweird.f32 %v2020
        %vm2028 = vweird.f32 %v2021
        %vm2029 = vmor %vm2027, %vm2028
        %v2030 = vsel %vm2029, %v2021, %v2026
        %v2031 = vmul.f32 %v2015, %v2030
        %v2033 = vperm.slane %v2010, 0
        %v2035 = vmul.f32 %v2031, %v2033
        %v2037 = vperm.slane %v2011, 0
        %v2039 = vadd.f32 %v2035, %v2037
        %2040 = vst [vmem:[%s482] sm:$0xff] %v2039
        %s2041 = sand.u32 %s275, 1
        %s2042 = scalar_lea.sflag [#allocation4], %s2041
        %s2043 = sand.u32 %s275, 1
        %s2044 = smul.addr %s2043, 8
        %s2045 = scalar_lea.vmem [#allocation13], %s2044
        // Predicated region
        $region89: #{tpu_custom_call.1} parent=63 // pred_check
          %p2046 = pneg %p285
        $region90: #{tpu_custom_call.1} parent=63 // pred_check_branch
          %2048 = sbr.rel (%p2046) target = $region92
        $region91: #{tpu_custom_call.1} parent=63 // pred_region
          %2050 = vsyncadd %s2042, 0
          %s2051 = smul.addr %s31, 8
          %s2052 = scalar_lea.hbm %s11, %s2051
          %s2054 = sshll.u32 %s2045, 4
          %s2055 = int_to_ptr.vmem [resolvable:$true] %s2054
          %s2056 = sshll.u32 %s2052, 4
          %s2057 = int_to_ptr.hbm [resolvable:$true] %s2056
          %2059 = dma.vmem_to_hbm [thread:$0]  %s2055, 128, %s2057, %s2042
        $region92: #{tpu_custom_call.1} parent=63 // pred_fallthru
          _
      $region64: #{tpu_custom_call.1} parent=5 // pred_fallthru
        _
      %p2060 = scmp.le.s32.totalorder 2, %s26
      // Predicated region
      $region93: #{tpu_custom_call.1} parent=5 // pred_check
        %p2061 = pneg %p2060
      $region94: #{tpu_custom_call.1} parent=5 // pred_check_branch
        %2063 = sbr.rel (%p2061) target = $region96
      $region95: #{tpu_custom_call.1} parent=5 // pred_region
        %s2064 = ssub.s32 %s26, 2
        // Predicated region
        $region97: #{tpu_custom_call.1} parent=95 // pred_check
          %p2065 = pneg %p291
        $region98: #{tpu_custom_call.1} parent=95 // pred_check_branch
          %2067 = sbr.rel (%p2065) target = $region100
        $region99: #{tpu_custom_call.1} parent=95 // pred_region
          %s2068 = sand.u32 %s276, 1
          %s2069 = scalar_lea.sflag [#allocation4], %s2068
          %s2070 = sand.u32 %s276, 1
          %s2071 = smul.addr %s2070, 8
          %s2072 = scalar_lea.vmem [#allocation13], %s2071
          %2074 = dma.done %s2069, 128
        $region100: #{tpu_custom_call.1} parent=95 // pred_fallthru
          _
      $region96: #{tpu_custom_call.1} parent=5 // pred_fallthru
        _
    $region6: #{tpu_custom_call.1} parent=1 // loop_footer
      %s30 = sadd.s32 1, %s26
    $region7: #{tpu_custom_call.1} parent=1 // loop_footer_branch
      %25 = sbr.rel target = $region3
    $region8: #{tpu_custom_call.1} parent=1 // loop_exit
      _
    %2075 = vsyncpa [#allocation3], 1
    %s2076 = scalar_lea.sflag [#allocation3], 1
    %2077 = vsyncpa %s2076, 1
    %2078 = vsyncpa [#allocation6], 1
    %2079 = vsyncpa [#allocation9], 1
    %2080 = vsyncpa [#allocation12], 1
    %2081 = vsyncpa [#allocation4], 1
    %s2082 = scalar_lea.sflag [#allocation4], 1
    %2083 = vsyncpa %s2082, 1

// kernel: tpu_custom_call.1
$region0: #{tpu_custom_call.1}
  #allocation0 [shape = 'u32[]', space=smem, size = 0x4, offset = 0x4, fixed_abs, tag = 'smem constant byte address 0x4 - core index']
  #allocation1 [shape = 'u32[72,128]{1,0:T(1,128)}', space=vmem, size = 0x9000, scoped, tag = 'internal scratch']
  %s0 = inlined_call_operand.hbm [shape: f32[2,8,128], index: 0, kind: input, shape index: {}]
  %s1 = inlined_call_operand.hbm [shape: bf16[128,384], index: 1, kind: input, shape index: {}]
  %s2 = inlined_call_operand.hbm [shape: f32[1,384], index: 2, kind: input, shape index: {}]
  %s3 = inlined_call_operand.vmem [shape: f32[1,128], index: 3, kind: input, shape index: {}]
  %s4 = inlined_call_operand.hbm [shape: f32[1,128], index: 4, kind: input, shape index: {}]
  %s5 = inlined_call_operand.hbm [shape: bf16[128,512], index: 5, kind: input, shape index: {}]
  %s6 = inlined_call_operand.vmem [shape: f32[1,512], index: 6, kind: input, shape index: {}]
  %s7 = inlined_call_operand.hbm [shape: bf16[512,128], index: 7, kind: input, shape index: {}]
  %s8 = inlined_call_operand.vmem [shape: f32[1,128], index: 8, kind: input, shape index: {}]
  %s9 = inlined_call_operand.vmem [shape: f32[1,128], index: 9, kind: input, shape index: {}]
  %s10 = inlined_call_operand.vmem [shape: f32[1,128], index: 10, kind: input, shape index: {}]
  %s11 = inlined_call_operand.hbm [shape: f32[2,8,128], index: 11, kind: output, shape index: {}]
  %s12 = sld [smem:[#allocation0]]
  $region101: #{tpu_custom_call.1} parent=0
    _
  %s14 = ssub.s32 1, %s12
  %s15 = scalar_select 0, %s14, %s12
  $region1: #{tpu_custom_call.1} parent=0
    #allocation2 [shape = 'u8[8192]{0}', space=vmem, size = 0x2000, scoped, tag = 'input window, operand 0']
    #allocation3 [shape = 's32[2]{0}', space=sflag, size = 0x8, scoped, tag = 'scoped memory for tpu_custom_call.1']
    #allocation4 [shape = 's32[2]{0}', space=sflag, size = 0x8, scoped, tag = 'scoped memory for tpu_custom_call.1']
    #allocation5 [shape = 'u8[98304]{0}', space=vmem, size = 0x18000, scoped, tag = 'input window, operand 1, single buffered']
    #allocation6 [shape = 's32[1]{0}', space=sflag, size = 0x4, scoped, tag = 'scoped memory for tpu_custom_call.1']
    #allocation7 [shape = 'u8[1536]{0}', space=vmem, size = 0x800, scoped, tag = 'input window, operand 2, single buffered']
    #allocation8 [shape = 'u8[512]{0}', space=vmem, size = 0x400, scoped, tag = 'input window, operand 4, single buffered']
    #allocation9 [shape = 's32[1]{0}', space=sflag, size = 0x4, scoped, tag = 'scoped memory for tpu_custom_call.1']
    #allocation10 [shape = 'u8[131072]{0}', space=vmem, size = 0x20000, scoped, tag = 'input window, operand 5, single buffered']
    #allocation11 [shape = 'u8[131072]{0}', space=vmem, size = 0x20000, scoped, tag = 'input window, operand 7, single buffered']
    #allocation12 [shape = 's32[1]{0}', space=sflag, size = 0x4, scoped, tag = 'scoped memory for tpu_custom_call.1']
    #allocation13 [shape = 'u8[8192]{0}', space=vmem, size = 0x2000, scoped, tag = 'output window, operand 0']
    %16 = vsyncpa [#allocation3], 0
    %s17 = scalar_lea.sflag [#allocation3], 1
    %18 = vsyncpa %s17, 0
    %19 = vsyncpa [#allocation6], 0
    %20 = vsyncpa [#allocation9], 0
    %21 = vsyncpa [#allocation12], 0
    %22 = vsyncpa [#allocation4], 0
    %s23 = scalar_lea.sflag [#allocation4], 1
    %24 = vsyncpa %s23, 0
    loop: start=0, step=1, limit=4
    $region2: #{tpu_custom_call.1} parent=1 // loop_pre_header
      _
    $region3: #{tpu_custom_call.1} parent=1 // loop_header
      %s26 = sphi 0, %s30
      %p27 = scmp.ge.s32.totalorder %s26, 4
      %s36 = sphi 0, %s38
      %s39 = sphi 0, %s36
      %s40 = sphi 0, %s39
      %s56 = sphi 0, %s40
      %s60 = sphi 0, %s60
      %s62 = sphi 0, %s60
      %s63 = sphi 0, %s62
      %s77 = sphi 0, %s63
      %s81 = sphi 0, %s81
      %s83 = sphi 0, %s81
      %s84 = sphi 0, %s83
      %s98 = sphi 0, %s84
      %s102 = sphi 0, %s102
      %s104 = sphi 0, %s102
      %s105 = sphi 0, %s104
      %s119 = sphi 0, %s105
      %s123 = sphi 0, %s123
      %s125 = sphi 0, %s123
      %s126 = sphi 0, %s125
      %s140 = sphi 0, %s126
      %s144 = sphi 0, %s144
      %s146 = sphi 0, %s144
      %s147 = sphi 0, %s146
      %s161 = sphi 0, %s147
      %s165 = sphi 0, %s165
      %s167 = sphi 0, %s165
      %s168 = sphi 0, %s167
      %s182 = sphi 0, %s168
      %s186 = sphi 0, %s186
      %s188 = sphi 0, %s186
      %s189 = sphi 0, %s188
      %s203 = sphi 0, %s189
      %s207 = sphi 0, %s207
      %s209 = sphi 0, %s207
      %s210 = sphi 0, %s209
      %s224 = sphi 0, %s210
      %s228 = sphi 0, %s228
      %s230 = sphi 0, %s228
      %s231 = sphi 0, %s230
      %s245 = sphi 0, %s231
      %s249 = sphi 0, %s249
      %s251 = sphi 0, %s249
      %s252 = sphi 0, %s251
      %s266 = sphi 0, %s252
      %s272 = sphi 0, %s274
      %s275 = sphi 0, %s272
      %s276 = sphi 0, %s275
      %s292 = sphi 0, %s276
    $region4: #{tpu_custom_call.1} parent=1 // loop_header_branch
      %29 = sbr.rel (%p27) target = $region8
    $region5: #{tpu_custom_call.1} parent=1 // loop_body
      %s31 = ssub.s32 %s26, 1
      %s32 = ssub.s32 %s26, 2
      %s33 = sadd.s32 %s26, 1
      %s34 = ssub.s32 %s26, %s33
      %p35 = scmp.eq.s32.totalorder %s34, 0
      %s37 = sadd.s32 %s36, 1
      %s38 = scalar_select %p35, %s36, %s37
      %p41 = pneg %p35
      %p42 = scmp.eq.s32.totalorder %s26, 1
      %p43 = por %p41, %p42
      %p44 = scmp.ne.s32.totalorder %s36, %s39
      %p45 = scmp.eq.s32.totalorder %s26, 0
      %p46 = por %p44, %p45
      %p47 = scmp.ne.s32.totalorder %s36, %s39
      %p48 = scmp.eq.s32.totalorder %s31, 1
      %p49 = por %p47, %p48
      %p50 = scmp.ne.s32.totalorder %s39, %s40
      %p51 = scmp.eq.s32.totalorder %s31, 0
      %p52 = por %p50, %p51
      %p53 = scmp.ne.s32.totalorder %s39, %s40
      %p54 = scmp.eq.s32.totalorder %s32, 1
      %p55 = por %p53, %p54
      %p57 = scmp.ne.s32.totalorder %s40, %s56
      %p58 = scmp.eq.s32.totalorder %s32, 0
      %p59 = por %p57, %p58
      %s61 = sadd.s32 %s60, 1
      %p64 = scmp.eq.s32.totalorder %s26, 1
      %p65 = scmp.ne.s32.totalorder %s60, %s62
      %p66 = scmp.eq.s32.totalorder %s26, 0
      %p67 = por %p65, %p66
      %p68 = scmp.ne.s32.totalorder %s60, %s62
      %p69 = scmp.eq.s32.totalorder %s31, 1
      %p70 = por %p68, %p69
      %p71 = scmp.ne.s32.totalorder %s62, %s63
      %p72 = scmp.eq.s32.totalorder %s31, 0
      %p73 = por %p71, %p72
      %p74 = scmp.ne.s32.totalorder %s62, %s63
      %p75 = scmp.eq.s32.totalorder %s32, 1
      %p76 = por %p74, %p75
      %p78 = scmp.ne.s32.totalorder %s63, %s77
      %p79 = scmp.eq.s32.totalorder %s32, 0
      %p80 = por %p78, %p79
      %s82 = sadd.s32 %s81, 1
      %p85 = scmp.eq.s32.totalorder %s26, 1
      %p86 = scmp.ne.s32.totalorder %s81, %s83
      %p87 = scmp.eq.s32.totalorder %s26, 0
      %p88 = por %p86, %p87
      %p89 = scmp.ne.s32.totalorder %s81, %s83
      %p90 = scmp.eq.s32.totalorder %s31, 1
      %p91 = por %p89, %p90
      %p92 = scmp.ne.s32.totalorder %s83, %s84
      %p93 = scmp.eq.s32.totalorder %s31, 0
      %p94 = por %p92, %p93
      %p95 = scmp.ne.s32.totalorder %s83, %s84
      %p96 = scmp.eq.s32.totalorder %s32, 1
      %p97 = por %p95, %p96
      %p99 = scmp.ne.s32.totalorder %s84, %s98
      %p100 = scmp.eq.s32.totalorder %s32, 0
      %p101 = por %p99, %p100
      %s103 = sadd.s32 %s102, 1
      %p106 = scmp.eq.s32.totalorder %s26, 1
      %p107 = scmp.ne.s32.totalorder %s102, %s104
      %p108 = scmp.eq.s32.totalorder %s26, 0
      %p109 = por %p107, %p108
      %p110 = scmp.ne.s32.totalorder %s102, %s104
      %p111 = scmp.eq.s32.totalorder %s31, 1
      %p112 = por %p110, %p111
      %p113 = scmp.ne.s32.totalorder %s104, %s105
      %p114 = scmp.eq.s32.totalorder %s31, 0
      %p115 = por %p113, %p114
      %p116 = scmp.ne.s32.totalorder %s104, %s105
      %p117 = scmp.eq.s32.totalorder %s32, 1
      %p118 = por %p116, %p117
      %p120 = scmp.ne.s32.totalorder %s105, %s119
      %p121 = scmp.eq.s32.totalorder %s32, 0
      %p122 = por %p120, %p121
      %s124 = sadd.s32 %s123, 1
      %p127 = scmp.eq.s32.totalorder %s26, 1
      %p128 = scmp.ne.s32.totalorder %s123, %s125
      %p129 = scmp.eq.s32.totalorder %s26, 0
      %p130 = por %p128, %p129
      %p131 = scmp.ne.s32.totalorder %s123, %s125
      %p132 = scmp.eq.s32.totalorder %s31, 1
      %p133 = por %p131, %p132
      %p134 = scmp.ne.s32.totalorder %s125, %s126
      %p135 = scmp.eq.s32.totalorder %s31, 0
      %p136 = por %p134, %p135
      %p137 = scmp.ne.s32.totalorder %s125, %s126
      %p138 = scmp.eq.s32.totalorder %s32, 1
      %p139 = por %p137, %p138
      %p141 = scmp.ne.s32.totalorder %s126, %s140
      %p142 = scmp.eq.s32.totalorder %s32, 0
      %p143 = por %p141, %p142
      %s145 = sadd.s32 %s144, 1
      %p148 = scmp.eq.s32.totalorder %s26, 1
      %p149 = scmp.ne.s32.totalorder %s144, %s146
      %p150 = scmp.eq.s32.totalorder %s26, 0
      %p151 = por %p149, %p150
      %p152 = scmp.ne.s32.totalorder %s144, %s146
      %p153 = scmp.eq.s32.totalorder %s31, 1
      %p154 = por %p152, %p153
      %p155 = scmp.ne.s32.totalorder %s146, %s147
      %p156 = scmp.eq.s32.totalorder %s31, 0
      %p157 = por %p155, %p156
      %p158 = scmp.ne.s32.totalorder %s146, %s147
      %p159 = scmp.eq.s32.totalorder %s32, 1
      %p160 = por %p158, %p159
      %p162 = scmp.ne.s32.totalorder %s147, %s161
      %p163 = scmp.eq.s32.totalorder %s32, 0
      %p164 = por %p162, %p163
      %s166 = sadd.s32 %s165, 1
      %p169 = scmp.eq.s32.totalorder %s26, 1
      %p170 = scmp.ne.s32.totalorder %s165, %s167
      %p171 = scmp.eq.s32.totalorder %s26, 0
      %p172 = por %p170, %p171
      %p173 = scmp.ne.s32.totalorder %s165, %s167
      %p174 = scmp.eq.s32.totalorder %s31, 1
      %p175 = por %p173, %p174
      %p176 = scmp.ne.s32.totalorder %s167, %s168
      %p177 = scmp.eq.s32.totalorder %s31, 0
      %p178 = por %p176, %p177
      %p179 = scmp.ne.s32.totalorder %s167, %s168
      %p180 = scmp.eq.s32.totalorder %s32, 1
      %p181 = por %p179, %p180
      %p183 = scmp.ne.s32.totalorder %s168, %s182
      %p184 = scmp.eq.s32.totalorder %s32, 0
      %p185 = por %p183, %p184
      %s187 = sadd.s32 %s186, 1
      %p190 = scmp.eq.s32.totalorder %s26, 1
      %p191 = scmp.ne.s32.totalorder %s186, %s188
      %p192 = scmp.eq.s32.totalorder %s26, 0
      %p193 = por %p191, %p192
      %p194 = scmp.ne.s32.totalorder %s186, %s188
      %p195 = scmp.eq.s32.totalorder %s31, 1
      %p196 = por %p194, %p195
      %p197 = scmp.ne.s32.totalorder %s188, %s189
      %p198 = scmp.eq.s32.totalorder %s31, 0
      %p199 = por %p197, %p198
      %p200 = scmp.ne.s32.totalorder %s188, %s189
      %p201 = scmp.eq.s32.totalorder %s32, 1
      %p202 = por %p200, %p201
      %p204 = scmp.ne.s32.totalorder %s189, %s203
      %p205 = scmp.eq.s32.totalorder %s32, 0
      %p206 = por %p204, %p205
      %s208 = sadd.s32 %s207, 1
      %p211 = scmp.eq.s32.totalorder %s26, 1
      %p212 = scmp.ne.s32.totalorder %s207, %s209
      %p213 = scmp.eq.s32.totalorder %s26, 0
      %p214 = por %p212, %p213
      %p215 = scmp.ne.s32.totalorder %s207, %s209
      %p216 = scmp.eq.s32.totalorder %s31, 1
      %p217 = por %p215, %p216
      %p218 = scmp.ne.s32.totalorder %s209, %s210
      %p219 = scmp.eq.s32.totalorder %s31, 0
      %p220 = por %p218, %p219
      %p221 = scmp.ne.s32.totalorder %s209, %s210
      %p222 = scmp.eq.s32.totalorder %s32, 1
      %p223 = por %p221, %p222
      %p225 = scmp.ne.s32.totalorder %s210, %s224
      %p226 = scmp.eq.s32.totalorder %s32, 0
      %p227 = por %p225, %p226
      %s229 = sadd.s32 %s228, 1
      %p232 = scmp.eq.s32.totalorder %s26, 1
      %p233 = scmp.ne.s32.totalorder %s228, %s230
      %p234 = scmp.eq.s32.totalorder %s26, 0
      %p235 = por %p233, %p234
      %p236 = scmp.ne.s32.totalorder %s228, %s230
      %p237 = scmp.eq.s32.totalorder %s31, 1
      %p238 = por %p236, %p237
      %p239 = scmp.ne.s32.totalorder %s230, %s231
      %p240 = scmp.eq.s32.totalorder %s31, 0
      %p241 = por %p239, %p240
      %p242 = scmp.ne.s32.totalorder %s230, %s231
      %p243 = scmp.eq.s32.totalorder %s32, 1
      %p244 = por %p242, %p243
      %p246 = scmp.ne.s32.totalorder %s231, %s245
      %p247 = scmp.eq.s32.totalorder %s32, 0
      %p248 = por %p246, %p247
      %s250 = sadd.s32 %s249, 1
      %p253 = scmp.eq.s32.totalorder %s26, 1
      %p254 = scmp.ne.s32.totalorder %s249, %s251
      %p255 = scmp.eq.s32.totalorder %s26, 0
      %p256 = por %p254, %p255
      %p257 = scmp.ne.s32.totalorder %s249, %s251
      %p258 = scmp.eq.s32.totalorder %s31, 1
      %p259 = por %p257, %p258
      %p260 = scmp.ne.s32.totalorder %s251, %s252
      %p261 = scmp.eq.s32.totalorder %s31, 0
      %p262 = por %p260, %p261
      %p263 = scmp.ne.s32.totalorder %s251, %s252
      %p264 = scmp.eq.s32.totalorder %s32, 1
      %p265 = por %p263, %p264
      %p267 = scmp.ne.s32.totalorder %s252, %s266
      %p268 = scmp.eq.s32.totalorder %s32, 0
      %p269 = por %p267, %p268
      %s270 = ssub.s32 %s26, %s33
      %p271 = scmp.eq.s32.totalorder %s270, 0
      %s273 = sadd.s32 %s272, 1
      %s274 = scalar_select %p271, %s272, %s273
      %p277 = pneg %p271
      %p278 = scmp.eq.s32.totalorder %s26, 1
      %p279 = por %p277, %p278
      %p280 = scmp.ne.s32.totalorder %s272, %s275
      %p281 = scmp.eq.s32.totalorder %s26, 0
      %p282 = por %p280, %p281
      %p283 = scmp.ne.s32.totalorder %s272, %s275
      %p284 = scmp.eq.s32.totalorder %s31, 1
      %p285 = por %p283, %p284
      %p286 = scmp.ne.s32.totalorder %s275, %s276
      %p287 = scmp.eq.s32.totalorder %s31, 0
      %p288 = por %p286, %p287
      %p289 = scmp.ne.s32.totalorder %s275, %s276
      %p290 = scmp.eq.s32.totalorder %s32, 1
      %p291 = por %p289, %p290
      %p293 = scmp.ne.s32.totalorder %s276, %s292
      %p294 = scmp.eq.s32.totalorder %s32, 0
      %p295 = por %p293, %p294
      %p296 = scmp.le.s32.totalorder 1, %s26
      %p297 = scmp.lt.s32.totalorder %s26, 3
      %p298 = pnand %p296, %p297
      %p299 = pneg %p298
      // Predicated region
      $region9: #{tpu_custom_call.1} parent=5 // pred_check
        _
      $region10: #{tpu_custom_call.1} parent=5 // pred_check_branch
        %301 = sbr.rel (%p298) target = $region12
      $region11: #{tpu_custom_call.1} parent=5 // pred_region
        %s302 = ssub.s32 %s26, 1
        // Predicated region
        $region13: #{tpu_custom_call.1} parent=11 // pred_check
          %p303 = pneg %p73
        $region14: #{tpu_custom_call.1} parent=11 // pred_check_branch
          %305 = sbr.rel (%p303) target = $region16
        $region15: #{tpu_custom_call.1} parent=11 // pred_region
          %307 = vsyncadd [#allocation6], 0
          %s308 = sshll.u32 %s1, 4
          %s309 = int_to_ptr.hbm [resolvable:$true] %s308
          %s310 = sshll.u32 [#allocation5], 4
          %s311 = int_to_ptr.vmem [resolvable:$true] %s310
          %316 = dma.hbm_to_vmem [thread:$0]  %s309, 3072, %s311, [#allocation6], 192, 192, 12
        $region16: #{tpu_custom_call.1} parent=11 // pred_fallthru
          _
        // Predicated region
        $region17: #{tpu_custom_call.1} parent=11 // pred_check
          %p317 = pneg %p94
        $region18: #{tpu_custom_call.1} parent=11 // pred_check_branch
          %319 = sbr.rel (%p317) target = $region20
        $region19: #{tpu_custom_call.1} parent=11 // pred_region
          %321 = vsyncadd [#allocation6], 0
          %s323 = sshll.u32 %s2, 4
          %s324 = int_to_ptr.hbm [resolvable:$true] %s323
          %s325 = sshll.u32 [#allocation7], 4
          %s326 = int_to_ptr.vmem [resolvable:$true] %s325
          %328 = dma.hbm_to_vmem [thread:$0]  %s324, 48, %s326, [#allocation6]
        $region20: #{tpu_custom_call.1} parent=11 // pred_fallthru
          _
        // Predicated region
        $region21: #{tpu_custom_call.1} parent=11 // pred_check
          %p329 = pneg %p115
        $region22: #{tpu_custom_call.1} parent=11 // pred_check_branch
          %331 = sbr.rel (%p329) target = $region24
        $region23: #{tpu_custom_call.1} parent=11 // pred_region
          _
        $region24: #{tpu_custom_call.1} parent=11 // pred_fallthru
          _
        // Predicated region
        $region25: #{tpu_custom_call.1} parent=11 // pred_check
          %p332 = pneg %p136
        $region26: #{tpu_custom_call.1} parent=11 // pred_check_branch
          %334 = sbr.rel (%p332) target = $region28
        $region27: #{tpu_custom_call.1} parent=11 // pred_region
          %336 = vsyncadd [#allocation9], 0
          %s338 = sshll.u32 %s4, 4
          %s339 = int_to_ptr.hbm [resolvable:$true] %s338
          %s340 = sshll.u32 [#allocation8], 4
          %s341 = int_to_ptr.vmem [resolvable:$true] %s340
          %343 = dma.hbm_to_vmem [thread:$0]  %s339, 16, %s341, [#allocation9]
        $region28: #{tpu_custom_call.1} parent=11 // pred_fallthru
          _
        // Predicated region
        $region29: #{tpu_custom_call.1} parent=11 // pred_check
          %p344 = pneg %p157
        $region30: #{tpu_custom_call.1} parent=11 // pred_check_branch
          %346 = sbr.rel (%p344) target = $region32
        $region31: #{tpu_custom_call.1} parent=11 // pred_region
          %348 = vsyncadd [#allocation9], 0
          %s349 = sshll.u32 %s5, 4
          %s350 = int_to_ptr.hbm [resolvable:$true] %s349
          %s351 = sshll.u32 [#allocation10], 4
          %s352 = int_to_ptr.vmem [resolvable:$true] %s351
          %357 = dma.hbm_to_vmem [thread:$0]  %s350, 4096, %s352, [#allocation9], 256, 256, 16
        $region32: #{tpu_custom_call.1} parent=11 // pred_fallthru
          _
        // Predicated region
        $region33: #{tpu_custom_call.1} parent=11 // pred_check
          %p358 = pneg %p178
        $region34: #{tpu_custom_call.1} parent=11 // pred_check_branch
          %360 = sbr.rel (%p358) target = $region36
        $region35: #{tpu_custom_call.1} parent=11 // pred_region
          _
        $region36: #{tpu_custom_call.1} parent=11 // pred_fallthru
          _
        // Predicated region
        $region37: #{tpu_custom_call.1} parent=11 // pred_check
          %p361 = pneg %p199
        $region38: #{tpu_custom_call.1} parent=11 // pred_check_branch
          %363 = sbr.rel (%p361) target = $region40
        $region39: #{tpu_custom_call.1} parent=11 // pred_region
          %365 = vsyncadd [#allocation12], 0
          %s366 = sshll.u32 %s7, 4
          %s367 = int_to_ptr.hbm [resolvable:$true] %s366
          %s368 = sshll.u32 [#allocation11], 4
          %s369 = int_to_ptr.vmem [resolvable:$true] %s368
          %374 = dma.hbm_to_vmem [thread:$0]  %s367, 4096, %s369, [#allocation12], 64, 64, 4
        $region40: #{tpu_custom_call.1} parent=11 // pred_fallthru
          _
        // Predicated region
        $region41: #{tpu_custom_call.1} parent=11 // pred_check
          %p375 = pneg %p220
        $region42: #{tpu_custom_call.1} parent=11 // pred_check_branch
          %377 = sbr.rel (%p375) target = $region44
        $region43: #{tpu_custom_call.1} parent=11 // pred_region
          _
        $region44: #{tpu_custom_call.1} parent=11 // pred_fallthru
          _
        // Predicated region
        $region45: #{tpu_custom_call.1} parent=11 // pred_check
          %p378 = pneg %p241
        $region46: #{tpu_custom_call.1} parent=11 // pred_check_branch
          %380 = sbr.rel (%p378) target = $region48
        $region47: #{tpu_custom_call.1} parent=11 // pred_region
          _
        $region48: #{tpu_custom_call.1} parent=11 // pred_fallthru
          _
        // Predicated region
        $region49: #{tpu_custom_call.1} parent=11 // pred_check
          %p381 = pneg %p262
        $region50: #{tpu_custom_call.1} parent=11 // pred_check_branch
          %383 = sbr.rel (%p381) target = $region52
        $region51: #{tpu_custom_call.1} parent=11 // pred_region
          _
        $region52: #{tpu_custom_call.1} parent=11 // pred_fallthru
          _
      $region12: #{tpu_custom_call.1} parent=5 // pred_fallthru
        _
      %p384 = scmp.lt.s32.totalorder %s26, 2
      // Predicated region
      $region53: #{tpu_custom_call.1} parent=5 // pred_check
        %p385 = pneg %p384
      $region54: #{tpu_custom_call.1} parent=5 // pred_check_branch
        %387 = sbr.rel (%p385) target = $region56
      $region55: #{tpu_custom_call.1} parent=5 // pred_region
        // Predicated region
        $region57: #{tpu_custom_call.1} parent=55 // pred_check
          %p388 = pneg %p46
        $region58: #{tpu_custom_call.1} parent=55 // pred_check_branch
          %390 = sbr.rel (%p388) target = $region60
        $region59: #{tpu_custom_call.1} parent=55 // pred_region
          %s391 = sand.u32 %s36, 1
          %s392 = scalar_lea.sflag [#allocation3], %s391
          %s393 = sand.u32 %s36, 1
          %s394 = smul.addr %s393, 8
          %s395 = scalar_lea.vmem [#allocation2], %s394
          %397 = vsyncadd %s392, 0
          %s398 = smul.addr %s26, 8
          %s399 = scalar_lea.hbm %s0, %s398
          %s401 = sshll.u32 %s399, 4
          %s402 = int_to_ptr.hbm [resolvable:$true] %s401
          %s403 = sshll.u32 %s395, 4
          %s404 = int_to_ptr.vmem [resolvable:$true] %s403
          %406 = dma.hbm_to_vmem [thread:$0]  %s402, 128, %s404, %s392
        $region60: #{tpu_custom_call.1} parent=55 // pred_fallthru
          _
      $region56: #{tpu_custom_call.1} parent=5 // pred_fallthru
        _
      %p407 = scmp.le.s32.totalorder 1, %s26
      %p408 = scmp.lt.s32.totalorder %s26, 3
      %p409 = pnand %p407, %p408
      %p410 = pneg %p409
      // Predicated region
      $region61: #{tpu_custom_call.1} parent=5 // pred_check
        _
      $region62: #{tpu_custom_call.1} parent=5 // pred_check_branch
        %412 = sbr.rel (%p409) target = $region64
      $region63: #{tpu_custom_call.1} parent=5 // pred_region
        %s413 = ssub.s32 %s26, 1
        %s414 = sand.u32 %s39, 1
        %s415 = scalar_lea.sflag [#allocation3], %s414
        %s416 = sand.u32 %s39, 1
        %s417 = smul.addr %s416, 8
        %s418 = scalar_lea.vmem [#allocation2], %s417
        // Predicated region
        $region65: #{tpu_custom_call.1} parent=63 // pred_check
          %p419 = pneg %p52
        $region66: #{tpu_custom_call.1} parent=63 // pred_check_branch
          %421 = sbr.rel (%p419) target = $region68
        $region67: #{tpu_custom_call.1} parent=63 // pred_region
          %423 = dma.done %s415, 128
        $region68: #{tpu_custom_call.1} parent=63 // pred_fallthru
          _
        // Predicated region
        $region69: #{tpu_custom_call.1} parent=63 // pred_check
          %p424 = pneg %p73
        $region70: #{tpu_custom_call.1} parent=63 // pred_check_branch
          %426 = sbr.rel (%p424) target = $region72
        $region71: #{tpu_custom_call.1} parent=63 // pred_region
          %428 = dma.done [#allocation6], 3072
        $region72: #{tpu_custom_call.1} parent=63 // pred_fallthru
          _
        // Predicated region
        $region73: #{tpu_custom_call.1} parent=63 // pred_check
          %p429 = pneg %p94
        $region74: #{tpu_custom_call.1} parent=63 // pred_check_branch
          %431 = sbr.rel (%p429) target = $region76
        $region75: #{tpu_custom_call.1} parent=63 // pred_region
          %433 = dma.done [#allocation6], 48
        $region76: #{tpu_custom_call.1} parent=63 // pred_fallthru
          _
        // Predicated region
        $region77: #{tpu_custom_call.1} parent=63 // pred_check
          %p434 = pneg %p136
        $region78: #{tpu_custom_call.1} parent=63 // pred_check_branch
          %436 = sbr.rel (%p434) target = $region80
        $region79: #{tpu_custom_call.1} parent=63 // pred_region
          %438 = dma.done [#allocation9], 16
        $region80: #{tpu_custom_call.1} parent=63 // pred_fallthru
          _
        // Predicated region
        $region81: #{tpu_custom_call.1} parent=63 // pred_check
          %p439 = pneg %p157
        $region82: #{tpu_custom_call.1} parent=63 // pred_check_branch
          %441 = sbr.rel (%p439) target = $region84
        $region83: #{tpu_custom_call.1} parent=63 // pred_region
          %443 = dma.done [#allocation9], 4096
        $region84: #{tpu_custom_call.1} parent=63 // pred_fallthru
          _
        // Predicated region
        $region85: #{tpu_custom_call.1} parent=63 // pred_check
          %p444 = pneg %p199
        $region86: #{tpu_custom_call.1} parent=63 // pred_check_branch
          %446 = sbr.rel (%p444) target = $region88
        $region87: #{tpu_custom_call.1} parent=63 // pred_region
          %448 = dma.done [#allocation12], 4096
        $region88: #{tpu_custom_call.1} parent=63 // pred_fallthru
          _
        %s449 = sand.u32 %s39, 1
        %s450 = scalar_lea.sflag [#allocation3], %s449
        %s451 = sand.u32 %s39, 1
        %s452 = smul.addr %s451, 8
        %s453 = scalar_lea.vmem [#allocation2], %s452
        %p454 = pneg %p52
        %p455 = pneg %p49
        %p456 = pneg %p73
        %p457 = pneg %p70
        %p458 = pneg %p94
        %p459 = pneg %p91
        %p460 = pneg %p115
        %p461 = pneg %p112
        %p462 = pneg %p136
        %p463 = pneg %p133
        %p464 = pneg %p157
        %p465 = pneg %p154
        %p466 = pneg %p178
        %p467 = pneg %p175
        %p468 = pneg %p199
        %p469 = pneg %p196
        %p470 = pneg %p220
        %p471 = pneg %p217
        %p472 = pneg %p241
        %p473 = pneg %p238
        %p474 = pneg %p262
        %p475 = pneg %p259
        %p476 = pneg %p288
        %p477 = pneg %p285
        %s478 = sand.u32 %s275, 1
        %s479 = scalar_lea.sflag [#allocation4], %s478
        %s480 = sand.u32 %s275, 1
        %s481 = smul.addr %s480, 8
        %s482 = scalar_lea.vmem [#allocation13], %s481
        %v484 = vld [vmem:[%s418] sm:$0xff]
        %v485 = vpack.c.bf16 %v484, %v484
        %v486 = vld [vmem:[#allocation5] sm:$0xff]
        %v487 = vld [vmem:[#allocation5 + $0x8] sm:$0xf]
        %v488 = vld [vmem:[#allocation5 + $0xc] sm:$0xff]
        %v489 = vld [vmem:[#allocation5 + $0x14] sm:$0xf]
        %v490 = vld [vmem:[#allocation5 + $0x18] sm:$0xff]
        %v491 = vld [vmem:[#allocation5 + $0x20] sm:$0xf]
        %v492 = vld [vmem:[#allocation5 + $0x24] sm:$0xff]
        %v493 = vld [vmem:[#allocation5 + $0x2c] sm:$0xf]
        %v494 = vld [vmem:[#allocation5 + $0x30] sm:$0xff]
        %v495 = vld [vmem:[#allocation5 + $0x38] sm:$0xf]
        %v496 = vld [vmem:[#allocation5 + $0x3c] sm:$0xff]
        %v497 = vld [vmem:[#allocation5 + $0x44] sm:$0xf]
        %v498 = vld [vmem:[#allocation5 + $0x48] sm:$0xff]
        %v499 = vld [vmem:[#allocation5 + $0x50] sm:$0xf]
        %v500 = vld [vmem:[#allocation5 + $0x54] sm:$0xff]
        %v501 = vld [vmem:[#allocation5 + $0x5c] sm:$0xf]
        %v502 = vld [vmem:[#allocation5 + $0x60] sm:$0xff]
        %v503 = vld [vmem:[#allocation5 + $0x68] sm:$0xf]
        %v504 = vld [vmem:[#allocation5 + $0x6c] sm:$0xff]
        %v505 = vld [vmem:[#allocation5 + $0x74] sm:$0xf]
        %v506 = vld [vmem:[#allocation5 + $0x78] sm:$0xff]
        %v507 = vld [vmem:[#allocation5 + $0x80] sm:$0xf]
        %v508 = vld [vmem:[#allocation5 + $0x84] sm:$0xff]
        %v509 = vld [vmem:[#allocation5 + $0x8c] sm:$0xf]
        %v510 = vld [vmem:[#allocation5 + $0x90] sm:$0xff]
        %v511 = vld [vmem:[#allocation5 + $0x98] sm:$0xf]
        %v512 = vld [vmem:[#allocation5 + $0x9c] sm:$0xff]
        %v513 = vld [vmem:[#allocation5 + $0xa4] sm:$0xf]
        %v514 = vld [vmem:[#allocation5 + $0xa8] sm:$0xff]
        %v515 = vld [vmem:[#allocation5 + $0xb0] sm:$0xf]
        %v516 = vld [vmem:[#allocation5 + $0xb4] sm:$0xff]
        %v517 = vld [vmem:[#allocation5 + $0xbc] sm:$0xf]
        %v518 = vld [vmem:[#allocation7] sm:$0x7]
        %v520 = vperm.slane %v518, 0
        %v521 = vperm.slane %v518, 1
        %v522 = vperm.slane %v518, 2
        %v558 = vunpack.c.l.b16 %v486
        %v559 = vunpack.c.h.b16 %v486
        %v560 = vunpack.c.l.b16 %v487
        %v561 = vunpack.c.l.b16 %v488
        %v562 = vunpack.c.h.b16 %v488
        %v563 = vunpack.c.l.b16 %v489
        %v564 = vunpack.c.l.b16 %v490
        %v565 = vunpack.c.h.b16 %v490
        %v566 = vunpack.c.l.b16 %v491
        %v567 = vunpack.c.l.b16 %v492
        %v568 = vunpack.c.h.b16 %v492
        %v569 = vunpack.c.l.b16 %v493
        %v570 = vunpack.c.l.b16 %v494
        %v571 = vunpack.c.h.b16 %v494
        %v572 = vunpack.c.l.b16 %v495
        %v573 = vunpack.c.l.b16 %v496
        %v574 = vunpack.c.h.b16 %v496
        %v575 = vunpack.c.l.b16 %v497
        %v576 = vunpack.c.l.b16 %v498
        %v577 = vunpack.c.h.b16 %v498
        %v578 = vunpack.c.l.b16 %v499
        %v579 = vunpack.c.l.b16 %v500
        %v580 = vunpack.c.h.b16 %v500
        %v581 = vunpack.c.l.b16 %v501
        %v582 = vunpack.c.l.b16 %v502
        %v583 = vunpack.c.h.b16 %v502
        %v584 = vunpack.c.l.b16 %v503
        %v585 = vunpack.c.l.b16 %v504
        %v586 = vunpack.c.h.b16 %v504
        %v587 = vunpack.c.l.b16 %v505
        %v588 = vunpack.c.l.b16 %v506
        %v589 = vunpack.c.h.b16 %v506
        %v590 = vunpack.c.l.b16 %v507
        %v591 = vunpack.c.l.b16 %v508
        %v592 = vunpack.c.h.b16 %v508
        %v593 = vunpack.c.l.b16 %v509
        %v594 = vunpack.c.l.b16 %v510
        %v595 = vunpack.c.h.b16 %v510
        %v596 = vunpack.c.l.b16 %v511
        %v597 = vunpack.c.l.b16 %v512
        %v598 = vunpack.c.h.b16 %v512
        %v599 = vunpack.c.l.b16 %v513
        %v600 = vunpack.c.l.b16 %v514
        %v601 = vunpack.c.h.b16 %v514
        %v602 = vunpack.c.l.b16 %v515
        %v603 = vunpack.c.l.b16 %v516
        %v604 = vunpack.c.h.b16 %v516
        %v605 = vunpack.c.l.b16 %v517
        %v606 = vpack.c.b16 %v561, %v558
        %v607 = vpack.c.b16 %v562, %v559
        %v608 = vpack.c.b16 %v563, %v560
        %v609 = vpack.c.b16 %v567, %v564
        %v610 = vpack.c.b16 %v568, %v565
        %v611 = vpack.c.b16 %v569, %v566
        %v612 = vpack.c.b16 %v573, %v570
        %v613 = vpack.c.b16 %v574, %v571
        %v614 = vpack.c.b16 %v575, %v572
        %v615 = vpack.c.b16 %v579, %v576
        %v616 = vpack.c.b16 %v580, %v577
        %v617 = vpack.c.b16 %v581, %v578
        %v618 = vpack.c.b16 %v585, %v582
        %v619 = vpack.c.b16 %v586, %v583
        %v620 = vpack.c.b16 %v587, %v584
        %v621 = vpack.c.b16 %v591, %v588
        %v622 = vpack.c.b16 %v592, %v589
        %v623 = vpack.c.b16 %v593, %v590
        %v624 = vpack.c.b16 %v597, %v594
        %v625 = vpack.c.b16 %v598, %v595
        %v626 = vpack.c.b16 %v599, %v596
        %v627 = vpack.c.b16 %v603, %v600
        %v628 = vpack.c.b16 %v604, %v601
        %v629 = vpack.c.b16 %v605, %v602
        %654 = vmatpush.bf16.msra.mxu0 %v627
        %655 = vmatpush.bf16.msra.mxu0 %v624
        %656 = vmatpush.bf16.msra.mxu0 %v621
        %657 = vmatpush.bf16.msra.mxu0 %v618
        %658 = vmatpush.bf16.msra.mxu0 %v615
        %659 = vmatpush.bf16.msra.mxu0 %v612
        %660 = vmatpush.bf16.msra.mxu0 %v609
        %661 = vmatpush.bf16.msra.mxu0 %v606
        %662 = vmatmul.bf16.gmra.mxu0 %v485
        %v663 = vpop.f32.mrf.mxu0
        %v664 = vadd.f32 %v520, %v663
        %v665 = vpop.f32.mrf.mxu0
        %666 = vdwg.mxu0
        %667 = vmatpush.bf16.msra.mxu0 %v628
        %668 = vmatpush.bf16.msra.mxu0 %v625
        %669 = vmatpush.bf16.msra.mxu0 %v622
        %670 = vmatpush.bf16.msra.mxu0 %v619
        %671 = vmatpush.bf16.msra.mxu0 %v616
        %672 = vmatpush.bf16.msra.mxu0 %v613
        %673 = vmatpush.bf16.msra.mxu0 %v610
        %674 = vmatpush.bf16.msra.mxu0 %v607
        %675 = vmatmul.bf16.gmra.mxu0 %v485
        %v676 = vpop.f32.mrf.mxu0
        %v677 = vadd.f32 %v521, %v676
        %v678 = vpop.f32.mrf.mxu0
        %679 = vdwg.mxu0
        %680 = vmatpush.bf16.msra.mxu0 %v629
        %681 = vmatpush.bf16.msra.mxu0 %v626
        %682 = vmatpush.bf16.msra.mxu0 %v623
        %683 = vmatpush.bf16.msra.mxu0 %v620
        %684 = vmatpush.bf16.msra.mxu0 %v617
        %685 = vmatpush.bf16.msra.mxu0 %v614
        %686 = vmatpush.bf16.msra.mxu0 %v611
        %687 = vmatpush.bf16.msra.mxu0 %v608
        %688 = vmatmul.bf16.gmra.mxu0 %v485
        %v689 = vpop.f32.mrf.mxu0
        %v690 = vadd.f32 %v522, %v689
        %v691 = vpop.f32.mrf.mxu0
        %692 = vdwg.mxu0
        %694 = vrot.lane.b32.xlu0 %v664, 96
        %v695 = vpop.permute.xlu0 %694
        %697 = vrot.lane.b32.xlu0 %v664, 64
        %v698 = vpop.permute.xlu0 %697
        %700 = vrot.lane.b32.xlu0 %v664, 32
        %v701 = vpop.permute.xlu0 %700
        %v703 = vrot.slane %v698, 4
        %vm704 = vcmask 1047556
        %v705 = vsel %vm704, %v703, %v664
        %v706 = vrot.slane %v664, 4
        %v707 = vsel %vm704, %v698, %v706
        %v709 = vunpack.c.l.s4 1983009808
        %v710 = vunpack.c.0.s8 %v709
        %v711 = vperm.slane %v705, %v710
        %v713 = vunpack.c.l.s4 1983009808
        %v714 = vunpack.c.0.s8 %v713
        %v715 = vperm.slane %v707, %v714
        %v716 = vrot.slane %v701, 4
        %v717 = vsel %vm704, %v716, %v695
        %v718 = vrot.slane %v695, 4
        %v719 = vsel %vm704, %v701, %v718
        %v721 = vunpack.c.l.s4 1983009808
        %v722 = vunpack.c.0.s8 %v721
        %v723 = vperm.slane %v717, %v722
        %v725 = vunpack.c.l.s4 1983009808
        %v726 = vunpack.c.0.s8 %v725
        %v727 = vperm.slane %v719, %v726
        %v728 = vrot.slane %v723, 4
        %v729 = vsel %vm704, %v728, %v711
        %v730 = vrot.slane %v711, 4
        %v731 = vsel %vm704, %v723, %v730
        %v733 = vunpack.c.l.s4 1934713408
        %v734 = vunpack.c.0.s8 %v733
        %v735 = vperm.slane %v729, %v734
        %v737 = vunpack.c.l.s4 1934713408
        %v738 = vunpack.c.0.s8 %v737
        %v739 = vperm.slane %v731, %v738
        %v740 = vrot.slane %v727, 4
        %v741 = vsel %vm704, %v740, %v715
        %v742 = vrot.slane %v715, 4
        %v743 = vsel %vm704, %v727, %v742
        %v745 = vunpack.c.l.s4 1934713408
        %v746 = vunpack.c.0.s8 %v745
        %v747 = vperm.slane %v741, %v746
        %v749 = vunpack.c.l.s4 1934713408
        %v750 = vunpack.c.0.s8 %v749
        %v751 = vperm.slane %v743, %v750
        %v752 = vrot.slane %v735, 4
        %v753 = vsel %vm704, 0.0, %v752
        %v754 = vrot.slane %v739, 4
        %v755 = vsel %vm704, 0.0, %v754
        %v756 = vrot.slane %v747, 4
        %v757 = vsel %vm704, 0.0, %v756
        %v758 = vrot.slane %v751, 4
        %v759 = vsel %vm704, 0.0, %v758
        %v760 = vsel %vm704, %v754, %v735
        %v762 = vunpack.c.l.s4 1983009808
        %v763 = vunpack.c.0.s8 %v762
        %v764 = vperm.slane %v760, %v763
        %v765 = vrot.slane %v755, 4
        %v766 = vsel %vm704, %v765, %v753
        %v768 = vunpack.c.l.s4 1983009808
        %v769 = vunpack.c.0.s8 %v768
        %v770 = vperm.slane %v766, %v769
        %v771 = vsel %vm704, %v758, %v747
        %v773 = vunpack.c.l.s4 1983009808
        %v774 = vunpack.c.0.s8 %v773
        %v775 = vperm.slane %v771, %v774
        %v776 = vrot.slane %v759, 4
        %v777 = vsel %vm704, %v776, %v757
        %v779 = vunpack.c.l.s4 1983009808
        %v780 = vunpack.c.0.s8 %v779
        %v781 = vperm.slane %v777, %v780
        %v782 = vrot.slane %v770, 4
        %v783 = vsel %vm704, %v782, %v764
        %v784 = vrot.slane %v764, 4
        %v785 = vsel %vm704, %v770, %v784
        %v787 = vunpack.c.l.s4 1934713408
        %v788 = vunpack.c.0.s8 %v787
        %v789 = vperm.slane %v783, %v788
        %v791 = vunpack.c.l.s4 1934713408
        %v792 = vunpack.c.0.s8 %v791
        %v793 = vperm.slane %v785, %v792
        %v794 = vrot.slane %v781, 4
        %v795 = vsel %vm704, %v794, %v775
        %v796 = vrot.slane %v775, 4
        %v797 = vsel %vm704, %v781, %v796
        %v799 = vunpack.c.l.s4 1934713408
        %v800 = vunpack.c.0.s8 %v799
        %v801 = vperm.slane %v795, %v800
        %v803 = vunpack.c.l.s4 1934713408
        %v804 = vunpack.c.0.s8 %v803
        %v805 = vperm.slane %v797, %v804
        %v806 = vrot.slane %v801, 4
        %v807 = vsel %vm704, %v806, %v789
        %v808 = vrot.slane %v789, 4
        %v809 = vsel %vm704, %v801, %v808
        %v810 = vrot.slane %v805, 4
        %v811 = vsel %vm704, %v810, %v793
        %v812 = vrot.slane %v793, 4
        %v813 = vsel %vm704, %v805, %v812
        %v814 = vpack.c.bf16 %v807, %v807
        %v815 = vpack.c.bf16 %v809, %v809
        %v816 = vpack.c.bf16 %v811, %v811
        %v817 = vpack.c.bf16 %v813, %v813
        %819 = vrot.lane.b32.xlu0 %v677, 96
        %v820 = vpop.permute.xlu0 %819
        %822 = vrot.lane.b32.xlu0 %v677, 64
        %v823 = vpop.permute.xlu0 %822
        %825 = vrot.lane.b32.xlu0 %v677, 32
        %v826 = vpop.permute.xlu0 %825
        %v828 = vrot.slane %v823, 4
        %v829 = vsel %vm704, %v828, %v677
        %v830 = vrot.slane %v677, 4
        %v831 = vsel %vm704, %v823, %v830
        %v833 = vunpack.c.l.s4 1983009808
        %v834 = vunpack.c.0.s8 %v833
        %v835 = vperm.slane %v829, %v834
        %v837 = vunpack.c.l.s4 1983009808
        %v838 = vunpack.c.0.s8 %v837
        %v839 = vperm.slane %v831, %v838
        %v840 = vrot.slane %v826, 4
        %v841 = vsel %vm704, %v840, %v820
        %v842 = vrot.slane %v820, 4
        %v843 = vsel %vm704, %v826, %v842
        %v845 = vunpack.c.l.s4 1983009808
        %v846 = vunpack.c.0.s8 %v845
        %v847 = vperm.slane %v841, %v846
        %v849 = vunpack.c.l.s4 1983009808
        %v850 = vunpack.c.0.s8 %v849
        %v851 = vperm.slane %v843, %v850
        %v852 = vrot.slane %v847, 4
        %v853 = vsel %vm704, %v852, %v835
        %v854 = vrot.slane %v835, 4
        %v855 = vsel %vm704, %v847, %v854
        %v857 = vunpack.c.l.s4 1934713408
        %v858 = vunpack.c.0.s8 %v857
        %v859 = vperm.slane %v853, %v858
        %v861 = vunpack.c.l.s4 1934713408
        %v862 = vunpack.c.0.s8 %v861
        %v863 = vperm.slane %v855, %v862
        %v864 = vrot.slane %v851, 4
        %v865 = vsel %vm704, %v864, %v839
        %v866 = vrot.slane %v839, 4
        %v867 = vsel %vm704, %v851, %v866
        %v869 = vunpack.c.l.s4 1934713408
        %v870 = vunpack.c.0.s8 %v869
        %v871 = vperm.slane %v865, %v870
        %v873 = vunpack.c.l.s4 1934713408
        %v874 = vunpack.c.0.s8 %v873
        %v875 = vperm.slane %v867, %v874
        %v876 = vrot.slane %v859, 4
        %v877 = vsel %vm704, 0.0, %v876
        %v878 = vrot.slane %v863, 4
        %v879 = vsel %vm704, 0.0, %v878
        %v880 = vrot.slane %v871, 4
        %v881 = vsel %vm704, 0.0, %v880
        %v882 = vrot.slane %v875, 4
        %v883 = vsel %vm704, 0.0, %v882
        %v884 = vsel %vm704, %v878, %v859
        %v886 = vunpack.c.l.s4 1983009808
        %v887 = vunpack.c.0.s8 %v886
        %v888 = vperm.slane %v884, %v887
        %v889 = vrot.slane %v879, 4
        %v890 = vsel %vm704, %v889, %v877
        %v892 = vunpack.c.l.s4 1983009808
        %v893 = vunpack.c.0.s8 %v892
        %v894 = vperm.slane %v890, %v893
        %v895 = vsel %vm704, %v882, %v871
        %v897 = vunpack.c.l.s4 1983009808
        %v898 = vunpack.c.0.s8 %v897
        %v899 = vperm.slane %v895, %v898
        %v900 = vrot.slane %v883, 4
        %v901 = vsel %vm704, %v900, %v881
        %v903 = vunpack.c.l.s4 1983009808
        %v904 = vunpack.c.0.s8 %v903
        %v905 = vperm.slane %v901, %v904
        %v906 = vrot.slane %v894, 4
        %v907 = vsel %vm704, %v906, %v888
        %v908 = vrot.slane %v888, 4
        %v909 = vsel %vm704, %v894, %v908
        %v911 = vunpack.c.l.s4 1934713408
        %v912 = vunpack.c.0.s8 %v911
        %v913 = vperm.slane %v907, %v912
        %v915 = vunpack.c.l.s4 1934713408
        %v916 = vunpack.c.0.s8 %v915
        %v917 = vperm.slane %v909, %v916
        %v918 = vrot.slane %v905, 4
        %v919 = vsel %vm704, %v918, %v899
        %v920 = vrot.slane %v899, 4
        %v921 = vsel %vm704, %v905, %v920
        %v923 = vunpack.c.l.s4 1934713408
        %v924 = vunpack.c.0.s8 %v923
        %v925 = vperm.slane %v919, %v924
        %v927 = vunpack.c.l.s4 1934713408
        %v928 = vunpack.c.0.s8 %v927
        %v929 = vperm.slane %v921, %v928
        %v930 = vrot.slane %v925, 4
        %v931 = vsel %vm704, %v930, %v913
        %v932 = vrot.slane %v913, 4
        %v933 = vsel %vm704, %v925, %v932
        %v934 = vrot.slane %v929, 4
        %v935 = vsel %vm704, %v934, %v917
        %v936 = vrot.slane %v917, 4
        %v937 = vsel %vm704, %v929, %v936
        %v938 = vpack.c.bf16 %v931, %v931
        %v939 = vpack.c.bf16 %v933, %v933
        %v940 = vpack.c.bf16 %v935, %v935
        %v941 = vpack.c.bf16 %v937, %v937
        %943 = vrot.lane.b32.xlu0 %v690, 96
        %v944 = vpop.permute.xlu0 %943
        %946 = vrot.lane.b32.xlu0 %v690, 64
        %v947 = vpop.permute.xlu0 %946
        %949 = vrot.lane.b32.xlu0 %v690, 32
        %v950 = vpop.permute.xlu0 %949
        %v952 = vrot.slane %v947, 4
        %v953 = vsel %vm704, %v952, %v690
        %v954 = vrot.slane %v690, 4
        %v955 = vsel %vm704, %v947, %v954
        %v957 = vunpack.c.l.s4 1983009808
        %v958 = vunpack.c.0.s8 %v957
        %v959 = vperm.slane %v953, %v958
        %v961 = vunpack.c.l.s4 1983009808
        %v962 = vunpack.c.0.s8 %v961
        %v963 = vperm.slane %v955, %v962
        %v964 = vrot.slane %v950, 4
        %v965 = vsel %vm704, %v964, %v944
        %v966 = vrot.slane %v944, 4
        %v967 = vsel %vm704, %v950, %v966
        %v969 = vunpack.c.l.s4 1983009808
        %v970 = vunpack.c.0.s8 %v969
        %v971 = vperm.slane %v965, %v970
        %v973 = vunpack.c.l.s4 1983009808
        %v974 = vunpack.c.0.s8 %v973
        %v975 = vperm.slane %v967, %v974
        %v976 = vrot.slane %v971, 4
        %v977 = vsel %vm704, %v976, %v959
        %v978 = vrot.slane %v959, 4
        %v979 = vsel %vm704, %v971, %v978
        %v981 = vunpack.c.l.s4 1934713408
        %v982 = vunpack.c.0.s8 %v981
        %v983 = vperm.slane %v977, %v982
        %v985 = vunpack.c.l.s4 1934713408
        %v986 = vunpack.c.0.s8 %v985
        %v987 = vperm.slane %v979, %v986
        %v988 = vrot.slane %v975, 4
        %v989 = vsel %vm704, %v988, %v963
        %v990 = vrot.slane %v963, 4
        %v991 = vsel %vm704, %v975, %v990
        %v993 = vunpack.c.l.s4 1934713408
        %v994 = vunpack.c.0.s8 %v993
        %v995 = vperm.slane %v989, %v994
        %v997 = vunpack.c.l.s4 1934713408
        %v998 = vunpack.c.0.s8 %v997
        %v999 = vperm.slane %v991, %v998
        %v1000 = vrot.slane %v983, 4
        %v1001 = vsel %vm704, 0.0, %v1000
        %v1002 = vrot.slane %v987, 4
        %v1003 = vsel %vm704, 0.0, %v1002
        %v1004 = vrot.slane %v995, 4
        %v1005 = vsel %vm704, 0.0, %v1004
        %v1006 = vrot.slane %v999, 4
        %v1007 = vsel %vm704, 0.0, %v1006
        %v1008 = vsel %vm704, %v1002, %v983
        %v1010 = vunpack.c.l.s4 1983009808
        %v1011 = vunpack.c.0.s8 %v1010
        %v1012 = vperm.slane %v1008, %v1011
        %v1013 = vrot.slane %v1003, 4
        %v1014 = vsel %vm704, %v1013, %v1001
        %v1016 = vunpack.c.l.s4 1983009808
        %v1017 = vunpack.c.0.s8 %v1016
        %v1018 = vperm.slane %v1014, %v1017
        %v1019 = vsel %vm704, %v1006, %v995
        %v1021 = vunpack.c.l.s4 1983009808
        %v1022 = vunpack.c.0.s8 %v1021
        %v1023 = vperm.slane %v1019, %v1022
        %v1024 = vrot.slane %v1007, 4
        %v1025 = vsel %vm704, %v1024, %v1005
        %v1027 = vunpack.c.l.s4 1983009808
        %v1028 = vunpack.c.0.s8 %v1027
        %v1029 = vperm.slane %v1025, %v1028
        %v1030 = vrot.slane %v1018, 4
        %v1031 = vsel %vm704, %v1030, %v1012
        %v1032 = vrot.slane %v1012, 4
        %v1033 = vsel %vm704, %v1018, %v1032
        %v1035 = vunpack.c.l.s4 1934713408
        %v1036 = vunpack.c.0.s8 %v1035
        %v1037 = vperm.slane %v1031, %v1036
        %v1039 = vunpack.c.l.s4 1934713408
        %v1040 = vunpack.c.0.s8 %v1039
        %v1041 = vperm.slane %v1033, %v1040
        %v1042 = vrot.slane %v1029, 4
        %v1043 = vsel %vm704, %v1042, %v1023
        %v1044 = vrot.slane %v1023, 4
        %v1045 = vsel %vm704, %v1029, %v1044
        %v1047 = vunpack.c.l.s4 1934713408
        %v1048 = vunpack.c.0.s8 %v1047
        %v1049 = vperm.slane %v1043, %v1048
        %v1051 = vunpack.c.l.s4 1934713408
        %v1052 = vunpack.c.0.s8 %v1051
        %v1053 = vperm.slane %v1045, %v1052
        %v1054 = vrot.slane %v1049, 4
        %v1055 = vsel %vm704, %v1054, %v1037
        %v1056 = vrot.slane %v1037, 4
        %v1057 = vsel %vm704, %v1049, %v1056
        %v1058 = vrot.slane %v1053, 4
        %v1059 = vsel %vm704, %v1058, %v1041
        %v1060 = vrot.slane %v1041, 4
        %v1061 = vsel %vm704, %v1053, %v1060
        %v1062 = vpack.c.bf16 %v1055, %v1055
        %v1063 = vpack.c.bf16 %v1057, %v1057
        %v1064 = vpack.c.bf16 %v1059, %v1059
        %v1065 = vpack.c.bf16 %v1061, %v1061
        %vm1066 = vcmask 261120
        %v1068 = vsel %vm1066, %v814, 0
        %v1071 = vsel %vm1066, %v938, 0
        %1073 = vmatpush.bf16.xpose.msra.mxu0 0
        %1074 = vmatpush.bf16.xpose.msra.mxu0 0
        %1075 = vmatpush.bf16.xpose.msra.mxu0 0
        %1076 = vmatpush.bf16.xpose.msra.mxu0 0
        %1077 = vmatpush.bf16.xpose.msra.mxu0 0
        %1078 = vmatpush.bf16.xpose.msra.mxu0 0
        %1079 = vmatpush.bf16.xpose.msra.mxu0 0
        %1080 = vmatpush.bf16.xpose.msra.mxu0 %v1071
        %1081 = vmatmul.bf16.gmra.mxu0 %v1068
        %v1082 = vpop.f32.mrf.mxu0
        %v1083 = vadd.f32 0.0, %v1082
        %v1084 = vpop.f32.mrf.mxu0
        %1085 = vdwg.mxu0
        %v1087 = vsel %vm1066, %v815, 0
        %v1090 = vsel %vm1066, %v939, 0
        %1092 = vmatpush.bf16.xpose.msra.mxu0 0
        %1093 = vmatpush.bf16.xpose.msra.mxu0 0
        %1094 = vmatpush.bf16.xpose.msra.mxu0 0
        %1095 = vmatpush.bf16.xpose.msra.mxu0 0
        %1096 = vmatpush.bf16.xpose.msra.mxu0 0
        %1097 = vmatpush.bf16.xpose.msra.mxu0 0
        %1098 = vmatpush.bf16.xpose.msra.mxu0 0
        %1099 = vmatpush.bf16.xpose.msra.mxu0 %v1090
        %1100 = vmatmul.bf16.gmra.mxu0 %v1087
        %v1101 = vpop.f32.mrf.mxu0
        %v1102 = vadd.f32 0.0, %v1101
        %v1103 = vpop.f32.mrf.mxu0
        %1104 = vdwg.mxu0
        %v1106 = vsel %vm1066, %v816, 0
        %v1109 = vsel %vm1066, %v940, 0
        %1111 = vmatpush.bf16.xpose.msra.mxu0 0
        %1112 = vmatpush.bf16.xpose.msra.mxu0 0
        %1113 = vmatpush.bf16.xpose.msra.mxu0 0
        %1114 = vmatpush.bf16.xpose.msra.mxu0 0
        %1115 = vmatpush.bf16.xpose.msra.mxu0 0
        %1116 = vmatpush.bf16.xpose.msra.mxu0 0
        %1117 = vmatpush.bf16.xpose.msra.mxu0 0
        %1118 = vmatpush.bf16.xpose.msra.mxu0 %v1109
        %1119 = vmatmul.bf16.gmra.mxu0 %v1106
        %v1120 = vpop.f32.mrf.mxu0
        %v1121 = vadd.f32 0.0, %v1120
        %v1122 = vpop.f32.mrf.mxu0
        %1123 = vdwg.mxu0
        %v1125 = vsel %vm1066, %v817, 0
        %v1128 = vsel %vm1066, %v941, 0
        %1130 = vmatpush.bf16.xpose.msra.mxu0 0
        %1131 = vmatpush.bf16.xpose.msra.mxu0 0
        %1132 = vmatpush.bf16.xpose.msra.mxu0 0
        %1133 = vmatpush.bf16.xpose.msra.mxu0 0
        %1134 = vmatpush.bf16.xpose.msra.mxu0 0
        %1135 = vmatpush.bf16.xpose.msra.mxu0 0
        %1136 = vmatpush.bf16.xpose.msra.mxu0 0
        %1137 = vmatpush.bf16.xpose.msra.mxu0 %v1128
        %1138 = vmatmul.bf16.gmra.mxu0 %v1125
        %v1139 = vpop.f32.mrf.mxu0
        %v1140 = vadd.f32 0.0, %v1139
        %v1141 = vpop.f32.mrf.mxu0
        %1142 = vdwg.mxu0
        %vm1143 = vcmask 64512
        %v1144 = vsel %vm1143, %v1083, -inf
        %1145 = vmax.xlane.f32.xlu0 %v1144
        %v1146 = vpop.xlane.xlu0 %1145
        %v1147 = vsel %vm1143, %v1102, -inf
        %1148 = vmax.xlane.f32.xlu0 %v1147
        %v1149 = vpop.xlane.xlu0 %1148
        %v1150 = vsel %vm1143, %v1121, -inf
        %1151 = vmax.xlane.f32.xlu0 %v1150
        %v1152 = vpop.xlane.xlu0 %1151
        %v1153 = vsel %vm1143, %v1140, -inf
        %1154 = vmax.xlane.f32.xlu0 %v1153
        %v1155 = vpop.xlane.xlu0 %1154
        %v1156 = vsub.f32 %v1083, %v1146
        %v1157 = vsub.f32 %v1102, %v1149
        %v1158 = vsub.f32 %v1121, %v1152
        %v1159 = vsub.f32 %v1140, %v1155
        %v1160 = vmul.f32 %v1156, 1.442695
        %v1161 = vpow.pop %v1160
        %v1162 = vmul.f32 %v1157, 1.442695
        %v1163 = vpow.pop %v1162
        %v1164 = vmul.f32 %v1158, 1.442695
        %v1165 = vpow.pop %v1164
        %v1166 = vmul.f32 %v1159, 1.442695
        %v1167 = vpow.pop %v1166
        %v1168 = vsel %vm1143, %v1161, 0.0
        %1169 = vadd.xlane.f32.xlu0 %v1168
        %v1170 = vpop.xlane.xlu0 %1169
        %v1171 = vsel %vm1143, %v1163, 0.0
        %1172 = vadd.xlane.f32.xlu0 %v1171
        %v1173 = vpop.xlane.xlu0 %1172
        %v1174 = vsel %vm1143, %v1165, 0.0
        %1175 = vadd.xlane.f32.xlu0 %v1174
        %v1176 = vpop.xlane.xlu0 %1175
        %v1177 = vsel %vm1143, %v1167, 0.0
        %1178 = vadd.xlane.f32.xlu0 %v1177
        %v1179 = vpop.xlane.xlu0 %1178
        %v1180 = vrcp.pop %v1170
        %v1181 = vrcp.pop %v1173
        %v1182 = vrcp.pop %v1176
        %v1183 = vrcp.pop %v1179
        %v1184 = vmul.f32 %v1161, %v1180
        %v1185 = vmul.f32 %v1163, %v1181
        %v1186 = vmul.f32 %v1165, %v1182
        %v1187 = vmul.f32 %v1167, %v1183
        %v1188 = vpack.c.bf16 %v1184, %v1184
        %v1189 = vpack.c.bf16 %v1185, %v1185
        %v1190 = vpack.c.bf16 %v1186, %v1186
        %v1191 = vpack.c.bf16 %v1187, %v1187
        %v1193 = vsel %vm1143, %v1188, 0
        %vm1195 = vcmask 1043456
        %v1197 = vsel %vm1195, %v1062, 0
        %1199 = vmatpush.bf16.msra.mxu0 0
        %1200 = vmatpush.bf16.msra.mxu0 0
        %1201 = vmatpush.bf16.msra.mxu0 0
        %1202 = vmatpush.bf16.msra.mxu0 0
        %1203 = vmatpush.bf16.msra.mxu0 0
        %1204 = vmatpush.bf16.msra.mxu0 0
        %1205 = vmatpush.bf16.msra.mxu0 0
        %1206 = vmatpush.bf16.msra.mxu0 %v1197
        %1207 = vmatmul.bf16.gmra.mxu0 %v1193
        %v1208 = vpop.f32.mrf.mxu0
        %v1209 = vadd.f32 0.0, %v1208
        %v1210 = vpop.f32.mrf.mxu0
        %1211 = vdwg.mxu0
        %v1213 = vsel %vm1143, %v1189, 0
        %v1216 = vsel %vm1195, %v1063, 0
        %1218 = vmatpush.bf16.msra.mxu0 0
        %1219 = vmatpush.bf16.msra.mxu0 0
        %1220 = vmatpush.bf16.msra.mxu0 0
        %1221 = vmatpush.bf16.msra.mxu0 0
        %1222 = vmatpush.bf16.msra.mxu0 0
        %1223 = vmatpush.bf16.msra.mxu0 0
        %1224 = vmatpush.bf16.msra.mxu0 0
        %1225 = vmatpush.bf16.msra.mxu0 %v1216
        %1226 = vmatmul.bf16.gmra.mxu0 %v1213
        %v1227 = vpop.f32.mrf.mxu0
        %v1228 = vadd.f32 0.0, %v1227
        %v1229 = vpop.f32.mrf.mxu0
        %1230 = vdwg.mxu0
        %v1232 = vsel %vm1143, %v1190, 0
        %v1235 = vsel %vm1195, %v1064, 0
        %1237 = vmatpush.bf16.msra.mxu0 0
        %1238 = vmatpush.bf16.msra.mxu0 0
        %1239 = vmatpush.bf16.msra.mxu0 0
        %1240 = vmatpush.bf16.msra.mxu0 0
        %1241 = vmatpush.bf16.msra.mxu0 0
        %1242 = vmatpush.bf16.msra.mxu0 0
        %1243 = vmatpush.bf16.msra.mxu0 0
        %1244 = vmatpush.bf16.msra.mxu0 %v1235
        %1245 = vmatmul.bf16.gmra.mxu0 %v1232
        %v1246 = vpop.f32.mrf.mxu0
        %v1247 = vadd.f32 0.0, %v1246
        %v1248 = vpop.f32.mrf.mxu0
        %1249 = vdwg.mxu0
        %v1251 = vsel %vm1143, %v1191, 0
        %v1254 = vsel %vm1195, %v1065, 0
        %1256 = vmatpush.bf16.msra.mxu0 0
        %1257 = vmatpush.bf16.msra.mxu0 0
        %1258 = vmatpush.bf16.msra.mxu0 0
        %1259 = vmatpush.bf16.msra.mxu0 0
        %1260 = vmatpush.bf16.msra.mxu0 0
        %1261 = vmatpush.bf16.msra.mxu0 0
        %1262 = vmatpush.bf16.msra.mxu0 0
        %1263 = vmatpush.bf16.msra.mxu0 %v1254
        %1264 = vmatmul.bf16.gmra.mxu0 %v1251
        %v1265 = vpop.f32.mrf.mxu0
        %v1266 = vadd.f32 0.0, %v1265
        %v1267 = vpop.f32.mrf.mxu0
        %1268 = vdwg.mxu0
        %v1269 = vrot.slane %v1247, 4
        %v1270 = vsel %vm704, %v1269, %v1209
        %v1271 = vrot.slane %v1209, 4
        %v1272 = vsel %vm704, %v1247, %v1271
        %v1274 = vunpack.c.l.s4 1983009808
        %v1275 = vunpack.c.0.s8 %v1274
        %v1276 = vperm.slane %v1270, %v1275
        %v1278 = vunpack.c.l.s4 1983009808
        %v1279 = vunpack.c.0.s8 %v1278
        %v1280 = vperm.slane %v1272, %v1279
        %v1281 = vrot.slane %v1266, 4
        %v1282 = vsel %vm704, %v1281, %v1228
        %v1283 = vrot.slane %v1228, 4
        %v1284 = vsel %vm704, %v1266, %v1283
        %v1286 = vunpack.c.l.s4 1983009808
        %v1287 = vunpack.c.0.s8 %v1286
        %v1288 = vperm.slane %v1282, %v1287
        %v1290 = vunpack.c.l.s4 1983009808
        %v1291 = vunpack.c.0.s8 %v1290
        %v1292 = vperm.slane %v1284, %v1291
        %v1293 = vrot.slane %v1288, 4
        %v1294 = vsel %vm704, %v1293, %v1276
        %v1295 = vrot.slane %v1276, 4
        %v1296 = vsel %vm704, %v1288, %v1295
        %v1298 = vunpack.c.l.s4 1934713408
        %v1299 = vunpack.c.0.s8 %v1298
        %v1300 = vperm.slane %v1294, %v1299
        %v1302 = vunpack.c.l.s4 1934713408
        %v1303 = vunpack.c.0.s8 %v1302
        %v1304 = vperm.slane %v1296, %v1303
        %v1305 = vrot.slane %v1292, 4
        %v1306 = vsel %vm704, %v1305, %v1280
        %v1307 = vrot.slane %v1280, 4
        %v1308 = vsel %vm704, %v1292, %v1307
        %v1310 = vunpack.c.l.s4 1934713408
        %v1311 = vunpack.c.0.s8 %v1310
        %v1312 = vperm.slane %v1306, %v1311
        %v1314 = vunpack.c.l.s4 1934713408
        %v1315 = vunpack.c.0.s8 %v1314
        %v1316 = vperm.slane %v1308, %v1315
        %v1317 = vrot.slane %v1300, 4
        %v1318 = vsel %vm704, 0.0, %v1317
        %v1319 = vrot.slane %v1304, 4
        %v1320 = vsel %vm704, 0.0, %v1319
        %v1321 = vrot.slane %v1312, 4
        %v1322 = vsel %vm704, 0.0, %v1321
        %v1323 = vrot.slane %v1316, 4
        %v1324 = vsel %vm704, 0.0, %v1323
        %v1325 = vsel %vm704, %v1319, %v1300
        %v1327 = vunpack.c.l.s4 1983009808
        %v1328 = vunpack.c.0.s8 %v1327
        %v1329 = vperm.slane %v1325, %v1328
        %v1330 = vrot.slane %v1320, 4
        %v1331 = vsel %vm704, %v1330, %v1318
        %v1333 = vunpack.c.l.s4 1983009808
        %v1334 = vunpack.c.0.s8 %v1333
        %v1335 = vperm.slane %v1331, %v1334
        %v1336 = vsel %vm704, %v1323, %v1312
        %v1338 = vunpack.c.l.s4 1983009808
        %v1339 = vunpack.c.0.s8 %v1338
        %v1340 = vperm.slane %v1336, %v1339
        %v1341 = vrot.slane %v1324, 4
        %v1342 = vsel %vm704, %v1341, %v1322
        %v1344 = vunpack.c.l.s4 1983009808
        %v1345 = vunpack.c.0.s8 %v1344
        %v1346 = vperm.slane %v1342, %v1345
        %v1347 = vrot.slane %v1335, 4
        %v1348 = vsel %vm704, %v1347, %v1329
        %v1349 = vrot.slane %v1329, 4
        %v1350 = vsel %vm704, %v1335, %v1349
        %v1352 = vunpack.c.l.s4 1934713408
        %v1353 = vunpack.c.0.s8 %v1352
        %v1354 = vperm.slane %v1348, %v1353
        %v1356 = vunpack.c.l.s4 1934713408
        %v1357 = vunpack.c.0.s8 %v1356
        %v1358 = vperm.slane %v1350, %v1357
        %v1359 = vrot.slane %v1346, 4
        %v1360 = vsel %vm704, %v1359, %v1340
        %v1361 = vrot.slane %v1340, 4
        %v1362 = vsel %vm704, %v1346, %v1361
        %v1364 = vunpack.c.l.s4 1934713408
        %v1365 = vunpack.c.0.s8 %v1364
        %v1366 = vperm.slane %v1360, %v1365
        %v1368 = vunpack.c.l.s4 1934713408
        %v1369 = vunpack.c.0.s8 %v1368
        %v1370 = vperm.slane %v1362, %v1369
        %v1371 = vrot.slane %v1366, 4
        %v1372 = vsel %vm704, %v1371, %v1354
        %v1373 = vrot.slane %v1354, 4
        %v1374 = vsel %vm704, %v1366, %v1373
        %v1375 = vrot.slane %v1370, 4
        %v1376 = vsel %vm704, %v1375, %v1358
        %v1377 = vrot.slane %v1358, 4
        %v1378 = vsel %vm704, %v1370, %v1377
        %1380 = vrot.lane.b32.xlu0 %v1374, 32
        %v1381 = vpop.permute.xlu0 %1380
        %1384 = vrot.lane.b32.xlu0 %v1376, 64
        %v1385 = vpop.permute.xlu0 %1384
        %1388 = vrot.lane.b32.xlu0 %v1378, 96
        %v1389 = vpop.permute.xlu0 %1388
        %v1391 = vsel %vm1066, %v1372, %v1381
        %vm1392 = vcmask 523264
        %v1393 = vsel %vm1392, %v1391, %v1385
        %vm1394 = vcmask 785408
        %v1395 = vsel %vm1394, %v1393, %v1389
        %v1396 = vadd.f32 %v484, %v1395
        %v1397 = vld [vmem:[%s3] sm:$0x1]
        %v1398 = vld [vmem:[#allocation8] sm:$0x1]
        %1399 = vadd.xlane.f32.xlu0 %v1396
        %v1400 = vpop.xlane.xlu0 %1399
        %v1401 = vrcp.pop 128.0
        %v1402 = vmul.f32 128.0, %v1401
        %v1403 = vsub.f32 1.0, %v1402
        %v1404 = vmul.f32 %v1401, %v1403
        %v1405 = vadd.f32 %v1401, %v1404
        %vm1406 = vweird.f32 %v1401
        %v1407 = vsel %vm1406, %v1401, %v1405
        %v1408 = vmul.f32 %v1400, %v1407
        %v1409 = vsub.f32 %v1396, %v1408
        %v1410 = vmul.f32 %v1409, %v1409
        %1411 = vadd.xlane.f32.xlu0 %v1410
        %v1412 = vpop.xlane.xlu0 %1411
        %v1413 = vmul.f32 %v1412, %v1407
        %v1414 = vadd.f32 %v1413, 1e-05
        %v1415 = vrsqrt.pop %v1414
        %v1416 = vmul.f32 %v1415, %v1414
        %v1417 = vmul.f32 %v1416, %v1415
        %v1418 = vmul.f32 0.5, %v1417
        %v1419 = vsub.f32 1.5, %v1418
        %v1420 = vmul.f32 %v1415, %v1419
        %vm1421 = vweird.f32 %v1414
        %vm1422 = vweird.f32 %v1415
        %vm1423 = vmor %vm1421, %vm1422
        %v1424 = vsel %vm1423, %v1415, %v1420
        %v1425 = vmul.f32 %v1409, %v1424
        %v1427 = vperm.slane %v1397, 0
        %v1429 = vmul.f32 %v1425, %v1427
        %v1431 = vperm.slane %v1398, 0
        %v1433 = vadd.f32 %v1429, %v1431
        %v1434 = vpack.c.bf16 %v1433, %v1433
        %v1435 = vld [vmem:[#allocation10] sm:$0xff]
        %v1436 = vld [vmem:[#allocation10 + $0x8] sm:$0xff]
        %v1437 = vld [vmem:[#allocation10 + $0x10] sm:$0xff]
        %v1438 = vld [vmem:[#allocation10 + $0x18] sm:$0xff]
        %v1439 = vld [vmem:[#allocation10 + $0x20] sm:$0xff]
        %v1440 = vld [vmem:[#allocation10 + $0x28] sm:$0xff]
        %v1441 = vld [vmem:[#allocation10 + $0x30] sm:$0xff]
        %v1442 = vld [vmem:[#allocation10 + $0x38] sm:$0xff]
        %v1443 = vld [vmem:[#allocation10 + $0x40] sm:$0xff]
        %v1444 = vld [vmem:[#allocation10 + $0x48] sm:$0xff]
        %v1445 = vld [vmem:[#allocation10 + $0x50] sm:$0xff]
        %v1446 = vld [vmem:[#allocation10 + $0x58] sm:$0xff]
        %v1447 = vld [vmem:[#allocation10 + $0x60] sm:$0xff]
        %v1448 = vld [vmem:[#allocation10 + $0x68] sm:$0xff]
        %v1449 = vld [vmem:[#allocation10 + $0x70] sm:$0xff]
        %v1450 = vld [vmem:[#allocation10 + $0x78] sm:$0xff]
        %v1451 = vld [vmem:[#allocation10 + $0x80] sm:$0xff]
        %v1452 = vld [vmem:[#allocation10 + $0x88] sm:$0xff]
        %v1453 = vld [vmem:[#allocation10 + $0x90] sm:$0xff]
        %v1454 = vld [vmem:[#allocation10 + $0x98] sm:$0xff]
        %v1455 = vld [vmem:[#allocation10 + $0xa0] sm:$0xff]
        %v1456 = vld [vmem:[#allocation10 + $0xa8] sm:$0xff]
        %v1457 = vld [vmem:[#allocation10 + $0xb0] sm:$0xff]
        %v1458 = vld [vmem:[#allocation10 + $0xb8] sm:$0xff]
        %v1459 = vld [vmem:[#allocation10 + $0xc0] sm:$0xff]
        %v1460 = vld [vmem:[#allocation10 + $0xc8] sm:$0xff]
        %v1461 = vld [vmem:[#allocation10 + $0xd0] sm:$0xff]
        %v1462 = vld [vmem:[#allocation10 + $0xd8] sm:$0xff]
        %v1463 = vld [vmem:[#allocation10 + $0xe0] sm:$0xff]
        %v1464 = vld [vmem:[#allocation10 + $0xe8] sm:$0xff]
        %v1465 = vld [vmem:[#allocation10 + $0xf0] sm:$0xff]
        %v1466 = vld [vmem:[#allocation10 + $0xf8] sm:$0xff]
        %v1467 = vld [vmem:[%s6] sm:$0xf]
        %v1469 = vperm.slane %v1467, 0
        %v1470 = vperm.slane %v1467, 1
        %v1471 = vperm.slane %v1467, 2
        %v1472 = vperm.slane %v1467, 3
        %v1509 = vunpack.c.l.b16 %v1435
        %v1510 = vunpack.c.h.b16 %v1435
        %v1511 = vunpack.c.l.b16 %v1436
        %v1512 = vunpack.c.h.b16 %v1436
        %v1513 = vunpack.c.l.b16 %v1437
        %v1514 = vunpack.c.h.b16 %v1437
        %v1515 = vunpack.c.l.b16 %v1438
        %v1516 = vunpack.c.h.b16 %v1438
        %v1517 = vunpack.c.l.b16 %v1439
        %v1518 = vunpack.c.h.b16 %v1439
        %v1519 = vunpack.c.l.b16 %v1440
        %v1520 = vunpack.c.h.b16 %v1440
        %v1521 = vunpack.c.l.b16 %v1441
        %v1522 = vunpack.c.h.b16 %v1441
        %v1523 = vunpack.c.l.b16 %v1442
        %v1524 = vunpack.c.h.b16 %v1442
        %v1525 = vunpack.c.l.b16 %v1443
        %v1526 = vunpack.c.h.b16 %v1443
        %v1527 = vunpack.c.l.b16 %v1444
        %v1528 = vunpack.c.h.b16 %v1444
        %v1529 = vunpack.c.l.b16 %v1445
        %v1530 = vunpack.c.h.b16 %v1445
        %v1531 = vunpack.c.l.b16 %v1446
        %v1532 = vunpack.c.h.b16 %v1446
        %v1533 = vunpack.c.l.b16 %v1447
        %v1534 = vunpack.c.h.b16 %v1447
        %v1535 = vunpack.c.l.b16 %v1448
        %v1536 = vunpack.c.h.b16 %v1448
        %v1537 = vunpack.c.l.b16 %v1449
        %v1538 = vunpack.c.h.b16 %v1449
        %v1539 = vunpack.c.l.b16 %v1450
        %v1540 = vunpack.c.h.b16 %v1450
        %v1541 = vunpack.c.l.b16 %v1451
        %v1542 = vunpack.c.h.b16 %v1451
        %v1543 = vunpack.c.l.b16 %v1452
        %v1544 = vunpack.c.h.b16 %v1452
        %v1545 = vunpack.c.l.b16 %v1453
        %v1546 = vunpack.c.h.b16 %v1453
        %v1547 = vunpack.c.l.b16 %v1454
        %v1548 = vunpack.c.h.b16 %v1454
        %v1549 = vunpack.c.l.b16 %v1455
        %v1550 = vunpack.c.h.b16 %v1455
        %v1551 = vunpack.c.l.b16 %v1456
        %v1552 = vunpack.c.h.b16 %v1456
        %v1553 = vunpack.c.l.b16 %v1457
        %v1554 = vunpack.c.h.b16 %v1457
        %v1555 = vunpack.c.l.b16 %v1458
        %v1556 = vunpack.c.h.b16 %v1458
        %v1557 = vunpack.c.l.b16 %v1459
        %v1558 = vunpack.c.h.b16 %v1459
        %v1559 = vunpack.c.l.b16 %v1460
        %v1560 = vunpack.c.h.b16 %v1460
        %v1561 = vunpack.c.l.b16 %v1461
        %v1562 = vunpack.c.h.b16 %v1461
        %v1563 = vunpack.c.l.b16 %v1462
        %v1564 = vunpack.c.h.b16 %v1462
        %v1565 = vunpack.c.l.b16 %v1463
        %v1566 = vunpack.c.h.b16 %v1463
        %v1567 = vunpack.c.l.b16 %v1464
        %v1568 = vunpack.c.h.b16 %v1464
        %v1569 = vunpack.c.l.b16 %v1465
        %v1570 = vunpack.c.h.b16 %v1465
        %v1571 = vunpack.c.l.b16 %v1466
        %v1572 = vunpack.c.h.b16 %v1466
        %v1573 = vpack.c.b16 %v1513, %v1509
        %v1574 = vpack.c.b16 %v1514, %v1510
        %v1575 = vpack.c.b16 %v1515, %v1511
        %v1576 = vpack.c.b16 %v1516, %v1512
        %v1577 = vpack.c.b16 %v1521, %v1517
        %v1578 = vpack.c.b16 %v1522, %v1518
        %v1579 = vpack.c.b16 %v1523, %v1519
        %v1580 = vpack.c.b16 %v1524, %v1520
        %v1581 = vpack.c.b16 %v1529, %v1525
        %v1582 = vpack.c.b16 %v1530, %v1526
        %v1583 = vpack.c.b16 %v1531, %v1527
        %v1584 = vpack.c.b16 %v1532, %v1528
        %v1585 = vpack.c.b16 %v1537, %v1533
        %v1586 = vpack.c.b16 %v1538, %v1534
        %v1587 = vpack.c.b16 %v1539, %v1535
        %v1588 = vpack.c.b16 %v1540, %v1536
        %v1589 = vpack.c.b16 %v1545, %v1541
        %v1590 = vpack.c.b16 %v1546, %v1542
        %v1591 = vpack.c.b16 %v1547, %v1543
        %v1592 = vpack.c.b16 %v1548, %v1544
        %v1593 = vpack.c.b16 %v1553, %v1549
        %v1594 = vpack.c.b16 %v1554, %v1550
        %v1595 = vpack.c.b16 %v1555, %v1551
        %v1596 = vpack.c.b16 %v1556, %v1552
        %v1597 = vpack.c.b16 %v1561, %v1557
        %v1598 = vpack.c.b16 %v1562, %v1558
        %v1599 = vpack.c.b16 %v1563, %v1559
        %v1600 = vpack.c.b16 %v1564, %v1560
        %v1601 = vpack.c.b16 %v1569, %v1565
        %v1602 = vpack.c.b16 %v1570, %v1566
        %v1603 = vpack.c.b16 %v1571, %v1567
        %v1604 = vpack.c.b16 %v1572, %v1568
        %1637 = vmatpush.bf16.msra.mxu0 %v1601
        %1638 = vmatpush.bf16.msra.mxu0 %v1597
        %1639 = vmatpush.bf16.msra.mxu0 %v1593
        %1640 = vmatpush.bf16.msra.mxu0 %v1589
        %1641 = vmatpush.bf16.msra.mxu0 %v1585
        %1642 = vmatpush.bf16.msra.mxu0 %v1581
        %1643 = vmatpush.bf16.msra.mxu0 %v1577
        %1644 = vmatpush.bf16.msra.mxu0 %v1573
        %1645 = vmatmul.bf16.gmra.mxu0 %v1434
        %v1646 = vpop.f32.mrf.mxu0
        %v1647 = vadd.f32 %v1469, %v1646
        %v1648 = vpop.f32.mrf.mxu0
        %1649 = vdwg.mxu0
        %1650 = vmatpush.bf16.msra.mxu0 %v1602
        %1651 = vmatpush.bf16.msra.mxu0 %v1598
        %1652 = vmatpush.bf16.msra.mxu0 %v1594
        %1653 = vmatpush.bf16.msra.mxu0 %v1590
        %1654 = vmatpush.bf16.msra.mxu0 %v1586
        %1655 = vmatpush.bf16.msra.mxu0 %v1582
        %1656 = vmatpush.bf16.msra.mxu0 %v1578
        %1657 = vmatpush.bf16.msra.mxu0 %v1574
        %1658 = vmatmul.bf16.gmra.mxu0 %v1434
        %v1659 = vpop.f32.mrf.mxu0
        %v1660 = vadd.f32 %v1470, %v1659
        %v1661 = vpop.f32.mrf.mxu0
        %1662 = vdwg.mxu0
        %1663 = vmatpush.bf16.msra.mxu0 %v1603
        %1664 = vmatpush.bf16.msra.mxu0 %v1599
        %1665 = vmatpush.bf16.msra.mxu0 %v1595
        %1666 = vmatpush.bf16.msra.mxu0 %v1591
        %1667 = vmatpush.bf16.msra.mxu0 %v1587
        %1668 = vmatpush.bf16.msra.mxu0 %v1583
        %1669 = vmatpush.bf16.msra.mxu0 %v1579
        %1670 = vmatpush.bf16.msra.mxu0 %v1575
        %1671 = vmatmul.bf16.gmra.mxu0 %v1434
        %v1672 = vpop.f32.mrf.mxu0
        %v1673 = vadd.f32 %v1471, %v1672
        %v1674 = vpop.f32.mrf.mxu0
        %1675 = vdwg.mxu0
        %1676 = vmatpush.bf16.msra.mxu0 %v1604
        %1677 = vmatpush.bf16.msra.mxu0 %v1600
        %1678 = vmatpush.bf16.msra.mxu0 %v1596
        %1679 = vmatpush.bf16.msra.mxu0 %v1592
        %1680 = vmatpush.bf16.msra.mxu0 %v1588
        %1681 = vmatpush.bf16.msra.mxu0 %v1584
        %1682 = vmatpush.bf16.msra.mxu0 %v1580
        %1683 = vmatpush.bf16.msra.mxu0 %v1576
        %1684 = vmatmul.bf16.gmra.mxu0 %v1434
        %v1685 = vpop.f32.mrf.mxu0
        %v1686 = vadd.f32 %v1472, %v1685
        %v1687 = vpop.f32.mrf.mxu0
        %1688 = vdwg.mxu0
        %v1689 = vmax.f32 %v1647, 0.0
        %v1690 = vmax.f32 %v1660, 0.0
        %v1691 = vmax.f32 %v1673, 0.0
        %v1692 = vmax.f32 %v1686, 0.0
        %v1693 = vpack.c.bf16 %v1689, %v1689
        %v1694 = vpack.c.bf16 %v1690, %v1690
        %v1695 = vpack.c.bf16 %v1691, %v1691
        %v1696 = vpack.c.bf16 %v1692, %v1692
        %v1697 = vld [vmem:[#allocation11] sm:$0xf]
        %v1698 = vld [vmem:[#allocation11 + $0x4] sm:$0xf]
        %v1699 = vld [vmem:[#allocation11 + $0x8] sm:$0xf]
        %v1700 = vld [vmem:[#allocation11 + $0xc] sm:$0xf]
        %v1701 = vld [vmem:[#allocation11 + $0x10] sm:$0xf]
        %v1702 = vld [vmem:[#allocation11 + $0x14] sm:$0xf]
        %v1703 = vld [vmem:[#allocation11 + $0x18] sm:$0xf]
        %v1704 = vld [vmem:[#allocation11 + $0x1c] sm:$0xf]
        %v1705 = vld [vmem:[#allocation11 + $0x20] sm:$0xf]
        %v1706 = vld [vmem:[#allocation11 + $0x24] sm:$0xf]
        %v1707 = vld [vmem:[#allocation11 + $0x28] sm:$0xf]
        %v1708 = vld [vmem:[#allocation11 + $0x2c] sm:$0xf]
        %v1709 = vld [vmem:[#allocation11 + $0x30] sm:$0xf]
        %v1710 = vld [vmem:[#allocation11 + $0x34] sm:$0xf]
        %v1711 = vld [vmem:[#allocation11 + $0x38] sm:$0xf]
        %v1712 = vld [vmem:[#allocation11 + $0x3c] sm:$0xf]
        %v1713 = vld [vmem:[#allocation11 + $0x40] sm:$0xf]
        %v1714 = vld [vmem:[#allocation11 + $0x44] sm:$0xf]
        %v1715 = vld [vmem:[#allocation11 + $0x48] sm:$0xf]
        %v1716 = vld [vmem:[#allocation11 + $0x4c] sm:$0xf]
        %v1717 = vld [vmem:[#allocation11 + $0x50] sm:$0xf]
        %v1718 = vld [vmem:[#allocation11 + $0x54] sm:$0xf]
        %v1719 = vld [vmem:[#allocation11 + $0x58] sm:$0xf]
        %v1720 = vld [vmem:[#allocation11 + $0x5c] sm:$0xf]
        %v1721 = vld [vmem:[#allocation11 + $0x60] sm:$0xf]
        %v1722 = vld [vmem:[#allocation11 + $0x64] sm:$0xf]
        %v1723 = vld [vmem:[#allocation11 + $0x68] sm:$0xf]
        %v1724 = vld [vmem:[#allocation11 + $0x6c] sm:$0xf]
        %v1725 = vld [vmem:[#allocation11 + $0x70] sm:$0xf]
        %v1726 = vld [vmem:[#allocation11 + $0x74] sm:$0xf]
        %v1727 = vld [vmem:[#allocation11 + $0x78] sm:$0xf]
        %v1728 = vld [vmem:[#allocation11 + $0x7c] sm:$0xf]
        %v1729 = vld [vmem:[#allocation11 + $0x80] sm:$0xf]
        %v1730 = vld [vmem:[#allocation11 + $0x84] sm:$0xf]
        %v1731 = vld [vmem:[#allocation11 + $0x88] sm:$0xf]
        %v1732 = vld [vmem:[#allocation11 + $0x8c] sm:$0xf]
        %v1733 = vld [vmem:[#allocation11 + $0x90] sm:$0xf]
        %v1734 = vld [vmem:[#allocation11 + $0x94] sm:$0xf]
        %v1735 = vld [vmem:[#allocation11 + $0x98] sm:$0xf]
        %v1736 = vld [vmem:[#allocation11 + $0x9c] sm:$0xf]
        %v1737 = vld [vmem:[#allocation11 + $0xa0] sm:$0xf]
        %v1738 = vld [vmem:[#allocation11 + $0xa4] sm:$0xf]
        %v1739 = vld [vmem:[#allocation11 + $0xa8] sm:$0xf]
        %v1740 = vld [vmem:[#allocation11 + $0xac] sm:$0xf]
        %v1741 = vld [vmem:[#allocation11 + $0xb0] sm:$0xf]
        %v1742 = vld [vmem:[#allocation11 + $0xb4] sm:$0xf]
        %v1743 = vld [vmem:[#allocation11 + $0xb8] sm:$0xf]
        %v1744 = vld [vmem:[#allocation11 + $0xbc] sm:$0xf]
        %v1745 = vld [vmem:[#allocation11 + $0xc0] sm:$0xf]
        %v1746 = vld [vmem:[#allocation11 + $0xc4] sm:$0xf]
        %v1747 = vld [vmem:[#allocation11 + $0xc8] sm:$0xf]
        %v1748 = vld [vmem:[#allocation11 + $0xcc] sm:$0xf]
        %v1749 = vld [vmem:[#allocation11 + $0xd0] sm:$0xf]
        %v1750 = vld [vmem:[#allocation11 + $0xd4] sm:$0xf]
        %v1751 = vld [vmem:[#allocation11 + $0xd8] sm:$0xf]
        %v1752 = vld [vmem:[#allocation11 + $0xdc] sm:$0xf]
        %v1753 = vld [vmem:[#allocation11 + $0xe0] sm:$0xf]
        %v1754 = vld [vmem:[#allocation11 + $0xe4] sm:$0xf]
        %v1755 = vld [vmem:[#allocation11 + $0xe8] sm:$0xf]
        %v1756 = vld [vmem:[#allocation11 + $0xec] sm:$0xf]
        %v1757 = vld [vmem:[#allocation11 + $0xf0] sm:$0xf]
        %v1758 = vld [vmem:[#allocation11 + $0xf4] sm:$0xf]
        %v1759 = vld [vmem:[#allocation11 + $0xf8] sm:$0xf]
        %v1760 = vld [vmem:[#allocation11 + $0xfc] sm:$0xf]
        %v1761 = vld [vmem:[%s8] sm:$0x1]
        %v1763 = vperm.slane %v1761, 0
        %v1829 = vunpack.c.l.b16 %v1697
        %v1830 = vunpack.c.l.b16 %v1698
        %v1831 = vunpack.c.l.b16 %v1699
        %v1832 = vunpack.c.l.b16 %v1700
        %v1833 = vunpack.c.l.b16 %v1701
        %v1834 = vunpack.c.l.b16 %v1702
        %v1835 = vunpack.c.l.b16 %v1703
        %v1836 = vunpack.c.l.b16 %v1704
        %v1837 = vunpack.c.l.b16 %v1705
        %v1838 = vunpack.c.l.b16 %v1706
        %v1839 = vunpack.c.l.b16 %v1707
        %v1840 = vunpack.c.l.b16 %v1708
        %v1841 = vunpack.c.l.b16 %v1709
        %v1842 = vunpack.c.l.b16 %v1710
        %v1843 = vunpack.c.l.b16 %v1711
        %v1844 = vunpack.c.l.b16 %v1712
        %v1845 = vunpack.c.l.b16 %v1713
        %v1846 = vunpack.c.l.b16 %v1714
        %v1847 = vunpack.c.l.b16 %v1715
        %v1848 = vunpack.c.l.b16 %v1716
        %v1849 = vunpack.c.l.b16 %v1717
        %v1850 = vunpack.c.l.b16 %v1718
        %v1851 = vunpack.c.l.b16 %v1719
        %v1852 = vunpack.c.l.b16 %v1720
        %v1853 = vunpack.c.l.b16 %v1721
        %v1854 = vunpack.c.l.b16 %v1722
        %v1855 = vunpack.c.l.b16 %v1723
        %v1856 = vunpack.c.l.b16 %v1724
        %v1857 = vunpack.c.l.b16 %v1725
        %v1858 = vunpack.c.l.b16 %v1726
        %v1859 = vunpack.c.l.b16 %v1727
        %v1860 = vunpack.c.l.b16 %v1728
        %v1861 = vunpack.c.l.b16 %v1729
        %v1862 = vunpack.c.l.b16 %v1730
        %v1863 = vunpack.c.l.b16 %v1731
        %v1864 = vunpack.c.l.b16 %v1732
        %v1865 = vunpack.c.l.b16 %v1733
        %v1866 = vunpack.c.l.b16 %v1734
        %v1867 = vunpack.c.l.b16 %v1735
        %v1868 = vunpack.c.l.b16 %v1736
        %v1869 = vunpack.c.l.b16 %v1737
        %v1870 = vunpack.c.l.b16 %v1738
        %v1871 = vunpack.c.l.b16 %v1739
        %v1872 = vunpack.c.l.b16 %v1740
        %v1873 = vunpack.c.l.b16 %v1741
        %v1874 = vunpack.c.l.b16 %v1742
        %v1875 = vunpack.c.l.b16 %v1743
        %v1876 = vunpack.c.l.b16 %v1744
        %v1877 = vunpack.c.l.b16 %v1745
        %v1878 = vunpack.c.l.b16 %v1746
        %v1879 = vunpack.c.l.b16 %v1747
        %v1880 = vunpack.c.l.b16 %v1748
        %v1881 = vunpack.c.l.b16 %v1749
        %v1882 = vunpack.c.l.b16 %v1750
        %v1883 = vunpack.c.l.b16 %v1751
        %v1884 = vunpack.c.l.b16 %v1752
        %v1885 = vunpack.c.l.b16 %v1753
        %v1886 = vunpack.c.l.b16 %v1754
        %v1887 = vunpack.c.l.b16 %v1755
        %v1888 = vunpack.c.l.b16 %v1756
        %v1889 = vunpack.c.l.b16 %v1757
        %v1890 = vunpack.c.l.b16 %v1758
        %v1891 = vunpack.c.l.b16 %v1759
        %v1892 = vunpack.c.l.b16 %v1760
        %v1893 = vpack.c.b16 %v1830, %v1829
        %v1894 = vpack.c.b16 %v1832, %v1831
        %v1895 = vpack.c.b16 %v1834, %v1833
        %v1896 = vpack.c.b16 %v1836, %v1835
        %v1897 = vpack.c.b16 %v1838, %v1837
        %v1898 = vpack.c.b16 %v1840, %v1839
        %v1899 = vpack.c.b16 %v1842, %v1841
        %v1900 = vpack.c.b16 %v1844, %v1843
        %v1901 = vpack.c.b16 %v1846, %v1845
        %v1902 = vpack.c.b16 %v1848, %v1847
        %v1903 = vpack.c.b16 %v1850, %v1849
        %v1904 = vpack.c.b16 %v1852, %v1851
        %v1905 = vpack.c.b16 %v1854, %v1853
        %v1906 = vpack.c.b16 %v1856, %v1855
        %v1907 = vpack.c.b16 %v1858, %v1857
        %v1908 = vpack.c.b16 %v1860, %v1859
        %v1909 = vpack.c.b16 %v1862, %v1861
        %v1910 = vpack.c.b16 %v1864, %v1863
        %v1911 = vpack.c.b16 %v1866, %v1865
        %v1912 = vpack.c.b16 %v1868, %v1867
        %v1913 = vpack.c.b16 %v1870, %v1869
        %v1914 = vpack.c.b16 %v1872, %v1871
        %v1915 = vpack.c.b16 %v1874, %v1873
        %v1916 = vpack.c.b16 %v1876, %v1875
        %v1917 = vpack.c.b16 %v1878, %v1877
        %v1918 = vpack.c.b16 %v1880, %v1879
        %v1919 = vpack.c.b16 %v1882, %v1881
        %v1920 = vpack.c.b16 %v1884, %v1883
        %v1921 = vpack.c.b16 %v1886, %v1885
        %v1922 = vpack.c.b16 %v1888, %v1887
        %v1923 = vpack.c.b16 %v1890, %v1889
        %v1924 = vpack.c.b16 %v1892, %v1891
        %1957 = vmatpush.bf16.msra.mxu0 %v1900
        %1958 = vmatpush.bf16.msra.mxu0 %v1899
        %1959 = vmatpush.bf16.msra.mxu0 %v1898
        %1960 = vmatpush.bf16.msra.mxu0 %v1897
        %1961 = vmatpush.bf16.msra.mxu0 %v1896
        %1962 = vmatpush.bf16.msra.mxu0 %v1895
        %1963 = vmatpush.bf16.msra.mxu0 %v1894
        %1964 = vmatpush.bf16.msra.mxu0 %v1893
        %1965 = vmatmul.bf16.gmra.mxu0 %v1693
        %v1966 = vpop.f32.mrf.mxu0
        %v1967 = vadd.f32 %v1763, %v1966
        %v1968 = vpop.f32.mrf.mxu0
        %1969 = vdwg.mxu0
        %1970 = vmatpush.bf16.msra.mxu0 %v1908
        %1971 = vmatpush.bf16.msra.mxu0 %v1907
        %1972 = vmatpush.bf16.msra.mxu0 %v1906
        %1973 = vmatpush.bf16.msra.mxu0 %v1905
        %1974 = vmatpush.bf16.msra.mxu0 %v1904
        %1975 = vmatpush.bf16.msra.mxu0 %v1903
        %1976 = vmatpush.bf16.msra.mxu0 %v1902
        %1977 = vmatpush.bf16.msra.mxu0 %v1901
        %1978 = vmatmul.bf16.gmra.mxu0 %v1694
        %v1979 = vpop.f32.mrf.mxu0
        %v1980 = vadd.f32 %v1967, %v1979
        %v1981 = vpop.f32.mrf.mxu0
        %1982 = vdwg.mxu0
        %1983 = vmatpush.bf16.msra.mxu0 %v1916
        %1984 = vmatpush.bf16.msra.mxu0 %v1915
        %1985 = vmatpush.bf16.msra.mxu0 %v1914
        %1986 = vmatpush.bf16.msra.mxu0 %v1913
        %1987 = vmatpush.bf16.msra.mxu0 %v1912
        %1988 = vmatpush.bf16.msra.mxu0 %v1911
        %1989 = vmatpush.bf16.msra.mxu0 %v1910
        %1990 = vmatpush.bf16.msra.mxu0 %v1909
        %1991 = vmatmul.bf16.gmra.mxu0 %v1695
        %v1992 = vpop.f32.mrf.mxu0
        %v1993 = vadd.f32 %v1980, %v1992
        %v1994 = vpop.f32.mrf.mxu0
        %1995 = vdwg.mxu0
        %1996 = vmatpush.bf16.msra.mxu0 %v1924
        %1997 = vmatpush.bf16.msra.mxu0 %v1923
        %1998 = vmatpush.bf16.msra.mxu0 %v1922
        %1999 = vmatpush.bf16.msra.mxu0 %v1921
        %2000 = vmatpush.bf16.msra.mxu0 %v1920
        %2001 = vmatpush.bf16.msra.mxu0 %v1919
        %2002 = vmatpush.bf16.msra.mxu0 %v1918
        %2003 = vmatpush.bf16.msra.mxu0 %v1917
        %2004 = vmatmul.bf16.gmra.mxu0 %v1696
        %v2005 = vpop.f32.mrf.mxu0
        %v2006 = vadd.f32 %v1993, %v2005
        %v2007 = vpop.f32.mrf.mxu0
        %2008 = vdwg.mxu0
        %v2009 = vadd.f32 %v1433, %v2006
        %v2010 = vld [vmem:[%s9] sm:$0x1]
        %v2011 = vld [vmem:[%s10] sm:$0x1]
        %2012 = vadd.xlane.f32.xlu0 %v2009
        %v2013 = vpop.xlane.xlu0 %2012
        %v2014 = vmul.f32 %v2013, %v1407
        %v2015 = vsub.f32 %v2009, %v2014
        %v2016 = vmul.f32 %v2015, %v2015
        %2017 = vadd.xlane.f32.xlu0 %v2016
        %v2018 = vpop.xlane.xlu0 %2017
        %v2019 = vmul.f32 %v2018, %v1407
        %v2020 = vadd.f32 %v2019, 1e-05
        %v2021 = vrsqrt.pop %v2020
        %v2022 = vmul.f32 %v2021, %v2020
        %v2023 = vmul.f32 %v2022, %v2021
        %v2024 = vmul.f32 0.5, %v2023
        %v2025 = vsub.f32 1.5, %v2024
        %v2026 = vmul.f32 %v2021, %v2025
        %vm2027 = vweird.f32 %v2020
        %vm2028 = vweird.f32 %v2021
        %vm2029 = vmor %vm2027, %vm2028
        %v2030 = vsel %vm2029, %v2021, %v2026
        %v2031 = vmul.f32 %v2015, %v2030
        %v2033 = vperm.slane %v2010, 0
        %v2035 = vmul.f32 %v2031, %v2033
        %v2037 = vperm.slane %v2011, 0
        %v2039 = vadd.f32 %v2035, %v2037
        %2040 = vst [vmem:[%s482] sm:$0xff] %v2039
        %s2041 = sand.u32 %s275, 1
        %s2042 = scalar_lea.sflag [#allocation4], %s2041
        %s2043 = sand.u32 %s275, 1
        %s2044 = smul.addr %s2043, 8
        %s2045 = scalar_lea.vmem [#allocation13], %s2044
        // Predicated region
        $region89: #{tpu_custom_call.1} parent=63 // pred_check
          %p2046 = pneg %p285
        $region90: #{tpu_custom_call.1} parent=63 // pred_check_branch
          %2048 = sbr.rel (%p2046) target = $region92
        $region91: #{tpu_custom_call.1} parent=63 // pred_region
          %2050 = vsyncadd %s2042, 0
          %s2051 = smul.addr %s31, 8
          %s2052 = scalar_lea.hbm %s11, %s2051
          %s2054 = sshll.u32 %s2045, 4
          %s2055 = int_to_ptr.vmem [resolvable:$true] %s2054
          %s2056 = sshll.u32 %s2052, 4
          %s2057 = int_to_ptr.hbm [resolvable:$true] %s2056
          %2059 = dma.vmem_to_hbm [thread:$0]  %s2055, 128, %s2057, %s2042
        $region92: #{tpu_custom_call.1} parent=63 // pred_fallthru
          _
      $region64: #{tpu_custom_call.1} parent=5 // pred_fallthru
        _
      %p2060 = scmp.le.s32.totalorder 2, %s26
      // Predicated region
      $region93: #{tpu_custom_call.1} parent=5 // pred_check
        %p2061 = pneg %p2060
      $region94: #{tpu_custom_call.1} parent=5 // pred_check_branch
        %2063 = sbr.rel (%p2061) target = $region96
      $region95: #{tpu_custom_call.1} parent=5 // pred_region
        %s2064 = ssub.s32 %s26, 2
        // Predicated region
        $region97: #{tpu_custom_call.1} parent=95 // pred_check
          %p2065 = pneg %p291
        $region98: #{tpu_custom_call.1} parent=95 // pred_check_branch
          %2067 = sbr.rel (%p2065) target = $region100
        $region99: #{tpu_custom_call.1} parent=95 // pred_region
          %s2068 = sand.u32 %s276, 1
          %s2069 = scalar_lea.sflag [#allocation4], %s2068
          %s2070 = sand.u32 %s276, 1
          %s2071 = smul.addr %s2070, 8
          %s2072 = scalar_lea.vmem [#allocation13], %s2071
          %2074 = dma.done %s2069, 128
        $region100: #{tpu_custom_call.1} parent=95 // pred_fallthru
          _
      $region96: #{tpu_custom_call.1} parent=5 // pred_fallthru
        _
    $region6: #{tpu_custom_call.1} parent=1 // loop_footer
      %s30 = sadd.s32 1, %s26
    $region7: #{tpu_custom_call.1} parent=1 // loop_footer_branch
      %25 = sbr.rel target = $region3
    $region8: #{tpu_custom_call.1} parent=1 // loop_exit
      _
    %2075 = vsyncpa [#allocation3], 1
    %s2076 = scalar_lea.sflag [#allocation3], 1
    %2077 = vsyncpa %s2076, 1
    %2078 = vsyncpa [#allocation6], 1
    %2079 = vsyncpa [#allocation9], 1
    %2080 = vsyncpa [#allocation12], 1
    %2081 = vsyncpa [#allocation4], 1
    %s2082 = scalar_lea.sflag [#allocation4], 1
    %2083 = vsyncpa %s2082, 1

</llo_original>
